<compile_context>
chip_gen: v5e
topology: v5e:2x2
jax: 0.10.0
libtpu: 0.0.40
codegen_flags: <defaults>
</compile_context>

<pallas_src>
import jax
import jax.numpy as jnp
from jax import lax
from jax.experimental import pallas as pl
from jax.experimental.pallas import tpu as pltpu


LP = 8  # left/right W padding of the conv scratch; 8 keeps interior stores sublane-aligned


def resnet_block_kernel(x_ref, w1_ref, b1_ref, w2_ref, b2_ref, o_ref, pad_ref):
    """One grid step = one batch element.

    x_ref  : (1, H, W, C)          f32 unpadded input block (NHWC)
    w*_ref : (9*C, C)              bf16 conv weights, rows ordered (kh, kw, cin)
    b*_ref : (1, C)                f32 conv bias
    o_ref  : (1, H, W, C)          f32 output block (lane-dense: C % 128 == 0)
    pad_ref: (1, H+2, W+2*LP, C)   f32 scratch; conv interior lives at [1:H+1, LP:LP+W],
                                   halo is zero
    """
    _, H, W, C = x_ref.shape
    _, Hp, Wp, _ = pad_ref.shape
    M = H * W

    # --- zero the halo every step (scratch persists across grid steps, and the batch axis
    # may be split across TensorCores on v7x, so a step-0-only zero would be unsafe).
    # Top/bottom rows are leading-dim writes; the LP-wide column bands are sublane-aligned.
    pad_ref[:, 0:1, :, :] = jnp.zeros((1, 1, Wp, C), pad_ref.dtype)
    pad_ref[:, Hp - 1:Hp, :, :] = jnp.zeros((1, 1, Wp, C), pad_ref.dtype)
    pad_ref[:, :, 0:LP, :] = jnp.zeros((1, Hp, LP, C), pad_ref.dtype)
    pad_ref[:, :, LP + W:Wp, :] = jnp.zeros((1, Hp, LP, C), pad_ref.dtype)

    def conv3x3_bias_relu(w_ref, b_ref):
        # im2col with the kw shift hoisted out of the kh loop: only 3 W-shifted slabs are
        # materialized (the sublane-misaligned copies); the 9 (kh, kw) windows are
        # leading-dim sub-slices of those slabs (essentially free).  Slabs are cast to
        # bf16 immediately so the column copies, the concat and the MXU operands are all
        # half-width; accumulation stays f32.
        slabs = [
            pad_ref[:, :, LP - 1 + kw:LP - 1 + kw + W, :].astype(jnp.bfloat16)
            for kw in range(3)
        ]                                                            # 3 x (1, Hp, W, C)
        cols = []
        for kh in range(3):
            for kw in range(3):
                cols.append(slabs[kw][:, kh:kh + H, :, :].reshape(M, C))
        patches = jnp.concatenate(cols, axis=1)                      # (M, 9C) bf16
        y = jnp.dot(patches, w_ref[...],
                    preferred_element_type=jnp.float32)              # one deep-K MXU matmul
        y = y + b_ref[...]                                           # (1, C) f32 broadcast
        return jnp.maximum(y, 0.0)                                   # ReLU, f32

    # ---- conv1: interior <- x (sublane-aligned store at W offset LP) -------------------
    pad_ref[:, 1:H + 1, LP:LP + W, :] = x_ref[...]
    h1 = conv3x3_bias_relu(w1_ref, b1_ref)

    # ---- conv2: interior <- h1 (aligned store); halo is still zero ---------------------
    pad_ref[:, 1:H + 1, LP:LP + W, :] = h1.reshape(1, H, W, C)
    h2 = conv3x3_bias_relu(w2_ref, b2_ref)

    # ---- residual: tile-aligned re-read of the (VMEM-resident) unpadded input block ----
    o_ref[...] = (h2.reshape(1, H, W, C) + x_ref[...]).astype(o_ref.dtype)


def resnet_block_pallas(x_nchw, w1_oihw, b1, w2_oihw, b2):
    """x_nchw: (N, C, H, W) float32; conv weights in PyTorch OIHW layout, biases (C,)."""
    N, C, H, W = x_nchw.shape

    # Layout plumbing only (a production caller would keep NHWC end to end):
    # NCHW -> NHWC, weights OIHW -> (kh, kw, cin, cout) -> (9C, C) bf16, biases -> (1, C).
    x_nhwc = jnp.transpose(x_nchw, (0, 2, 3, 1))
    w1 = jnp.transpose(w1_oihw, (2, 3, 1, 0)).reshape(9 * C, C).astype(jnp.bfloat16)
    w2 = jnp.transpose(w2_oihw, (2, 3, 1, 0)).reshape(9 * C, C).astype(jnp.bfloat16)
    b1_2d = b1.reshape(1, C).astype(jnp.float32)
    b2_2d = b2.reshape(1, C).astype(jnp.float32)

    out_nhwc = pl.pallas_call(
        resnet_block_kernel,
        out_shape=jax.ShapeDtypeStruct((N, H, W, C), x_nhwc.dtype),
        grid_spec=pltpu.PrefetchScalarGridSpec(
            num_scalar_prefetch=0,
            grid=(N,),  # one batch element per step: pipelined, megacore-shardable on v7x
            in_specs=[
                pl.BlockSpec((1, H, W, C), lambda n: (n, 0, 0, 0)),
                # Constant-index weight/bias blocks: DMA'd once, reused every step.
                # (At production sizes also single-buffer via pipeline_mode=pl.Buffered(1).)
                pl.BlockSpec((9 * C, C), lambda n: (0, 0)),
                pl.BlockSpec((1, C), lambda n: (0, 0)),
                pl.BlockSpec((9 * C, C), lambda n: (0, 0)),
                pl.BlockSpec((1, C), lambda n: (0, 0)),
            ],
            out_specs=pl.BlockSpec((1, H, W, C), lambda n: (n, 0, 0, 0)),
            scratch_shapes=[pltpu.VMEM((1, H + 2, W + 2 * LP, C), jnp.float32)],
        ),
        compiler_params=pltpu.CompilerParams(
            dimension_semantics=("parallel",),
            vmem_limit_bytes=48 * 1024 * 1024,
        ),
    )(x_nhwc, w1, b1_2d, w2, b2_2d)

    return jnp.transpose(out_nhwc, (0, 3, 1, 2))                     # NHWC -> NCHW


def resnet_block_ref(x_nchw, w1, b1, w2, b2, operand_dtype=jnp.float32):
    """Pure-JAX reference replicating the PyTorch forward (NCHW).

    operand_dtype=bfloat16 reproduces the kernel's MXU operand precision (f32 accumulate).
    """
    def conv_relu(x, w, b):
        y = lax.conv_general_dilated(
            x.astype(operand_dtype), w.astype(operand_dtype),
            window_strides=(1, 1), padding=((1, 1), (1, 1)),
            dimension_numbers=("NCHW", "OIHW", "NCHW"),
            preferred_element_type=jnp.float32,
        )
        y = y + b[None, :, None, None]
        return jnp.maximum(y, 0.0)

    return conv_relu(conv_relu(x_nchw, w1, b1), w2, b2) + x_nchw


if __name__ == "__main__":
    # C = 128 keeps the channel (lane / contraction) axis a full multiple of 128, matching
    # realistic build_resnet_block usage; the total problem is still small.
    N, C, H, W = 2, 128, 16, 16

    key = jax.random.PRNGKey(0)
    kx, kw1, kb1, kw2, kb2 = jax.random.split(key, 5)

    x = jax.random.normal(kx, (N, C, H, W), dtype=jnp.float32)
    # deterministic synthetic weights (shapes match nn.Conv2d(C, C, 3, 1, 1))
    w1 = jax.random.normal(kw1, (C, C, 3, 3), dtype=jnp.float32) * 0.05
    b1 = jax.random.normal(kb1, (C,), dtype=jnp.float32) * 0.1
    w2 = jax.random.normal(kw2, (C, C, 3, 3), dtype=jnp.float32) * 0.05
    b2 = jax.random.normal(kb2, (C,), dtype=jnp.float32) * 0.1

    out = resnet_block_pallas(x, w1, b1, w2, b2)
    out = jax.block_until_ready(out)
    assert out.shape == (N, C, H, W)

    # Primary check: reference with matching bf16 MXU-operand precision (f32 accumulate).
    ref_bf16 = resnet_block_ref(x, w1, b1, w2, b2, operand_dtype=jnp.bfloat16)
    err_bf16 = float(jnp.max(jnp.abs(out - ref_bf16)))
    assert err_bf16 < 2e-3, f"mismatch vs bf16-operand reference: max abs err = {err_bf16}"

    # Sanity check against the full-f32 reference (loose: bf16 operand quantization error).
    ref_f32 = resnet_block_ref(x, w1, b1, w2, b2, operand_dtype=jnp.float32)
    rel_f32 = float(jnp.max(jnp.abs(out - ref_f32)) / jnp.max(jnp.abs(ref_f32)))
    assert rel_f32 < 5e-2, f"mismatch vs f32 reference: max rel err = {rel_f32}"

    print("KERNEL_OK")
</pallas_src>

<mosaic_0001>
module attributes {stable_mosaic.version = 11 : i64} {
  func.func @resnet_block_kernel(%arg0: i32, %arg1: memref<1x16x16x128xf32, #tpu.memory_space<vmem>>, %arg2: memref<1152x128xbf16, #tpu.memory_space<vmem>>, %arg3: memref<1x128xf32, #tpu.memory_space<vmem>>, %arg4: memref<1152x128xbf16, #tpu.memory_space<vmem>>, %arg5: memref<1x128xf32, #tpu.memory_space<vmem>>, %arg6: memref<1x16x16x128xf32, #tpu.memory_space<vmem>>, %arg7: memref<1x18x32x128xf32, #tpu.memory_space<vmem>>) attributes {dimension_semantics = [#tpu.dimension_semantics<parallel>], iteration_bounds = array<i64: 2>, scalar_prefetch = 0 : i64, scratch_operands = 1 : i64, tpu.core_type = #tpu.core_type<tc>, window_params = [{transform_indices = @transform_0, window_bounds = array<i64: 1, 16, 16, 128>}, {pipeline_mode = #tpu.pipeline_mode<synchronous>, transform_indices = @transform_1, window_bounds = array<i64: 1152, 128>}, {pipeline_mode = #tpu.pipeline_mode<synchronous>, transform_indices = @transform_2, window_bounds = array<i64: 1, 128>}, {pipeline_mode = #tpu.pipeline_mode<synchronous>, transform_indices = @transform_3, window_bounds = array<i64: 1152, 128>}, {pipeline_mode = #tpu.pipeline_mode<synchronous>, transform_indices = @transform_4, window_bounds = array<i64: 1, 128>}, {transform_indices = @transform_5, window_bounds = array<i64: 1, 16, 16, 128>}]} {
    %cst = arith.constant 0.000000e+00 : f32
    %0 = vector.broadcast %cst : f32 to vector<1x1x32x128xf32>
    %c0 = arith.constant 0 : index
    %c0_0 = arith.constant 0 : index
    %c0_1 = arith.constant 0 : index
    %c0_2 = arith.constant 0 : index
    %1 = vector.load %arg7[%c0, %c0_0, %c0_1, %c0_2] : memref<1x18x32x128xf32, #tpu.memory_space<vmem>>, vector<1x1x32x128xf32>
    tpu.vector_store %arg7[%c0, %c0_0, %c0_1, %c0_2], %0 {strides = array<i32>} : memref<1x18x32x128xf32, #tpu.memory_space<vmem>>, vector<1x1x32x128xf32>,
    %cst_3 = arith.constant 0.000000e+00 : f32
    %2 = vector.broadcast %cst_3 : f32 to vector<1x1x32x128xf32>
    %c0_4 = arith.constant 0 : index
    %c17 = arith.constant 17 : index
    %c0_5 = arith.constant 0 : index
    %c0_6 = arith.constant 0 : index
    %3 = vector.load %arg7[%c0_4, %c17, %c0_5, %c0_6] : memref<1x18x32x128xf32, #tpu.memory_space<vmem>>, vector<1x1x32x128xf32>
    tpu.vector_store %arg7[%c0_4, %c17, %c0_5, %c0_6], %2 {strides = array<i32>} : memref<1x18x32x128xf32, #tpu.memory_space<vmem>>, vector<1x1x32x128xf32>,
    %cst_7 = arith.constant 0.000000e+00 : f32
    %4 = vector.broadcast %cst_7 : f32 to vector<1x18x8x128xf32>
    %c0_8 = arith.constant 0 : index
    %c0_9 = arith.constant 0 : index
    %c0_10 = arith.constant 0 : index
    %c0_11 = arith.constant 0 : index
    %5 = vector.load %arg7[%c0_8, %c0_9, %c0_10, %c0_11] : memref<1x18x32x128xf32, #tpu.memory_space<vmem>>, vector<1x18x8x128xf32>
    tpu.vector_store %arg7[%c0_8, %c0_9, %c0_10, %c0_11], %4 {strides = array<i32>} : memref<1x18x32x128xf32, #tpu.memory_space<vmem>>, vector<1x18x8x128xf32>,
    %cst_12 = arith.constant 0.000000e+00 : f32
    %6 = vector.broadcast %cst_12 : f32 to vector<1x18x8x128xf32>
    %c0_13 = arith.constant 0 : index
    %c0_14 = arith.constant 0 : index
    %c24 = arith.constant 24 : index
    %c0_15 = arith.constant 0 : index
    %7 = vector.load %arg7[%c0_13, %c0_14, %c24, %c0_15] : memref<1x18x32x128xf32, #tpu.memory_space<vmem>>, vector<1x18x8x128xf32>
    tpu.vector_store %arg7[%c0_13, %c0_14, %c24, %c0_15], %6 {strides = array<i32>} : memref<1x18x32x128xf32, #tpu.memory_space<vmem>>, vector<1x18x8x128xf32>,
    %c0_16 = arith.constant 0 : index
    %c0_17 = arith.constant 0 : index
    %c0_18 = arith.constant 0 : index
    %c0_19 = arith.constant 0 : index
    %8 = vector.load %arg1[%c0_16, %c0_17, %c0_18, %c0_19] : memref<1x16x16x128xf32, #tpu.memory_space<vmem>>, vector<1x16x16x128xf32>
    %c0_20 = arith.constant 0 : index
    %c1 = arith.constant 1 : index
    %c8 = arith.constant 8 : index
    %c0_21 = arith.constant 0 : index
    %9 = vector.load %arg7[%c0_20, %c1, %c8, %c0_21] : memref<1x18x32x128xf32, #tpu.memory_space<vmem>>, vector<1x16x16x128xf32>
    tpu.vector_store %arg7[%c0_20, %c1, %c8, %c0_21], %8 {strides = array<i32>} : memref<1x18x32x128xf32, #tpu.memory_space<vmem>>, vector<1x16x16x128xf32>,
    %c0_22 = arith.constant 0 : index
    %c0_23 = arith.constant 0 : index
    %c7 = arith.constant 7 : index
    %c0_24 = arith.constant 0 : index
    %10 = vector.load %arg7[%c0_22, %c0_23, %c7, %c0_24] : memref<1x18x32x128xf32, #tpu.memory_space<vmem>>, vector<1x18x16x128xf32>
    %11 = arith.truncf %10 : vector<1x18x16x128xf32> to vector<1x18x16x128xbf16>
    %c0_25 = arith.constant 0 : index
    %c0_26 = arith.constant 0 : index
    %c8_27 = arith.constant 8 : index
    %c0_28 = arith.constant 0 : index
    %12 = vector.load %arg7[%c0_25, %c0_26, %c8_27, %c0_28] : memref<1x18x32x128xf32, #tpu.memory_space<vmem>>, vector<1x18x16x128xf32>
    %13 = arith.truncf %12 : vector<1x18x16x128xf32> to vector<1x18x16x128xbf16>
    %c0_29 = arith.constant 0 : index
    %c0_30 = arith.constant 0 : index
    %c9 = arith.constant 9 : index
    %c0_31 = arith.constant 0 : index
    %14 = vector.load %arg7[%c0_29, %c0_30, %c9, %c0_31] : memref<1x18x32x128xf32, #tpu.memory_space<vmem>>, vector<1x18x16x128xf32>
    %15 = arith.truncf %14 : vector<1x18x16x128xf32> to vector<1x18x16x128xbf16>
    %16 = vector.extract_strided_slice %11 {offsets = [0, 0, 0, 0], sizes = [1, 16, 16, 128], strides = [1, 1, 1, 1]} : vector<1x18x16x128xbf16> to vector<1x16x16x128xbf16>
    %17 = vector.shape_cast %16 : vector<1x16x16x128xbf16> to vector<256x128xbf16>
    %18 = vector.extract_strided_slice %13 {offsets = [0, 0, 0, 0], sizes = [1, 16, 16, 128], strides = [1, 1, 1, 1]} : vector<1x18x16x128xbf16> to vector<1x16x16x128xbf16>
    %19 = vector.shape_cast %18 : vector<1x16x16x128xbf16> to vector<256x128xbf16>
    %20 = vector.extract_strided_slice %15 {offsets = [0, 0, 0, 0], sizes = [1, 16, 16, 128], strides = [1, 1, 1, 1]} : vector<1x18x16x128xbf16> to vector<1x16x16x128xbf16>
    %21 = vector.shape_cast %20 : vector<1x16x16x128xbf16> to vector<256x128xbf16>
    %22 = vector.extract_strided_slice %11 {offsets = [0, 1, 0, 0], sizes = [1, 16, 16, 128], strides = [1, 1, 1, 1]} : vector<1x18x16x128xbf16> to vector<1x16x16x128xbf16>
    %23 = vector.shape_cast %22 : vector<1x16x16x128xbf16> to vector<256x128xbf16>
    %24 = vector.extract_strided_slice %13 {offsets = [0, 1, 0, 0], sizes = [1, 16, 16, 128], strides = [1, 1, 1, 1]} : vector<1x18x16x128xbf16> to vector<1x16x16x128xbf16>
    %25 = vector.shape_cast %24 : vector<1x16x16x128xbf16> to vector<256x128xbf16>
    %26 = vector.extract_strided_slice %15 {offsets = [0, 1, 0, 0], sizes = [1, 16, 16, 128], strides = [1, 1, 1, 1]} : vector<1x18x16x128xbf16> to vector<1x16x16x128xbf16>
    %27 = vector.shape_cast %26 : vector<1x16x16x128xbf16> to vector<256x128xbf16>
    %28 = vector.extract_strided_slice %11 {offsets = [0, 2, 0, 0], sizes = [1, 16, 16, 128], strides = [1, 1, 1, 1]} : vector<1x18x16x128xbf16> to vector<1x16x16x128xbf16>
    %29 = vector.shape_cast %28 : vector<1x16x16x128xbf16> to vector<256x128xbf16>
    %30 = vector.extract_strided_slice %13 {offsets = [0, 2, 0, 0], sizes = [1, 16, 16, 128], strides = [1, 1, 1, 1]} : vector<1x18x16x128xbf16> to vector<1x16x16x128xbf16>
    %31 = vector.shape_cast %30 : vector<1x16x16x128xbf16> to vector<256x128xbf16>
    %32 = vector.extract_strided_slice %15 {offsets = [0, 2, 0, 0], sizes = [1, 16, 16, 128], strides = [1, 1, 1, 1]} : vector<1x18x16x128xbf16> to vector<1x16x16x128xbf16>
    %33 = vector.shape_cast %32 : vector<1x16x16x128xbf16> to vector<256x128xbf16>
    %34 = tpu.concatenate %17, %19, %21, %23, %25, %27, %29, %31, %33 in 1 : vector<256x128xbf16>, vector<256x128xbf16>, vector<256x128xbf16>, vector<256x128xbf16>, vector<256x128xbf16>, vector<256x128xbf16>, vector<256x128xbf16>, vector<256x128xbf16>, vector<256x128xbf16> -> vector<256x1152xbf16>
    %c0_32 = arith.constant 0 : index
    %c0_33 = arith.constant 0 : index
    %35 = vector.load %arg2[%c0_32, %c0_33] : memref<1152x128xbf16, #tpu.memory_space<vmem>>, vector<1152x128xbf16>
    %cst_34 = arith.constant dense<0.000000e+00> : vector<256x128xf32>
    %36 = tpu.matmul %34, %35, %cst_34 {dimension_numbers = #tpu.dot_dimension_numbers<[1], [0], [0], [1], [0, 0, 1, 1], [], []>} : vector<256x1152xbf16>, vector<1152x128xbf16>, vector<256x128xf32> -> vector<256x128xf32>
    %c0_35 = arith.constant 0 : index
    %c0_36 = arith.constant 0 : index
    %37 = vector.load %arg3[%c0_35, %c0_36] : memref<1x128xf32, #tpu.memory_space<vmem>>, vector<1x128xf32>
    %38 = vector.broadcast %37 : vector<1x128xf32> to vector<256x128xf32>
    %39 = arith.addf %36, %38 : vector<256x128xf32>
    %cst_37 = arith.constant 0.000000e+00 : f32
    %40 = vector.broadcast %cst_37 : f32 to vector<256x128xf32>
    %41 = arith.maximumf %39, %40 : vector<256x128xf32>
    %42 = vector.shape_cast %41 : vector<256x128xf32> to vector<1x16x16x128xf32>
    %c0_38 = arith.constant 0 : index
    %c1_39 = arith.constant 1 : index
    %c8_40 = arith.constant 8 : index
    %c0_41 = arith.constant 0 : index
    %43 = vector.load %arg7[%c0_38, %c1_39, %c8_40, %c0_41] : memref<1x18x32x128xf32, #tpu.memory_space<vmem>>, vector<1x16x16x128xf32>
    tpu.vector_store %arg7[%c0_38, %c1_39, %c8_40, %c0_41], %42 {strides = array<i32>} : memref<1x18x32x128xf32, #tpu.memory_space<vmem>>, vector<1x16x16x128xf32>,
    %c0_42 = arith.constant 0 : index
    %c0_43 = arith.constant 0 : index
    %c7_44 = arith.constant 7 : index
    %c0_45 = arith.constant 0 : index
    %44 = vector.load %arg7[%c0_42, %c0_43, %c7_44, %c0_45] : memref<1x18x32x128xf32, #tpu.memory_space<vmem>>, vector<1x18x16x128xf32>
    %45 = arith.truncf %44 : vector<1x18x16x128xf32> to vector<1x18x16x128xbf16>
    %c0_46 = arith.constant 0 : index
    %c0_47 = arith.constant 0 : index
    %c8_48 = arith.constant 8 : index
    %c0_49 = arith.constant 0 : index
    %46 = vector.load %arg7[%c0_46, %c0_47, %c8_48, %c0_49] : memref<1x18x32x128xf32, #tpu.memory_space<vmem>>, vector<1x18x16x128xf32>
    %47 = arith.truncf %46 : vector<1x18x16x128xf32> to vector<1x18x16x128xbf16>
    %c0_50 = arith.constant 0 : index
    %c0_51 = arith.constant 0 : index
    %c9_52 = arith.constant 9 : index
    %c0_53 = arith.constant 0 : index
    %48 = vector.load %arg7[%c0_50, %c0_51, %c9_52, %c0_53] : memref<1x18x32x128xf32, #tpu.memory_space<vmem>>, vector<1x18x16x128xf32>
    %49 = arith.truncf %48 : vector<1x18x16x128xf32> to vector<1x18x16x128xbf16>
    %50 = vector.extract_strided_slice %45 {offsets = [0, 0, 0, 0], sizes = [1, 16, 16, 128], strides = [1, 1, 1, 1]} : vector<1x18x16x128xbf16> to vector<1x16x16x128xbf16>
    %51 = vector.shape_cast %50 : vector<1x16x16x128xbf16> to vector<256x128xbf16>
    %52 = vector.extract_strided_slice %47 {offsets = [0, 0, 0, 0], sizes = [1, 16, 16, 128], strides = [1, 1, 1, 1]} : vector<1x18x16x128xbf16> to vector<1x16x16x128xbf16>
    %53 = vector.shape_cast %52 : vector<1x16x16x128xbf16> to vector<256x128xbf16>
    %54 = vector.extract_strided_slice %49 {offsets = [0, 0, 0, 0], sizes = [1, 16, 16, 128], strides = [1, 1, 1, 1]} : vector<1x18x16x128xbf16> to vector<1x16x16x128xbf16>
    %55 = vector.shape_cast %54 : vector<1x16x16x128xbf16> to vector<256x128xbf16>
    %56 = vector.extract_strided_slice %45 {offsets = [0, 1, 0, 0], sizes = [1, 16, 16, 128], strides = [1, 1, 1, 1]} : vector<1x18x16x128xbf16> to vector<1x16x16x128xbf16>
    %57 = vector.shape_cast %56 : vector<1x16x16x128xbf16> to vector<256x128xbf16>
    %58 = vector.extract_strided_slice %47 {offsets = [0, 1, 0, 0], sizes = [1, 16, 16, 128], strides = [1, 1, 1, 1]} : vector<1x18x16x128xbf16> to vector<1x16x16x128xbf16>
    %59 = vector.shape_cast %58 : vector<1x16x16x128xbf16> to vector<256x128xbf16>
    %60 = vector.extract_strided_slice %49 {offsets = [0, 1, 0, 0], sizes = [1, 16, 16, 128], strides = [1, 1, 1, 1]} : vector<1x18x16x128xbf16> to vector<1x16x16x128xbf16>
    %61 = vector.shape_cast %60 : vector<1x16x16x128xbf16> to vector<256x128xbf16>
    %62 = vector.extract_strided_slice %45 {offsets = [0, 2, 0, 0], sizes = [1, 16, 16, 128], strides = [1, 1, 1, 1]} : vector<1x18x16x128xbf16> to vector<1x16x16x128xbf16>
    %63 = vector.shape_cast %62 : vector<1x16x16x128xbf16> to vector<256x128xbf16>
    %64 = vector.extract_strided_slice %47 {offsets = [0, 2, 0, 0], sizes = [1, 16, 16, 128], strides = [1, 1, 1, 1]} : vector<1x18x16x128xbf16> to vector<1x16x16x128xbf16>
    %65 = vector.shape_cast %64 : vector<1x16x16x128xbf16> to vector<256x128xbf16>
    %66 = vector.extract_strided_slice %49 {offsets = [0, 2, 0, 0], sizes = [1, 16, 16, 128], strides = [1, 1, 1, 1]} : vector<1x18x16x128xbf16> to vector<1x16x16x128xbf16>
    %67 = vector.shape_cast %66 : vector<1x16x16x128xbf16> to vector<256x128xbf16>
    %68 = tpu.concatenate %51, %53, %55, %57, %59, %61, %63, %65, %67 in 1 : vector<256x128xbf16>, vector<256x128xbf16>, vector<256x128xbf16>, vector<256x128xbf16>, vector<256x128xbf16>, vector<256x128xbf16>, vector<256x128xbf16>, vector<256x128xbf16>, vector<256x128xbf16> -> vector<256x1152xbf16>
    %c0_54 = arith.constant 0 : index
    %c0_55 = arith.constant 0 : index
    %69 = vector.load %arg4[%c0_54, %c0_55] : memref<1152x128xbf16, #tpu.memory_space<vmem>>, vector<1152x128xbf16>
    %cst_56 = arith.constant dense<0.000000e+00> : vector<256x128xf32>
    %70 = tpu.matmul %68, %69, %cst_56 {dimension_numbers = #tpu.dot_dimension_numbers<[1], [0], [0], [1], [0, 0, 1, 1], [], []>} : vector<256x1152xbf16>, vector<1152x128xbf16>, vector<256x128xf32> -> vector<256x128xf32>
    %c0_57 = arith.constant 0 : index
    %c0_58 = arith.constant 0 : index
    %71 = vector.load %arg5[%c0_57, %c0_58] : memref<1x128xf32, #tpu.memory_space<vmem>>, vector<1x128xf32>
    %72 = vector.broadcast %71 : vector<1x128xf32> to vector<256x128xf32>
    %73 = arith.addf %70, %72 : vector<256x128xf32>
    %cst_59 = arith.constant 0.000000e+00 : f32
    %74 = vector.broadcast %cst_59 : f32 to vector<256x128xf32>
    %75 = arith.maximumf %73, %74 : vector<256x128xf32>
    %76 = vector.shape_cast %75 : vector<256x128xf32> to vector<1x16x16x128xf32>
    %c0_60 = arith.constant 0 : index
    %c0_61 = arith.constant 0 : index
    %c0_62 = arith.constant 0 : index
    %c0_63 = arith.constant 0 : index
    %77 = vector.load %arg1[%c0_60, %c0_61, %c0_62, %c0_63] : memref<1x16x16x128xf32, #tpu.memory_space<vmem>>, vector<1x16x16x128xf32>
    %78 = arith.addf %76, %77 : vector<1x16x16x128xf32>
    %c0_64 = arith.constant 0 : index
    %c0_65 = arith.constant 0 : index
    %c0_66 = arith.constant 0 : index
    %c0_67 = arith.constant 0 : index
    %79 = vector.load %arg6[%c0_64, %c0_65, %c0_66, %c0_67] : memref<1x16x16x128xf32, #tpu.memory_space<vmem>>, vector<1x16x16x128xf32>
    tpu.vector_store %arg6[%c0_64, %c0_65, %c0_66, %c0_67], %78 {strides = array<i32>} : memref<1x16x16x128xf32, #tpu.memory_space<vmem>>, vector<1x16x16x128xf32>,
    return
  }
  func.func @transform_0(%arg0: i32) -> (i32, i32, i32, i32) {
    %c0_i32 = arith.constant 0 : i32
    %c0_i32_0 = arith.constant 0 : i32
    %c0_i32_1 = arith.constant 0 : i32
    %c0_i32_2 = arith.constant 0 : i32
    return %arg0, %c0_i32, %c0_i32_0, %c0_i32_1 : i32, i32, i32, i32
  }
  func.func @transform_1(%arg0: i32) -> (i32, i32) {
    %c0_i32 = arith.constant 0 : i32
    %c0_i32_0 = arith.constant 0 : i32
    %c0_i32_1 = arith.constant 0 : i32
    return %c0_i32, %c0_i32_0 : i32, i32
  }
  func.func @transform_2(%arg0: i32) -> (i32, i32) {
    %c0_i32 = arith.constant 0 : i32
    %c0_i32_0 = arith.constant 0 : i32
    %c0_i32_1 = arith.constant 0 : i32
    return %c0_i32, %c0_i32_0 : i32, i32
  }
  func.func @transform_3(%arg0: i32) -> (i32, i32) {
    %c0_i32 = arith.constant 0 : i32
    %c0_i32_0 = arith.constant 0 : i32
    %c0_i32_1 = arith.constant 0 : i32
    return %c0_i32, %c0_i32_0 : i32, i32
  }
  func.func @transform_4(%arg0: i32) -> (i32, i32) {
    %c0_i32 = arith.constant 0 : i32
    %c0_i32_0 = arith.constant 0 : i32
    %c0_i32_1 = arith.constant 0 : i32
    return %c0_i32, %c0_i32_0 : i32, i32
  }
  func.func @transform_5(%arg0: i32) -> (i32, i32, i32, i32) {
    %c0_i32 = arith.constant 0 : i32
    %c0_i32_0 = arith.constant 0 : i32
    %c0_i32_1 = arith.constant 0 : i32
    %c0_i32_2 = arith.constant 0 : i32
    return %arg0, %c0_i32, %c0_i32_0, %c0_i32_1 : i32, i32, i32, i32
  }
}

</mosaic_0001>

<llo_original>
// kernel: tpu_custom_call.1
$region0: #{tpu_custom_call.1}
  #allocation0 [shape = 'u32[]', space=smem, size = 0x4, offset = 0x4, fixed_abs, tag = 'smem constant byte address 0x4 - core index']
  #allocation1 [shape = 'u32[72,128]{1,0:T(1,128)}', space=vmem, size = 0x9000, scoped, tag = 'internal scratch']
  #allocation2 [shape = 'f32[1,18,32,128]{3,2,1,0:T(8,128)}', space=vmem, size = 0x48000, scoped, tag = 'scratch operand']
  %s0 = inlined_call_operand.hbm [shape: f32[2,16,16,128], index: 0, kind: input, shape index: {}]
  %s1 = inlined_call_operand.hbm [shape: bf16[1152,128], index: 1, kind: input, shape index: {}]
  %s2 = inlined_call_operand.vmem [shape: f32[1,128], index: 2, kind: input, shape index: {}]
  %s3 = inlined_call_operand.hbm [shape: bf16[1152,128], index: 3, kind: input, shape index: {}]
  %s4 = inlined_call_operand.vmem [shape: f32[1,128], index: 4, kind: input, shape index: {}]
  %s5 = inlined_call_operand.hbm [shape: f32[2,16,16,128], index: 5, kind: output, shape index: {}]
  %s6 = sld [smem:[#allocation0]]
  $region65: #{tpu_custom_call.1} parent=0
    _
  %s8 = ssub.s32 1, %s6
  %s9 = scalar_select 0, %s8, %s6
  $region1: #{tpu_custom_call.1} parent=0
    #allocation3 [shape = 'u8[262144]{0}', space=vmem, size = 0x40000, scoped, tag = 'input window, operand 0']
    #allocation4 [shape = 's32[2]{0}', space=sflag, size = 0x8, scoped, tag = 'scoped memory for tpu_custom_call.1']
    #allocation5 [shape = 's32[2]{0}', space=sflag, size = 0x8, scoped, tag = 'scoped memory for tpu_custom_call.1']
    #allocation6 [shape = 'u8[294912]{0}', space=vmem, size = 0x48000, scoped, tag = 'input window, operand 1, single buffered']
    #allocation7 [shape = 's32[1]{0}', space=sflag, size = 0x4, scoped, tag = 'scoped memory for tpu_custom_call.1']
    #allocation8 [shape = 'u8[294912]{0}', space=vmem, size = 0x48000, scoped, tag = 'input window, operand 3, single buffered']
    #allocation9 [shape = 'u8[262144]{0}', space=vmem, size = 0x40000, scoped, tag = 'output window, operand 0']
    %10 = vsyncpa [#allocation4], 0
    %s11 = scalar_lea.sflag [#allocation4], 1
    %12 = vsyncpa %s11, 0
    %13 = vsyncpa [#allocation7], 0
    %14 = vsyncpa [#allocation5], 0
    %s15 = scalar_lea.sflag [#allocation5], 1
    %16 = vsyncpa %s15, 0
    loop: start=0, step=1, limit=4
    $region2: #{tpu_custom_call.1} parent=1 // loop_pre_header
      _
    $region3: #{tpu_custom_call.1} parent=1 // loop_header
      %s18 = sphi 0, %s22
      %p19 = scmp.ge.s32.totalorder %s18, 4
      %s28 = sphi 0, %s30
      %s31 = sphi 0, %s28
      %s32 = sphi 0, %s31
      %s48 = sphi 0, %s32
      %s52 = sphi 0, %s52
      %s54 = sphi 0, %s52
      %s55 = sphi 0, %s54
      %s69 = sphi 0, %s55
      %s73 = sphi 0, %s73
      %s75 = sphi 0, %s73
      %s76 = sphi 0, %s75
      %s90 = sphi 0, %s76
      %s94 = sphi 0, %s94
      %s96 = sphi 0, %s94
      %s97 = sphi 0, %s96
      %s111 = sphi 0, %s97
      %s115 = sphi 0, %s115
      %s117 = sphi 0, %s115
      %s118 = sphi 0, %s117
      %s132 = sphi 0, %s118
      %s138 = sphi 0, %s140
      %s141 = sphi 0, %s138
      %s142 = sphi 0, %s141
      %s158 = sphi 0, %s142
    $region4: #{tpu_custom_call.1} parent=1 // loop_header_branch
      %21 = sbr.rel (%p19) target = $region8
    $region5: #{tpu_custom_call.1} parent=1 // loop_body
      %s23 = ssub.s32 %s18, 1
      %s24 = ssub.s32 %s18, 2
      %s25 = sadd.s32 %s18, 1
      %s26 = ssub.s32 %s18, %s25
      %p27 = scmp.eq.s32.totalorder %s26, 0
      %s29 = sadd.s32 %s28, 1
      %s30 = scalar_select %p27, %s28, %s29
      %p33 = pneg %p27
      %p34 = scmp.eq.s32.totalorder %s18, 1
      %p35 = por %p33, %p34
      %p36 = scmp.ne.s32.totalorder %s28, %s31
      %p37 = scmp.eq.s32.totalorder %s18, 0
      %p38 = por %p36, %p37
      %p39 = scmp.ne.s32.totalorder %s28, %s31
      %p40 = scmp.eq.s32.totalorder %s23, 1
      %p41 = por %p39, %p40
      %p42 = scmp.ne.s32.totalorder %s31, %s32
      %p43 = scmp.eq.s32.totalorder %s23, 0
      %p44 = por %p42, %p43
      %p45 = scmp.ne.s32.totalorder %s31, %s32
      %p46 = scmp.eq.s32.totalorder %s24, 1
      %p47 = por %p45, %p46
      %p49 = scmp.ne.s32.totalorder %s32, %s48
      %p50 = scmp.eq.s32.totalorder %s24, 0
      %p51 = por %p49, %p50
      %s53 = sadd.s32 %s52, 1
      %p56 = scmp.eq.s32.totalorder %s18, 1
      %p57 = scmp.ne.s32.totalorder %s52, %s54
      %p58 = scmp.eq.s32.totalorder %s18, 0
      %p59 = por %p57, %p58
      %p60 = scmp.ne.s32.totalorder %s52, %s54
      %p61 = scmp.eq.s32.totalorder %s23, 1
      %p62 = por %p60, %p61
      %p63 = scmp.ne.s32.totalorder %s54, %s55
      %p64 = scmp.eq.s32.totalorder %s23, 0
      %p65 = por %p63, %p64
      %p66 = scmp.ne.s32.totalorder %s54, %s55
      %p67 = scmp.eq.s32.totalorder %s24, 1
      %p68 = por %p66, %p67
      %p70 = scmp.ne.s32.totalorder %s55, %s69
      %p71 = scmp.eq.s32.totalorder %s24, 0
      %p72 = por %p70, %p71
      %s74 = sadd.s32 %s73, 1
      %p77 = scmp.eq.s32.totalorder %s18, 1
      %p78 = scmp.ne.s32.totalorder %s73, %s75
      %p79 = scmp.eq.s32.totalorder %s18, 0
      %p80 = por %p78, %p79
      %p81 = scmp.ne.s32.totalorder %s73, %s75
      %p82 = scmp.eq.s32.totalorder %s23, 1
      %p83 = por %p81, %p82
      %p84 = scmp.ne.s32.totalorder %s75, %s76
      %p85 = scmp.eq.s32.totalorder %s23, 0
      %p86 = por %p84, %p85
      %p87 = scmp.ne.s32.totalorder %s75, %s76
      %p88 = scmp.eq.s32.totalorder %s24, 1
      %p89 = por %p87, %p88
      %p91 = scmp.ne.s32.totalorder %s76, %s90
      %p92 = scmp.eq.s32.totalorder %s24, 0
      %p93 = por %p91, %p92
      %s95 = sadd.s32 %s94, 1
      %p98 = scmp.eq.s32.totalorder %s18, 1
      %p99 = scmp.ne.s32.totalorder %s94, %s96
      %p100 = scmp.eq.s32.totalorder %s18, 0
      %p101 = por %p99, %p100
      %p102 = scmp.ne.s32.totalorder %s94, %s96
      %p103 = scmp.eq.s32.totalorder %s23, 1
      %p104 = por %p102, %p103
      %p105 = scmp.ne.s32.totalorder %s96, %s97
      %p106 = scmp.eq.s32.totalorder %s23, 0
      %p107 = por %p105, %p106
      %p108 = scmp.ne.s32.totalorder %s96, %s97
      %p109 = scmp.eq.s32.totalorder %s24, 1
      %p110 = por %p108, %p109
      %p112 = scmp.ne.s32.totalorder %s97, %s111
      %p113 = scmp.eq.s32.totalorder %s24, 0
      %p114 = por %p112, %p113
      %s116 = sadd.s32 %s115, 1
      %p119 = scmp.eq.s32.totalorder %s18, 1
      %p120 = scmp.ne.s32.totalorder %s115, %s117
      %p121 = scmp.eq.s32.totalorder %s18, 0
      %p122 = por %p120, %p121
      %p123 = scmp.ne.s32.totalorder %s115, %s117
      %p124 = scmp.eq.s32.totalorder %s23, 1
      %p125 = por %p123, %p124
      %p126 = scmp.ne.s32.totalorder %s117, %s118
      %p127 = scmp.eq.s32.totalorder %s23, 0
      %p128 = por %p126, %p127
      %p129 = scmp.ne.s32.totalorder %s117, %s118
      %p130 = scmp.eq.s32.totalorder %s24, 1
      %p131 = por %p129, %p130
      %p133 = scmp.ne.s32.totalorder %s118, %s132
      %p134 = scmp.eq.s32.totalorder %s24, 0
      %p135 = por %p133, %p134
      %s136 = ssub.s32 %s18, %s25
      %p137 = scmp.eq.s32.totalorder %s136, 0
      %s139 = sadd.s32 %s138, 1
      %s140 = scalar_select %p137, %s138, %s139
      %p143 = pneg %p137
      %p144 = scmp.eq.s32.totalorder %s18, 1
      %p145 = por %p143, %p144
      %p146 = scmp.ne.s32.totalorder %s138, %s141
      %p147 = scmp.eq.s32.totalorder %s18, 0
      %p148 = por %p146, %p147
      %p149 = scmp.ne.s32.totalorder %s138, %s141
      %p150 = scmp.eq.s32.totalorder %s23, 1
      %p151 = por %p149, %p150
      %p152 = scmp.ne.s32.totalorder %s141, %s142
      %p153 = scmp.eq.s32.totalorder %s23, 0
      %p154 = por %p152, %p153
      %p155 = scmp.ne.s32.totalorder %s141, %s142
      %p156 = scmp.eq.s32.totalorder %s24, 1
      %p157 = por %p155, %p156
      %p159 = scmp.ne.s32.totalorder %s142, %s158
      %p160 = scmp.eq.s32.totalorder %s24, 0
      %p161 = por %p159, %p160
      %p162 = scmp.le.s32.totalorder 1, %s18
      %p163 = scmp.lt.s32.totalorder %s18, 3
      %p164 = pnand %p162, %p163
      %p165 = pneg %p164
      // Predicated region
      $region9: #{tpu_custom_call.1} parent=5 // pred_check
        _
      $region10: #{tpu_custom_call.1} parent=5 // pred_check_branch
        %167 = sbr.rel (%p164) target = $region12
      $region11: #{tpu_custom_call.1} parent=5 // pred_region
        %s168 = ssub.s32 %s18, 1
        // Predicated region
        $region13: #{tpu_custom_call.1} parent=11 // pred_check
          %p169 = pneg %p65
        $region14: #{tpu_custom_call.1} parent=11 // pred_check_branch
          %171 = sbr.rel (%p169) target = $region16
        $region15: #{tpu_custom_call.1} parent=11 // pred_region
          %173 = vsyncadd [#allocation7], 0
          %s174 = sshll.u32 %s1, 4
          %s175 = int_to_ptr.hbm [resolvable:$true] %s174
          %s176 = sshll.u32 [#allocation6], 4
          %s177 = int_to_ptr.vmem [resolvable:$true] %s176
          %182 = dma.hbm_to_vmem [thread:$0]  %s175, 9216, %s177, [#allocation7], 64, 64, 4
        $region16: #{tpu_custom_call.1} parent=11 // pred_fallthru
          _
        // Predicated region
        $region17: #{tpu_custom_call.1} parent=11 // pred_check
          %p183 = pneg %p86
        $region18: #{tpu_custom_call.1} parent=11 // pred_check_branch
          %185 = sbr.rel (%p183) target = $region20
        $region19: #{tpu_custom_call.1} parent=11 // pred_region
          _
        $region20: #{tpu_custom_call.1} parent=11 // pred_fallthru
          _
        // Predicated region
        $region21: #{tpu_custom_call.1} parent=11 // pred_check
          %p186 = pneg %p107
        $region22: #{tpu_custom_call.1} parent=11 // pred_check_branch
          %188 = sbr.rel (%p186) target = $region24
        $region23: #{tpu_custom_call.1} parent=11 // pred_region
          %190 = vsyncadd [#allocation7], 0
          %s191 = sshll.u32 %s3, 4
          %s192 = int_to_ptr.hbm [resolvable:$true] %s191
          %s193 = sshll.u32 [#allocation8], 4
          %s194 = int_to_ptr.vmem [resolvable:$true] %s193
          %199 = dma.hbm_to_vmem [thread:$0]  %s192, 9216, %s194, [#allocation7], 64, 64, 4
        $region24: #{tpu_custom_call.1} parent=11 // pred_fallthru
          _
        // Predicated region
        $region25: #{tpu_custom_call.1} parent=11 // pred_check
          %p200 = pneg %p128
        $region26: #{tpu_custom_call.1} parent=11 // pred_check_branch
          %202 = sbr.rel (%p200) target = $region28
        $region27: #{tpu_custom_call.1} parent=11 // pred_region
          _
        $region28: #{tpu_custom_call.1} parent=11 // pred_fallthru
          _
      $region12: #{tpu_custom_call.1} parent=5 // pred_fallthru
        _
      %p203 = scmp.lt.s32.totalorder %s18, 2
      // Predicated region
      $region29: #{tpu_custom_call.1} parent=5 // pred_check
        %p204 = pneg %p203
      $region30: #{tpu_custom_call.1} parent=5 // pred_check_branch
        %206 = sbr.rel (%p204) target = $region32
      $region31: #{tpu_custom_call.1} parent=5 // pred_region
        // Predicated region
        $region33: #{tpu_custom_call.1} parent=31 // pred_check
          %p207 = pneg %p38
        $region34: #{tpu_custom_call.1} parent=31 // pred_check_branch
          %209 = sbr.rel (%p207) target = $region36
        $region35: #{tpu_custom_call.1} parent=31 // pred_region
          %s210 = sand.u32 %s28, 1
          %s211 = scalar_lea.sflag [#allocation4], %s210
          %s212 = sand.u32 %s28, 1
          %s213 = smul.addr %s212, 256
          %s214 = scalar_lea.vmem [#allocation3], %s213
          %216 = vsyncadd %s211, 0
          %s217 = smul.addr %s18, 32
          %s218 = smul.addr %s217, 8
          %s219 = scalar_lea.hbm %s0, %s218
          %s220 = sshll.u32 %s219, 4
          %s221 = int_to_ptr.hbm [resolvable:$true] %s220
          %s222 = sshll.u32 %s214, 4
          %s223 = int_to_ptr.vmem [resolvable:$true] %s222
          %228 = dma.hbm_to_vmem [thread:$0]  %s221, 4096, %s223, %s211, 128, 128, 8
        $region36: #{tpu_custom_call.1} parent=31 // pred_fallthru
          _
      $region32: #{tpu_custom_call.1} parent=5 // pred_fallthru
        _
      %p229 = scmp.le.s32.totalorder 1, %s18
      %p230 = scmp.lt.s32.totalorder %s18, 3
      %p231 = pnand %p229, %p230
      %p232 = pneg %p231
      // Predicated region
      $region37: #{tpu_custom_call.1} parent=5 // pred_check
        _
      $region38: #{tpu_custom_call.1} parent=5 // pred_check_branch
        %234 = sbr.rel (%p231) target = $region40
      $region39: #{tpu_custom_call.1} parent=5 // pred_region
        %s235 = ssub.s32 %s18, 1
        %s236 = sand.u32 %s31, 1
        %s237 = scalar_lea.sflag [#allocation4], %s236
        %s238 = sand.u32 %s31, 1
        %s239 = smul.addr %s238, 256
        %s240 = scalar_lea.vmem [#allocation3], %s239
        // Predicated region
        $region41: #{tpu_custom_call.1} parent=39 // pred_check
          %p241 = pneg %p44
        $region42: #{tpu_custom_call.1} parent=39 // pred_check_branch
          %243 = sbr.rel (%p241) target = $region44
        $region43: #{tpu_custom_call.1} parent=39 // pred_region
          %245 = dma.done %s237, 4096
        $region44: #{tpu_custom_call.1} parent=39 // pred_fallthru
          _
        // Predicated region
        $region45: #{tpu_custom_call.1} parent=39 // pred_check
          %p246 = pneg %p65
        $region46: #{tpu_custom_call.1} parent=39 // pred_check_branch
          %248 = sbr.rel (%p246) target = $region48
        $region47: #{tpu_custom_call.1} parent=39 // pred_region
          %250 = dma.done [#allocation7], 9216
        $region48: #{tpu_custom_call.1} parent=39 // pred_fallthru
          _
        // Predicated region
        $region49: #{tpu_custom_call.1} parent=39 // pred_check
          %p251 = pneg %p107
        $region50: #{tpu_custom_call.1} parent=39 // pred_check_branch
          %253 = sbr.rel (%p251) target = $region52
        $region51: #{tpu_custom_call.1} parent=39 // pred_region
          %255 = dma.done [#allocation7], 9216
        $region52: #{tpu_custom_call.1} parent=39 // pred_fallthru
          _
        %s256 = sand.u32 %s31, 1
        %s257 = scalar_lea.sflag [#allocation4], %s256
        %s258 = sand.u32 %s31, 1
        %s259 = smul.addr %s258, 256
        %s260 = scalar_lea.vmem [#allocation3], %s259
        %p261 = pneg %p44
        %p262 = pneg %p41
        %p263 = pneg %p65
        %p264 = pneg %p62
        %p265 = pneg %p86
        %p266 = pneg %p83
        %p267 = pneg %p107
        %p268 = pneg %p104
        %p269 = pneg %p128
        %p270 = pneg %p125
        %p271 = pneg %p154
        %p272 = pneg %p151
        %s273 = sand.u32 %s141, 1
        %s274 = scalar_lea.sflag [#allocation5], %s273
        %s275 = sand.u32 %s141, 1
        %s276 = smul.addr %s275, 256
        %s277 = scalar_lea.vmem [#allocation9], %s276
        %278 = vst [vmem:[#allocation2] sm:$0xff] 0.0
        %279 = vst [vmem:[#allocation2 + $0x8] sm:$0xff] 0.0
        %280 = vst [vmem:[#allocation2 + $0x10] sm:$0xff] 0.0
        %281 = vst [vmem:[#allocation2 + $0x18] sm:$0xff] 0.0
        %s282 = scalar_lea.vmem [#allocation2], 544
        %283 = vst [vmem:[%s282] sm:$0xff] 0.0
        %284 = vst [vmem:[%s282 + $0x8] sm:$0xff] 0.0
        %285 = vst [vmem:[%s282 + $0x10] sm:$0xff] 0.0
        %286 = vst [vmem:[%s282 + $0x18] sm:$0xff] 0.0
        %287 = vst [vmem:[#allocation2] sm:$0xff] 0.0
        %288 = vst [vmem:[#allocation2 + $0x20] sm:$0xff] 0.0
        %289 = vst [vmem:[#allocation2 + $0x40] sm:$0xff] 0.0
        %290 = vst [vmem:[#allocation2 + $0x60] sm:$0xff] 0.0
        %291 = vst [vmem:[#allocation2 + $0x80] sm:$0xff] 0.0
        %292 = vst [vmem:[#allocation2 + $0xa0] sm:$0xff] 0.0
        %293 = vst [vmem:[#allocation2 + $0xc0] sm:$0xff] 0.0
        %294 = vst [vmem:[#allocation2 + $0xe0] sm:$0xff] 0.0
        %295 = vst [vmem:[#allocation2 + $0x100] sm:$0xff] 0.0
        %296 = vst [vmem:[#allocation2 + $0x120] sm:$0xff] 0.0
        %297 = vst [vmem:[#allocation2 + $0x140] sm:$0xff] 0.0
        %298 = vst [vmem:[#allocation2 + $0x160] sm:$0xff] 0.0
        %299 = vst [vmem:[#allocation2 + $0x180] sm:$0xff] 0.0
        %300 = vst [vmem:[#allocation2 + $0x1a0] sm:$0xff] 0.0
        %301 = vst [vmem:[#allocation2 + $0x1c0] sm:$0xff] 0.0
        %302 = vst [vmem:[#allocation2 + $0x1e0] sm:$0xff] 0.0
        %303 = vst [vmem:[#allocation2 + $0x200] sm:$0xff] 0.0
        %304 = vst [vmem:[#allocation2 + $0x220] sm:$0xff] 0.0
        %305 = vst [vmem:[#allocation2 + $0x18] sm:$0xff] 0.0
        %306 = vst [vmem:[#allocation2 + $0x38] sm:$0xff] 0.0
        %307 = vst [vmem:[#allocation2 + $0x58] sm:$0xff] 0.0
        %308 = vst [vmem:[#allocation2 + $0x78] sm:$0xff] 0.0
        %309 = vst [vmem:[#allocation2 + $0x98] sm:$0xff] 0.0
        %310 = vst [vmem:[#allocation2 + $0xb8] sm:$0xff] 0.0
        %311 = vst [vmem:[#allocation2 + $0xd8] sm:$0xff] 0.0
        %312 = vst [vmem:[#allocation2 + $0xf8] sm:$0xff] 0.0
        %313 = vst [vmem:[#allocation2 + $0x118] sm:$0xff] 0.0
        %314 = vst [vmem:[#allocation2 + $0x138] sm:$0xff] 0.0
        %315 = vst [vmem:[#allocation2 + $0x158] sm:$0xff] 0.0
        %316 = vst [vmem:[#allocation2 + $0x178] sm:$0xff] 0.0
        %317 = vst [vmem:[#allocation2 + $0x198] sm:$0xff] 0.0
        %318 = vst [vmem:[#allocation2 + $0x1b8] sm:$0xff] 0.0
        %319 = vst [vmem:[#allocation2 + $0x1d8] sm:$0xff] 0.0
        %320 = vst [vmem:[#allocation2 + $0x1f8] sm:$0xff] 0.0
        %321 = vst [vmem:[#allocation2 + $0x218] sm:$0xff] 0.0
        %322 = vst [vmem:[#allocation2 + $0x238] sm:$0xff] 0.0
        %v323 = vld [vmem:[%s240] sm:$0xff]
        %v324 = vld [vmem:[%s240 + $0x8] sm:$0xff]
        %v325 = vld [vmem:[%s240 + $0x10] sm:$0xff]
        %v326 = vld [vmem:[%s240 + $0x18] sm:$0xff]
        %v327 = vld [vmem:[%s240 + $0x20] sm:$0xff]
        %v328 = vld [vmem:[%s240 + $0x28] sm:$0xff]
        %v329 = vld [vmem:[%s240 + $0x30] sm:$0xff]
        %v330 = vld [vmem:[%s240 + $0x38] sm:$0xff]
        %v331 = vld [vmem:[%s240 + $0x40] sm:$0xff]
        %v332 = vld [vmem:[%s240 + $0x48] sm:$0xff]
        %v333 = vld [vmem:[%s240 + $0x50] sm:$0xff]
        %v334 = vld [vmem:[%s240 + $0x58] sm:$0xff]
        %v335 = vld [vmem:[%s240 + $0x60] sm:$0xff]
        %v336 = vld [vmem:[%s240 + $0x68] sm:$0xff]
        %v337 = vld [vmem:[%s240 + $0x70] sm:$0xff]
        %v338 = vld [vmem:[%s240 + $0x78] sm:$0xff]
        %v339 = vld [vmem:[%s240 + $0x80] sm:$0xff]
        %v340 = vld [vmem:[%s240 + $0x88] sm:$0xff]
        %v341 = vld [vmem:[%s240 + $0x90] sm:$0xff]
        %v342 = vld [vmem:[%s240 + $0x98] sm:$0xff]
        %v343 = vld [vmem:[%s240 + $0xa0] sm:$0xff]
        %v344 = vld [vmem:[%s240 + $0xa8] sm:$0xff]
        %v345 = vld [vmem:[%s240 + $0xb0] sm:$0xff]
        %v346 = vld [vmem:[%s240 + $0xb8] sm:$0xff]
        %v347 = vld [vmem:[%s240 + $0xc0] sm:$0xff]
        %v348 = vld [vmem:[%s240 + $0xc8] sm:$0xff]
        %v349 = vld [vmem:[%s240 + $0xd0] sm:$0xff]
        %v350 = vld [vmem:[%s240 + $0xd8] sm:$0xff]
        %v351 = vld [vmem:[%s240 + $0xe0] sm:$0xff]
        %v352 = vld [vmem:[%s240 + $0xe8] sm:$0xff]
        %v353 = vld [vmem:[%s240 + $0xf0] sm:$0xff]
        %v354 = vld [vmem:[%s240 + $0xf8] sm:$0xff]
        %s355 = scalar_lea.vmem [#allocation2], 32
        %356 = vst [vmem:[%s355 + $0x8] sm:$0xff] %v323
        %357 = vst [vmem:[%s355 + $0x10] sm:$0xff] %v324
        %358 = vst [vmem:[%s355 + $0x28] sm:$0xff] %v325
        %359 = vst [vmem:[%s355 + $0x30] sm:$0xff] %v326
        %360 = vst [vmem:[%s355 + $0x48] sm:$0xff] %v327
        %361 = vst [vmem:[%s355 + $0x50] sm:$0xff] %v328
        %362 = vst [vmem:[%s355 + $0x68] sm:$0xff] %v329
        %363 = vst [vmem:[%s355 + $0x70] sm:$0xff] %v330
        %364 = vst [vmem:[%s355 + $0x88] sm:$0xff] %v331
        %365 = vst [vmem:[%s355 + $0x90] sm:$0xff] %v332
        %366 = vst [vmem:[%s355 + $0xa8] sm:$0xff] %v333
        %367 = vst [vmem:[%s355 + $0xb0] sm:$0xff] %v334
        %368 = vst [vmem:[%s355 + $0xc8] sm:$0xff] %v335
        %369 = vst [vmem:[%s355 + $0xd0] sm:$0xff] %v336
        %370 = vst [vmem:[%s355 + $0xe8] sm:$0xff] %v337
        %371 = vst [vmem:[%s355 + $0xf0] sm:$0xff] %v338
        %372 = vst [vmem:[%s355 + $0x108] sm:$0xff] %v339
        %373 = vst [vmem:[%s355 + $0x110] sm:$0xff] %v340
        %374 = vst [vmem:[%s355 + $0x128] sm:$0xff] %v341
        %375 = vst [vmem:[%s355 + $0x130] sm:$0xff] %v342
        %376 = vst [vmem:[%s355 + $0x148] sm:$0xff] %v343
        %377 = vst [vmem:[%s355 + $0x150] sm:$0xff] %v344
        %378 = vst [vmem:[%s355 + $0x168] sm:$0xff] %v345
        %379 = vst [vmem:[%s355 + $0x170] sm:$0xff] %v346
        %380 = vst [vmem:[%s355 + $0x188] sm:$0xff] %v347
        %381 = vst [vmem:[%s355 + $0x190] sm:$0xff] %v348
        %382 = vst [vmem:[%s355 + $0x1a8] sm:$0xff] %v349
        %383 = vst [vmem:[%s355 + $0x1b0] sm:$0xff] %v350
        %384 = vst [vmem:[%s355 + $0x1c8] sm:$0xff] %v351
        %385 = vst [vmem:[%s355 + $0x1d0] sm:$0xff] %v352
        %386 = vst [vmem:[%s355 + $0x1e8] sm:$0xff] %v353
        %387 = vst [vmem:[%s355 + $0x1f0] sm:$0xff] %v354
        %v388 = vld [vmem:[#allocation2 + $0x7] sm:$0xff]
        %v389 = vld [vmem:[#allocation2 + $0xf] sm:$0xff]
        %v390 = vld [vmem:[#allocation2 + $0x27] sm:$0xff]
        %v391 = vld [vmem:[#allocation2 + $0x2f] sm:$0xff]
        %v392 = vld [vmem:[#allocation2 + $0x47] sm:$0xff]
        %v393 = vld [vmem:[#allocation2 + $0x4f] sm:$0xff]
        %v394 = vld [vmem:[#allocation2 + $0x67] sm:$0xff]
        %v395 = vld [vmem:[#allocation2 + $0x6f] sm:$0xff]
        %v396 = vld [vmem:[#allocation2 + $0x87] sm:$0xff]
        %v397 = vld [vmem:[#allocation2 + $0x8f] sm:$0xff]
        %v398 = vld [vmem:[#allocation2 + $0xa7] sm:$0xff]
        %v399 = vld [vmem:[#allocation2 + $0xaf] sm:$0xff]
        %v400 = vld [vmem:[#allocation2 + $0xc7] sm:$0xff]
        %v401 = vld [vmem:[#allocation2 + $0xcf] sm:$0xff]
        %v402 = vld [vmem:[#allocation2 + $0xe7] sm:$0xff]
        %v403 = vld [vmem:[#allocation2 + $0xef] sm:$0xff]
        %v404 = vld [vmem:[#allocation2 + $0x107] sm:$0xff]
        %v405 = vld [vmem:[#allocation2 + $0x10f] sm:$0xff]
        %v406 = vld [vmem:[#allocation2 + $0x127] sm:$0xff]
        %v407 = vld [vmem:[#allocation2 + $0x12f] sm:$0xff]
        %v408 = vld [vmem:[#allocation2 + $0x147] sm:$0xff]
        %v409 = vld [vmem:[#allocation2 + $0x14f] sm:$0xff]
        %v410 = vld [vmem:[#allocation2 + $0x167] sm:$0xff]
        %v411 = vld [vmem:[#allocation2 + $0x16f] sm:$0xff]
        %v412 = vld [vmem:[#allocation2 + $0x187] sm:$0xff]
        %v413 = vld [vmem:[#allocation2 + $0x18f] sm:$0xff]
        %v414 = vld [vmem:[#allocation2 + $0x1a7] sm:$0xff]
        %v415 = vld [vmem:[#allocation2 + $0x1af] sm:$0xff]
        %v416 = vld [vmem:[#allocation2 + $0x1c7] sm:$0xff]
        %v417 = vld [vmem:[#allocation2 + $0x1cf] sm:$0xff]
        %v418 = vld [vmem:[#allocation2 + $0x1e7] sm:$0xff]
        %v419 = vld [vmem:[#allocation2 + $0x1ef] sm:$0xff]
        %v420 = vld [vmem:[#allocation2 + $0x207] sm:$0xff]
        %v421 = vld [vmem:[#allocation2 + $0x20f] sm:$0xff]
        %v422 = vld [vmem:[#allocation2 + $0x227] sm:$0xff]
        %v423 = vld [vmem:[#allocation2 + $0x22f] sm:$0xff]
        %v424 = vpack.c.bf16 %v388, %v388
        %v425 = vpack.c.bf16 %v389, %v389
        %v426 = vpack.c.bf16 %v390, %v390
        %v427 = vpack.c.bf16 %v391, %v391
        %v428 = vpack.c.bf16 %v392, %v392
        %v429 = vpack.c.bf16 %v393, %v393
        %v430 = vpack.c.bf16 %v394, %v394
        %v431 = vpack.c.bf16 %v395, %v395
        %v432 = vpack.c.bf16 %v396, %v396
        %v433 = vpack.c.bf16 %v397, %v397
        %v434 = vpack.c.bf16 %v398, %v398
        %v435 = vpack.c.bf16 %v399, %v399
        %v436 = vpack.c.bf16 %v400, %v400
        %v437 = vpack.c.bf16 %v401, %v401
        %v438 = vpack.c.bf16 %v402, %v402
        %v439 = vpack.c.bf16 %v403, %v403
        %v440 = vpack.c.bf16 %v404, %v404
        %v441 = vpack.c.bf16 %v405, %v405
        %v442 = vpack.c.bf16 %v406, %v406
        %v443 = vpack.c.bf16 %v407, %v407
        %v444 = vpack.c.bf16 %v408, %v408
        %v445 = vpack.c.bf16 %v409, %v409
        %v446 = vpack.c.bf16 %v410, %v410
        %v447 = vpack.c.bf16 %v411, %v411
        %v448 = vpack.c.bf16 %v412, %v412
        %v449 = vpack.c.bf16 %v413, %v413
        %v450 = vpack.c.bf16 %v414, %v414
        %v451 = vpack.c.bf16 %v415, %v415
        %v452 = vpack.c.bf16 %v416, %v416
        %v453 = vpack.c.bf16 %v417, %v417
        %v454 = vpack.c.bf16 %v418, %v418
        %v455 = vpack.c.bf16 %v419, %v419
        %v456 = vpack.c.bf16 %v420, %v420
        %v457 = vpack.c.bf16 %v421, %v421
        %v458 = vpack.c.bf16 %v422, %v422
        %v459 = vpack.c.bf16 %v423, %v423
        %v460 = vld [vmem:[#allocation2 + $0x8] sm:$0xff]
        %v461 = vld [vmem:[#allocation2 + $0x10] sm:$0xff]
        %v462 = vld [vmem:[#allocation2 + $0x28] sm:$0xff]
        %v463 = vld [vmem:[#allocation2 + $0x30] sm:$0xff]
        %v464 = vld [vmem:[#allocation2 + $0x48] sm:$0xff]
        %v465 = vld [vmem:[#allocation2 + $0x50] sm:$0xff]
        %v466 = vld [vmem:[#allocation2 + $0x68] sm:$0xff]
        %v467 = vld [vmem:[#allocation2 + $0x70] sm:$0xff]
        %v468 = vld [vmem:[#allocation2 + $0x88] sm:$0xff]
        %v469 = vld [vmem:[#allocation2 + $0x90] sm:$0xff]
        %v470 = vld [vmem:[#allocation2 + $0xa8] sm:$0xff]
        %v471 = vld [vmem:[#allocation2 + $0xb0] sm:$0xff]
        %v472 = vld [vmem:[#allocation2 + $0xc8] sm:$0xff]
        %v473 = vld [vmem:[#allocation2 + $0xd0] sm:$0xff]
        %v474 = vld [vmem:[#allocation2 + $0xe8] sm:$0xff]
        %v475 = vld [vmem:[#allocation2 + $0xf0] sm:$0xff]
        %v476 = vld [vmem:[#allocation2 + $0x108] sm:$0xff]
        %v477 = vld [vmem:[#allocation2 + $0x110] sm:$0xff]
        %v478 = vld [vmem:[#allocation2 + $0x128] sm:$0xff]
        %v479 = vld [vmem:[#allocation2 + $0x130] sm:$0xff]
        %v480 = vld [vmem:[#allocation2 + $0x148] sm:$0xff]
        %v481 = vld [vmem:[#allocation2 + $0x150] sm:$0xff]
        %v482 = vld [vmem:[#allocation2 + $0x168] sm:$0xff]
        %v483 = vld [vmem:[#allocation2 + $0x170] sm:$0xff]
        %v484 = vld [vmem:[#allocation2 + $0x188] sm:$0xff]
        %v485 = vld [vmem:[#allocation2 + $0x190] sm:$0xff]
        %v486 = vld [vmem:[#allocation2 + $0x1a8] sm:$0xff]
        %v487 = vld [vmem:[#allocation2 + $0x1b0] sm:$0xff]
        %v488 = vld [vmem:[#allocation2 + $0x1c8] sm:$0xff]
        %v489 = vld [vmem:[#allocation2 + $0x1d0] sm:$0xff]
        %v490 = vld [vmem:[#allocation2 + $0x1e8] sm:$0xff]
        %v491 = vld [vmem:[#allocation2 + $0x1f0] sm:$0xff]
        %v492 = vld [vmem:[#allocation2 + $0x208] sm:$0xff]
        %v493 = vld [vmem:[#allocation2 + $0x210] sm:$0xff]
        %v494 = vld [vmem:[#allocation2 + $0x228] sm:$0xff]
        %v495 = vld [vmem:[#allocation2 + $0x230] sm:$0xff]
        %v496 = vpack.c.bf16 %v460, %v460
        %v497 = vpack.c.bf16 %v461, %v461
        %v498 = vpack.c.bf16 %v462, %v462
        %v499 = vpack.c.bf16 %v463, %v463
        %v500 = vpack.c.bf16 %v464, %v464
        %v501 = vpack.c.bf16 %v465, %v465
        %v502 = vpack.c.bf16 %v466, %v466
        %v503 = vpack.c.bf16 %v467, %v467
        %v504 = vpack.c.bf16 %v468, %v468
        %v505 = vpack.c.bf16 %v469, %v469
        %v506 = vpack.c.bf16 %v470, %v470
        %v507 = vpack.c.bf16 %v471, %v471
        %v508 = vpack.c.bf16 %v472, %v472
        %v509 = vpack.c.bf16 %v473, %v473
        %v510 = vpack.c.bf16 %v474, %v474
        %v511 = vpack.c.bf16 %v475, %v475
        %v512 = vpack.c.bf16 %v476, %v476
        %v513 = vpack.c.bf16 %v477, %v477
        %v514 = vpack.c.bf16 %v478, %v478
        %v515 = vpack.c.bf16 %v479, %v479
        %v516 = vpack.c.bf16 %v480, %v480
        %v517 = vpack.c.bf16 %v481, %v481
        %v518 = vpack.c.bf16 %v482, %v482
        %v519 = vpack.c.bf16 %v483, %v483
        %v520 = vpack.c.bf16 %v484, %v484
        %v521 = vpack.c.bf16 %v485, %v485
        %v522 = vpack.c.bf16 %v486, %v486
        %v523 = vpack.c.bf16 %v487, %v487
        %v524 = vpack.c.bf16 %v488, %v488
        %v525 = vpack.c.bf16 %v489, %v489
        %v526 = vpack.c.bf16 %v490, %v490
        %v527 = vpack.c.bf16 %v491, %v491
        %v528 = vpack.c.bf16 %v492, %v492
        %v529 = vpack.c.bf16 %v493, %v493
        %v530 = vpack.c.bf16 %v494, %v494
        %v531 = vpack.c.bf16 %v495, %v495
        %v532 = vld [vmem:[#allocation2 + $0x9] sm:$0xff]
        %v533 = vld [vmem:[#allocation2 + $0x11] sm:$0xff]
        %v534 = vld [vmem:[#allocation2 + $0x29] sm:$0xff]
        %v535 = vld [vmem:[#allocation2 + $0x31] sm:$0xff]
        %v536 = vld [vmem:[#allocation2 + $0x49] sm:$0xff]
        %v537 = vld [vmem:[#allocation2 + $0x51] sm:$0xff]
        %v538 = vld [vmem:[#allocation2 + $0x69] sm:$0xff]
        %v539 = vld [vmem:[#allocation2 + $0x71] sm:$0xff]
        %v540 = vld [vmem:[#allocation2 + $0x89] sm:$0xff]
        %v541 = vld [vmem:[#allocation2 + $0x91] sm:$0xff]
        %v542 = vld [vmem:[#allocation2 + $0xa9] sm:$0xff]
        %v543 = vld [vmem:[#allocation2 + $0xb1] sm:$0xff]
        %v544 = vld [vmem:[#allocation2 + $0xc9] sm:$0xff]
        %v545 = vld [vmem:[#allocation2 + $0xd1] sm:$0xff]
        %v546 = vld [vmem:[#allocation2 + $0xe9] sm:$0xff]
        %v547 = vld [vmem:[#allocation2 + $0xf1] sm:$0xff]
        %v548 = vld [vmem:[#allocation2 + $0x109] sm:$0xff]
        %v549 = vld [vmem:[#allocation2 + $0x111] sm:$0xff]
        %v550 = vld [vmem:[#allocation2 + $0x129] sm:$0xff]
        %v551 = vld [vmem:[#allocation2 + $0x131] sm:$0xff]
        %v552 = vld [vmem:[#allocation2 + $0x149] sm:$0xff]
        %v553 = vld [vmem:[#allocation2 + $0x151] sm:$0xff]
        %v554 = vld [vmem:[#allocation2 + $0x169] sm:$0xff]
        %v555 = vld [vmem:[#allocation2 + $0x171] sm:$0xff]
        %v556 = vld [vmem:[#allocation2 + $0x189] sm:$0xff]
        %v557 = vld [vmem:[#allocation2 + $0x191] sm:$0xff]
        %v558 = vld [vmem:[#allocation2 + $0x1a9] sm:$0xff]
        %v559 = vld [vmem:[#allocation2 + $0x1b1] sm:$0xff]
        %v560 = vld [vmem:[#allocation2 + $0x1c9] sm:$0xff]
        %v561 = vld [vmem:[#allocation2 + $0x1d1] sm:$0xff]
        %v562 = vld [vmem:[#allocation2 + $0x1e9] sm:$0xff]
        %v563 = vld [vmem:[#allocation2 + $0x1f1] sm:$0xff]
        %v564 = vld [vmem:[#allocation2 + $0x209] sm:$0xff]
        %v565 = vld [vmem:[#allocation2 + $0x211] sm:$0xff]
        %v566 = vld [vmem:[#allocation2 + $0x229] sm:$0xff]
        %v567 = vld [vmem:[#allocation2 + $0x231] sm:$0xff]
        %v568 = vpack.c.bf16 %v532, %v532
        %v569 = vpack.c.bf16 %v533, %v533
        %v570 = vpack.c.bf16 %v534, %v534
        %v571 = vpack.c.bf16 %v535, %v535
        %v572 = vpack.c.bf16 %v536, %v536
        %v573 = vpack.c.bf16 %v537, %v537
        %v574 = vpack.c.bf16 %v538, %v538
        %v575 = vpack.c.bf16 %v539, %v539
        %v576 = vpack.c.bf16 %v540, %v540
        %v577 = vpack.c.bf16 %v541, %v541
        %v578 = vpack.c.bf16 %v542, %v542
        %v579 = vpack.c.bf16 %v543, %v543
        %v580 = vpack.c.bf16 %v544, %v544
        %v581 = vpack.c.bf16 %v545, %v545
        %v582 = vpack.c.bf16 %v546, %v546
        %v583 = vpack.c.bf16 %v547, %v547
        %v584 = vpack.c.bf16 %v548, %v548
        %v585 = vpack.c.bf16 %v549, %v549
        %v586 = vpack.c.bf16 %v550, %v550
        %v587 = vpack.c.bf16 %v551, %v551
        %v588 = vpack.c.bf16 %v552, %v552
        %v589 = vpack.c.bf16 %v553, %v553
        %v590 = vpack.c.bf16 %v554, %v554
        %v591 = vpack.c.bf16 %v555, %v555
        %v592 = vpack.c.bf16 %v556, %v556
        %v593 = vpack.c.bf16 %v557, %v557
        %v594 = vpack.c.bf16 %v558, %v558
        %v595 = vpack.c.bf16 %v559, %v559
        %v596 = vpack.c.bf16 %v560, %v560
        %v597 = vpack.c.bf16 %v561, %v561
        %v598 = vpack.c.bf16 %v562, %v562
        %v599 = vpack.c.bf16 %v563, %v563
        %v600 = vpack.c.bf16 %v564, %v564
        %v601 = vpack.c.bf16 %v565, %v565
        %v602 = vpack.c.bf16 %v566, %v566
        %v603 = vpack.c.bf16 %v567, %v567
        %v636 = vunpack.c.l.b16 %v424
        %v637 = vunpack.c.l.b16 %v425
        %v638 = vunpack.c.l.b16 %v426
        %v639 = vunpack.c.l.b16 %v427
        %v640 = vunpack.c.l.b16 %v428
        %v641 = vunpack.c.l.b16 %v429
        %v642 = vunpack.c.l.b16 %v430
        %v643 = vunpack.c.l.b16 %v431
        %v644 = vunpack.c.l.b16 %v432
        %v645 = vunpack.c.l.b16 %v433
        %v646 = vunpack.c.l.b16 %v434
        %v647 = vunpack.c.l.b16 %v435
        %v648 = vunpack.c.l.b16 %v436
        %v649 = vunpack.c.l.b16 %v437
        %v650 = vunpack.c.l.b16 %v438
        %v651 = vunpack.c.l.b16 %v439
        %v652 = vunpack.c.l.b16 %v440
        %v653 = vunpack.c.l.b16 %v441
        %v654 = vunpack.c.l.b16 %v442
        %v655 = vunpack.c.l.b16 %v443
        %v656 = vunpack.c.l.b16 %v444
        %v657 = vunpack.c.l.b16 %v445
        %v658 = vunpack.c.l.b16 %v446
        %v659 = vunpack.c.l.b16 %v447
        %v660 = vunpack.c.l.b16 %v448
        %v661 = vunpack.c.l.b16 %v449
        %v662 = vunpack.c.l.b16 %v450
        %v663 = vunpack.c.l.b16 %v451
        %v664 = vunpack.c.l.b16 %v452
        %v665 = vunpack.c.l.b16 %v453
        %v666 = vunpack.c.l.b16 %v454
        %v667 = vunpack.c.l.b16 %v455
        %v668 = vpack.c.b16 %v637, %v636
        %v669 = vpack.c.b16 %v639, %v638
        %v670 = vpack.c.b16 %v641, %v640
        %v671 = vpack.c.b16 %v643, %v642
        %v672 = vpack.c.b16 %v645, %v644
        %v673 = vpack.c.b16 %v647, %v646
        %v674 = vpack.c.b16 %v649, %v648
        %v675 = vpack.c.b16 %v651, %v650
        %v676 = vpack.c.b16 %v653, %v652
        %v677 = vpack.c.b16 %v655, %v654
        %v678 = vpack.c.b16 %v657, %v656
        %v679 = vpack.c.b16 %v659, %v658
        %v680 = vpack.c.b16 %v661, %v660
        %v681 = vpack.c.b16 %v663, %v662
        %v682 = vpack.c.b16 %v665, %v664
        %v683 = vpack.c.b16 %v667, %v666
        %v732 = vunpack.c.l.b16 %v496
        %v733 = vunpack.c.l.b16 %v497
        %v734 = vunpack.c.l.b16 %v498
        %v735 = vunpack.c.l.b16 %v499
        %v736 = vunpack.c.l.b16 %v500
        %v737 = vunpack.c.l.b16 %v501
        %v738 = vunpack.c.l.b16 %v502
        %v739 = vunpack.c.l.b16 %v503
        %v740 = vunpack.c.l.b16 %v504
        %v741 = vunpack.c.l.b16 %v505
        %v742 = vunpack.c.l.b16 %v506
        %v743 = vunpack.c.l.b16 %v507
        %v744 = vunpack.c.l.b16 %v508
        %v745 = vunpack.c.l.b16 %v509
        %v746 = vunpack.c.l.b16 %v510
        %v747 = vunpack.c.l.b16 %v511
        %v748 = vunpack.c.l.b16 %v512
        %v749 = vunpack.c.l.b16 %v513
        %v750 = vunpack.c.l.b16 %v514
        %v751 = vunpack.c.l.b16 %v515
        %v752 = vunpack.c.l.b16 %v516
        %v753 = vunpack.c.l.b16 %v517
        %v754 = vunpack.c.l.b16 %v518
        %v755 = vunpack.c.l.b16 %v519
        %v756 = vunpack.c.l.b16 %v520
        %v757 = vunpack.c.l.b16 %v521
        %v758 = vunpack.c.l.b16 %v522
        %v759 = vunpack.c.l.b16 %v523
        %v760 = vunpack.c.l.b16 %v524
        %v761 = vunpack.c.l.b16 %v525
        %v762 = vunpack.c.l.b16 %v526
        %v763 = vunpack.c.l.b16 %v527
        %v764 = vpack.c.b16 %v733, %v732
        %v765 = vpack.c.b16 %v735, %v734
        %v766 = vpack.c.b16 %v737, %v736
        %v767 = vpack.c.b16 %v739, %v738
        %v768 = vpack.c.b16 %v741, %v740
        %v769 = vpack.c.b16 %v743, %v742
        %v770 = vpack.c.b16 %v745, %v744
        %v771 = vpack.c.b16 %v747, %v746
        %v772 = vpack.c.b16 %v749, %v748
        %v773 = vpack.c.b16 %v751, %v750
        %v774 = vpack.c.b16 %v753, %v752
        %v775 = vpack.c.b16 %v755, %v754
        %v776 = vpack.c.b16 %v757, %v756
        %v777 = vpack.c.b16 %v759, %v758
        %v778 = vpack.c.b16 %v761, %v760
        %v779 = vpack.c.b16 %v763, %v762
        %v828 = vunpack.c.l.b16 %v568
        %v829 = vunpack.c.l.b16 %v569
        %v830 = vunpack.c.l.b16 %v570
        %v831 = vunpack.c.l.b16 %v571
        %v832 = vunpack.c.l.b16 %v572
        %v833 = vunpack.c.l.b16 %v573
        %v834 = vunpack.c.l.b16 %v574
        %v835 = vunpack.c.l.b16 %v575
        %v836 = vunpack.c.l.b16 %v576
        %v837 = vunpack.c.l.b16 %v577
        %v838 = vunpack.c.l.b16 %v578
        %v839 = vunpack.c.l.b16 %v579
        %v840 = vunpack.c.l.b16 %v580
        %v841 = vunpack.c.l.b16 %v581
        %v842 = vunpack.c.l.b16 %v582
        %v843 = vunpack.c.l.b16 %v583
        %v844 = vunpack.c.l.b16 %v584
        %v845 = vunpack.c.l.b16 %v585
        %v846 = vunpack.c.l.b16 %v586
        %v847 = vunpack.c.l.b16 %v587
        %v848 = vunpack.c.l.b16 %v588
        %v849 = vunpack.c.l.b16 %v589
        %v850 = vunpack.c.l.b16 %v590
        %v851 = vunpack.c.l.b16 %v591
        %v852 = vunpack.c.l.b16 %v592
        %v853 = vunpack.c.l.b16 %v593
        %v854 = vunpack.c.l.b16 %v594
        %v855 = vunpack.c.l.b16 %v595
        %v856 = vunpack.c.l.b16 %v596
        %v857 = vunpack.c.l.b16 %v597
        %v858 = vunpack.c.l.b16 %v598
        %v859 = vunpack.c.l.b16 %v599
        %v860 = vpack.c.b16 %v829, %v828
        %v861 = vpack.c.b16 %v831, %v830
        %v862 = vpack.c.b16 %v833, %v832
        %v863 = vpack.c.b16 %v835, %v834
        %v864 = vpack.c.b16 %v837, %v836
        %v865 = vpack.c.b16 %v839, %v838
        %v866 = vpack.c.b16 %v841, %v840
        %v867 = vpack.c.b16 %v843, %v842
        %v868 = vpack.c.b16 %v845, %v844
        %v869 = vpack.c.b16 %v847, %v846
        %v870 = vpack.c.b16 %v849, %v848
        %v871 = vpack.c.b16 %v851, %v850
        %v872 = vpack.c.b16 %v853, %v852
        %v873 = vpack.c.b16 %v855, %v854
        %v874 = vpack.c.b16 %v857, %v856
        %v875 = vpack.c.b16 %v859, %v858
        %v894 = vunpack.c.l.b16 %v456
        %v895 = vunpack.c.l.b16 %v457
        %v896 = vpack.c.b16 %v895, %v894
        %v900 = vunpack.c.l.b16 %v528
        %v901 = vunpack.c.l.b16 %v529
        %v902 = vpack.c.b16 %v901, %v900
        %v906 = vunpack.c.l.b16 %v600
        %v907 = vunpack.c.l.b16 %v601
        %v908 = vpack.c.b16 %v907, %v906
        %v912 = vunpack.c.l.b16 %v458
        %v913 = vunpack.c.l.b16 %v459
        %v914 = vpack.c.b16 %v913, %v912
        %v918 = vunpack.c.l.b16 %v530
        %v919 = vunpack.c.l.b16 %v531
        %v920 = vpack.c.b16 %v919, %v918
        %v924 = vunpack.c.l.b16 %v602
        %v925 = vunpack.c.l.b16 %v603
        %v926 = vpack.c.b16 %v925, %v924
        %v928 = vld [vmem:[#allocation6] sm:$0xf]
        %v929 = vld [vmem:[#allocation6 + $0x4] sm:$0xf]
        %v930 = vld [vmem:[#allocation6 + $0x8] sm:$0xf]
        %v931 = vld [vmem:[#allocation6 + $0xc] sm:$0xf]
        %v932 = vld [vmem:[#allocation6 + $0x10] sm:$0xf]
        %v933 = vld [vmem:[#allocation6 + $0x14] sm:$0xf]
        %v934 = vld [vmem:[#allocation6 + $0x18] sm:$0xf]
        %v935 = vld [vmem:[#allocation6 + $0x1c] sm:$0xf]
        %v936 = vld [vmem:[#allocation6 + $0x20] sm:$0xf]
        %v937 = vld [vmem:[#allocation6 + $0x24] sm:$0xf]
        %v938 = vld [vmem:[#allocation6 + $0x28] sm:$0xf]
        %v939 = vld [vmem:[#allocation6 + $0x2c] sm:$0xf]
        %v940 = vld [vmem:[#allocation6 + $0x30] sm:$0xf]
        %v941 = vld [vmem:[#allocation6 + $0x34] sm:$0xf]
        %v942 = vld [vmem:[#allocation6 + $0x38] sm:$0xf]
        %v943 = vld [vmem:[#allocation6 + $0x3c] sm:$0xf]
        %v944 = vld [vmem:[#allocation6 + $0x40] sm:$0xf]
        %v945 = vld [vmem:[#allocation6 + $0x44] sm:$0xf]
        %v946 = vld [vmem:[#allocation6 + $0x48] sm:$0xf]
        %v947 = vld [vmem:[#allocation6 + $0x4c] sm:$0xf]
        %v948 = vld [vmem:[#allocation6 + $0x50] sm:$0xf]
        %v949 = vld [vmem:[#allocation6 + $0x54] sm:$0xf]
        %v950 = vld [vmem:[#allocation6 + $0x58] sm:$0xf]
        %v951 = vld [vmem:[#allocation6 + $0x5c] sm:$0xf]
        %v952 = vld [vmem:[#allocation6 + $0x60] sm:$0xf]
        %v953 = vld [vmem:[#allocation6 + $0x64] sm:$0xf]
        %v954 = vld [vmem:[#allocation6 + $0x68] sm:$0xf]
        %v955 = vld [vmem:[#allocation6 + $0x6c] sm:$0xf]
        %v956 = vld [vmem:[#allocation6 + $0x70] sm:$0xf]
        %v957 = vld [vmem:[#allocation6 + $0x74] sm:$0xf]
        %v958 = vld [vmem:[#allocation6 + $0x78] sm:$0xf]
        %v959 = vld [vmem:[#allocation6 + $0x7c] sm:$0xf]
        %v960 = vld [vmem:[#allocation6 + $0x80] sm:$0xf]
        %v961 = vld [vmem:[#allocation6 + $0x84] sm:$0xf]
        %v962 = vld [vmem:[#allocation6 + $0x88] sm:$0xf]
        %v963 = vld [vmem:[#allocation6 + $0x8c] sm:$0xf]
        %v964 = vld [vmem:[#allocation6 + $0x90] sm:$0xf]
        %v965 = vld [vmem:[#allocation6 + $0x94] sm:$0xf]
        %v966 = vld [vmem:[#allocation6 + $0x98] sm:$0xf]
        %v967 = vld [vmem:[#allocation6 + $0x9c] sm:$0xf]
        %v968 = vld [vmem:[#allocation6 + $0xa0] sm:$0xf]
        %v969 = vld [vmem:[#allocation6 + $0xa4] sm:$0xf]
        %v970 = vld [vmem:[#allocation6 + $0xa8] sm:$0xf]
        %v971 = vld [vmem:[#allocation6 + $0xac] sm:$0xf]
        %v972 = vld [vmem:[#allocation6 + $0xb0] sm:$0xf]
        %v973 = vld [vmem:[#allocation6 + $0xb4] sm:$0xf]
        %v974 = vld [vmem:[#allocation6 + $0xb8] sm:$0xf]
        %v975 = vld [vmem:[#allocation6 + $0xbc] sm:$0xf]
        %v976 = vld [vmem:[#allocation6 + $0xc0] sm:$0xf]
        %v977 = vld [vmem:[#allocation6 + $0xc4] sm:$0xf]
        %v978 = vld [vmem:[#allocation6 + $0xc8] sm:$0xf]
        %v979 = vld [vmem:[#allocation6 + $0xcc] sm:$0xf]
        %v980 = vld [vmem:[#allocation6 + $0xd0] sm:$0xf]
        %v981 = vld [vmem:[#allocation6 + $0xd4] sm:$0xf]
        %v982 = vld [vmem:[#allocation6 + $0xd8] sm:$0xf]
        %v983 = vld [vmem:[#allocation6 + $0xdc] sm:$0xf]
        %v984 = vld [vmem:[#allocation6 + $0xe0] sm:$0xf]
        %v985 = vld [vmem:[#allocation6 + $0xe4] sm:$0xf]
        %v986 = vld [vmem:[#allocation6 + $0xe8] sm:$0xf]
        %v987 = vld [vmem:[#allocation6 + $0xec] sm:$0xf]
        %v988 = vld [vmem:[#allocation6 + $0xf0] sm:$0xf]
        %v989 = vld [vmem:[#allocation6 + $0xf4] sm:$0xf]
        %v990 = vld [vmem:[#allocation6 + $0xf8] sm:$0xf]
        %v991 = vld [vmem:[#allocation6 + $0xfc] sm:$0xf]
        %v992 = vld [vmem:[#allocation6 + $0x100] sm:$0xf]
        %v993 = vld [vmem:[#allocation6 + $0x104] sm:$0xf]
        %v994 = vld [vmem:[#allocation6 + $0x108] sm:$0xf]
        %v995 = vld [vmem:[#allocation6 + $0x10c] sm:$0xf]
        %v996 = vld [vmem:[#allocation6 + $0x110] sm:$0xf]
        %v997 = vld [vmem:[#allocation6 + $0x114] sm:$0xf]
        %v998 = vld [vmem:[#allocation6 + $0x118] sm:$0xf]
        %v999 = vld [vmem:[#allocation6 + $0x11c] sm:$0xf]
        %v1000 = vld [vmem:[#allocation6 + $0x120] sm:$0xf]
        %v1001 = vld [vmem:[#allocation6 + $0x124] sm:$0xf]
        %v1002 = vld [vmem:[#allocation6 + $0x128] sm:$0xf]
        %v1003 = vld [vmem:[#allocation6 + $0x12c] sm:$0xf]
        %v1004 = vld [vmem:[#allocation6 + $0x130] sm:$0xf]
        %v1005 = vld [vmem:[#allocation6 + $0x134] sm:$0xf]
        %v1006 = vld [vmem:[#allocation6 + $0x138] sm:$0xf]
        %v1007 = vld [vmem:[#allocation6 + $0x13c] sm:$0xf]
        %v1008 = vld [vmem:[#allocation6 + $0x140] sm:$0xf]
        %v1009 = vld [vmem:[#allocation6 + $0x144] sm:$0xf]
        %v1010 = vld [vmem:[#allocation6 + $0x148] sm:$0xf]
        %v1011 = vld [vmem:[#allocation6 + $0x14c] sm:$0xf]
        %v1012 = vld [vmem:[#allocation6 + $0x150] sm:$0xf]
        %v1013 = vld [vmem:[#allocation6 + $0x154] sm:$0xf]
        %v1014 = vld [vmem:[#allocation6 + $0x158] sm:$0xf]
        %v1015 = vld [vmem:[#allocation6 + $0x15c] sm:$0xf]
        %v1016 = vld [vmem:[#allocation6 + $0x160] sm:$0xf]
        %v1017 = vld [vmem:[#allocation6 + $0x164] sm:$0xf]
        %v1018 = vld [vmem:[#allocation6 + $0x168] sm:$0xf]
        %v1019 = vld [vmem:[#allocation6 + $0x16c] sm:$0xf]
        %v1020 = vld [vmem:[#allocation6 + $0x170] sm:$0xf]
        %v1021 = vld [vmem:[#allocation6 + $0x174] sm:$0xf]
        %v1022 = vld [vmem:[#allocation6 + $0x178] sm:$0xf]
        %v1023 = vld [vmem:[#allocation6 + $0x17c] sm:$0xf]
        %v1024 = vld [vmem:[#allocation6 + $0x180] sm:$0xf]
        %v1025 = vld [vmem:[#allocation6 + $0x184] sm:$0xf]
        %v1026 = vld [vmem:[#allocation6 + $0x188] sm:$0xf]
        %v1027 = vld [vmem:[#allocation6 + $0x18c] sm:$0xf]
        %v1028 = vld [vmem:[#allocation6 + $0x190] sm:$0xf]
        %v1029 = vld [vmem:[#allocation6 + $0x194] sm:$0xf]
        %v1030 = vld [vmem:[#allocation6 + $0x198] sm:$0xf]
        %v1031 = vld [vmem:[#allocation6 + $0x19c] sm:$0xf]
        %v1032 = vld [vmem:[#allocation6 + $0x1a0] sm:$0xf]
        %v1033 = vld [vmem:[#allocation6 + $0x1a4] sm:$0xf]
        %v1034 = vld [vmem:[#allocation6 + $0x1a8] sm:$0xf]
        %v1035 = vld [vmem:[#allocation6 + $0x1ac] sm:$0xf]
        %v1036 = vld [vmem:[#allocation6 + $0x1b0] sm:$0xf]
        %v1037 = vld [vmem:[#allocation6 + $0x1b4] sm:$0xf]
        %v1038 = vld [vmem:[#allocation6 + $0x1b8] sm:$0xf]
        %v1039 = vld [vmem:[#allocation6 + $0x1bc] sm:$0xf]
        %v1040 = vld [vmem:[#allocation6 + $0x1c0] sm:$0xf]
        %v1041 = vld [vmem:[#allocation6 + $0x1c4] sm:$0xf]
        %v1042 = vld [vmem:[#allocation6 + $0x1c8] sm:$0xf]
        %v1043 = vld [vmem:[#allocation6 + $0x1cc] sm:$0xf]
        %v1044 = vld [vmem:[#allocation6 + $0x1d0] sm:$0xf]
        %v1045 = vld [vmem:[#allocation6 + $0x1d4] sm:$0xf]
        %v1046 = vld [vmem:[#allocation6 + $0x1d8] sm:$0xf]
        %v1047 = vld [vmem:[#allocation6 + $0x1dc] sm:$0xf]
        %v1048 = vld [vmem:[#allocation6 + $0x1e0] sm:$0xf]
        %v1049 = vld [vmem:[#allocation6 + $0x1e4] sm:$0xf]
        %v1050 = vld [vmem:[#allocation6 + $0x1e8] sm:$0xf]
        %v1051 = vld [vmem:[#allocation6 + $0x1ec] sm:$0xf]
        %v1052 = vld [vmem:[#allocation6 + $0x1f0] sm:$0xf]
        %v1053 = vld [vmem:[#allocation6 + $0x1f4] sm:$0xf]
        %v1054 = vld [vmem:[#allocation6 + $0x1f8] sm:$0xf]
        %v1055 = vld [vmem:[#allocation6 + $0x1fc] sm:$0xf]
        %v1056 = vld [vmem:[#allocation6 + $0x200] sm:$0xf]
        %v1057 = vld [vmem:[#allocation6 + $0x204] sm:$0xf]
        %v1058 = vld [vmem:[#allocation6 + $0x208] sm:$0xf]
        %v1059 = vld [vmem:[#allocation6 + $0x20c] sm:$0xf]
        %v1060 = vld [vmem:[#allocation6 + $0x210] sm:$0xf]
        %v1061 = vld [vmem:[#allocation6 + $0x214] sm:$0xf]
        %v1062 = vld [vmem:[#allocation6 + $0x218] sm:$0xf]
        %v1063 = vld [vmem:[#allocation6 + $0x21c] sm:$0xf]
        %v1064 = vld [vmem:[#allocation6 + $0x220] sm:$0xf]
        %v1065 = vld [vmem:[#allocation6 + $0x224] sm:$0xf]
        %v1066 = vld [vmem:[#allocation6 + $0x228] sm:$0xf]
        %v1067 = vld [vmem:[#allocation6 + $0x22c] sm:$0xf]
        %v1068 = vld [vmem:[#allocation6 + $0x230] sm:$0xf]
        %v1069 = vld [vmem:[#allocation6 + $0x234] sm:$0xf]
        %v1070 = vld [vmem:[#allocation6 + $0x238] sm:$0xf]
        %v1071 = vld [vmem:[#allocation6 + $0x23c] sm:$0xf]
        %v1072 = vld [vmem:[%s2] sm:$0x1]
        %v1074 = vperm.slane %v1072, 0
        %v1220 = vunpack.c.l.b16 %v928
        %v1221 = vunpack.c.l.b16 %v929
        %v1222 = vunpack.c.l.b16 %v930
        %v1223 = vunpack.c.l.b16 %v931
        %v1224 = vunpack.c.l.b16 %v932
        %v1225 = vunpack.c.l.b16 %v933
        %v1226 = vunpack.c.l.b16 %v934
        %v1227 = vunpack.c.l.b16 %v935
        %v1228 = vunpack.c.l.b16 %v936
        %v1229 = vunpack.c.l.b16 %v937
        %v1230 = vunpack.c.l.b16 %v938
        %v1231 = vunpack.c.l.b16 %v939
        %v1232 = vunpack.c.l.b16 %v940
        %v1233 = vunpack.c.l.b16 %v941
        %v1234 = vunpack.c.l.b16 %v942
        %v1235 = vunpack.c.l.b16 %v943
        %v1236 = vunpack.c.l.b16 %v944
        %v1237 = vunpack.c.l.b16 %v945
        %v1238 = vunpack.c.l.b16 %v946
        %v1239 = vunpack.c.l.b16 %v947
        %v1240 = vunpack.c.l.b16 %v948
        %v1241 = vunpack.c.l.b16 %v949
        %v1242 = vunpack.c.l.b16 %v950
        %v1243 = vunpack.c.l.b16 %v951
        %v1244 = vunpack.c.l.b16 %v952
        %v1245 = vunpack.c.l.b16 %v953
        %v1246 = vunpack.c.l.b16 %v954
        %v1247 = vunpack.c.l.b16 %v955
        %v1248 = vunpack.c.l.b16 %v956
        %v1249 = vunpack.c.l.b16 %v957
        %v1250 = vunpack.c.l.b16 %v958
        %v1251 = vunpack.c.l.b16 %v959
        %v1252 = vunpack.c.l.b16 %v960
        %v1253 = vunpack.c.l.b16 %v961
        %v1254 = vunpack.c.l.b16 %v962
        %v1255 = vunpack.c.l.b16 %v963
        %v1256 = vunpack.c.l.b16 %v964
        %v1257 = vunpack.c.l.b16 %v965
        %v1258 = vunpack.c.l.b16 %v966
        %v1259 = vunpack.c.l.b16 %v967
        %v1260 = vunpack.c.l.b16 %v968
        %v1261 = vunpack.c.l.b16 %v969
        %v1262 = vunpack.c.l.b16 %v970
        %v1263 = vunpack.c.l.b16 %v971
        %v1264 = vunpack.c.l.b16 %v972
        %v1265 = vunpack.c.l.b16 %v973
        %v1266 = vunpack.c.l.b16 %v974
        %v1267 = vunpack.c.l.b16 %v975
        %v1268 = vunpack.c.l.b16 %v976
        %v1269 = vunpack.c.l.b16 %v977
        %v1270 = vunpack.c.l.b16 %v978
        %v1271 = vunpack.c.l.b16 %v979
        %v1272 = vunpack.c.l.b16 %v980
        %v1273 = vunpack.c.l.b16 %v981
        %v1274 = vunpack.c.l.b16 %v982
        %v1275 = vunpack.c.l.b16 %v983
        %v1276 = vunpack.c.l.b16 %v984
        %v1277 = vunpack.c.l.b16 %v985
        %v1278 = vunpack.c.l.b16 %v986
        %v1279 = vunpack.c.l.b16 %v987
        %v1280 = vunpack.c.l.b16 %v988
        %v1281 = vunpack.c.l.b16 %v989
        %v1282 = vunpack.c.l.b16 %v990
        %v1283 = vunpack.c.l.b16 %v991
        %v1284 = vunpack.c.l.b16 %v992
        %v1285 = vunpack.c.l.b16 %v993
        %v1286 = vunpack.c.l.b16 %v994
        %v1287 = vunpack.c.l.b16 %v995
        %v1288 = vunpack.c.l.b16 %v996
        %v1289 = vunpack.c.l.b16 %v997
        %v1290 = vunpack.c.l.b16 %v998
        %v1291 = vunpack.c.l.b16 %v999
        %v1292 = vunpack.c.l.b16 %v1000
        %v1293 = vunpack.c.l.b16 %v1001
        %v1294 = vunpack.c.l.b16 %v1002
        %v1295 = vunpack.c.l.b16 %v1003
        %v1296 = vunpack.c.l.b16 %v1004
        %v1297 = vunpack.c.l.b16 %v1005
        %v1298 = vunpack.c.l.b16 %v1006
        %v1299 = vunpack.c.l.b16 %v1007
        %v1300 = vunpack.c.l.b16 %v1008
        %v1301 = vunpack.c.l.b16 %v1009
        %v1302 = vunpack.c.l.b16 %v1010
        %v1303 = vunpack.c.l.b16 %v1011
        %v1304 = vunpack.c.l.b16 %v1012
        %v1305 = vunpack.c.l.b16 %v1013
        %v1306 = vunpack.c.l.b16 %v1014
        %v1307 = vunpack.c.l.b16 %v1015
        %v1308 = vunpack.c.l.b16 %v1016
        %v1309 = vunpack.c.l.b16 %v1017
        %v1310 = vunpack.c.l.b16 %v1018
        %v1311 = vunpack.c.l.b16 %v1019
        %v1312 = vunpack.c.l.b16 %v1020
        %v1313 = vunpack.c.l.b16 %v1021
        %v1314 = vunpack.c.l.b16 %v1022
        %v1315 = vunpack.c.l.b16 %v1023
        %v1316 = vunpack.c.l.b16 %v1024
        %v1317 = vunpack.c.l.b16 %v1025
        %v1318 = vunpack.c.l.b16 %v1026
        %v1319 = vunpack.c.l.b16 %v1027
        %v1320 = vunpack.c.l.b16 %v1028
        %v1321 = vunpack.c.l.b16 %v1029
        %v1322 = vunpack.c.l.b16 %v1030
        %v1323 = vunpack.c.l.b16 %v1031
        %v1324 = vunpack.c.l.b16 %v1032
        %v1325 = vunpack.c.l.b16 %v1033
        %v1326 = vunpack.c.l.b16 %v1034
        %v1327 = vunpack.c.l.b16 %v1035
        %v1328 = vunpack.c.l.b16 %v1036
        %v1329 = vunpack.c.l.b16 %v1037
        %v1330 = vunpack.c.l.b16 %v1038
        %v1331 = vunpack.c.l.b16 %v1039
        %v1332 = vunpack.c.l.b16 %v1040
        %v1333 = vunpack.c.l.b16 %v1041
        %v1334 = vunpack.c.l.b16 %v1042
        %v1335 = vunpack.c.l.b16 %v1043
        %v1336 = vunpack.c.l.b16 %v1044
        %v1337 = vunpack.c.l.b16 %v1045
        %v1338 = vunpack.c.l.b16 %v1046
        %v1339 = vunpack.c.l.b16 %v1047
        %v1340 = vunpack.c.l.b16 %v1048
        %v1341 = vunpack.c.l.b16 %v1049
        %v1342 = vunpack.c.l.b16 %v1050
        %v1343 = vunpack.c.l.b16 %v1051
        %v1344 = vunpack.c.l.b16 %v1052
        %v1345 = vunpack.c.l.b16 %v1053
        %v1346 = vunpack.c.l.b16 %v1054
        %v1347 = vunpack.c.l.b16 %v1055
        %v1348 = vunpack.c.l.b16 %v1056
        %v1349 = vunpack.c.l.b16 %v1057
        %v1350 = vunpack.c.l.b16 %v1058
        %v1351 = vunpack.c.l.b16 %v1059
        %v1352 = vunpack.c.l.b16 %v1060
        %v1353 = vunpack.c.l.b16 %v1061
        %v1354 = vunpack.c.l.b16 %v1062
        %v1355 = vunpack.c.l.b16 %v1063
        %v1356 = vunpack.c.l.b16 %v1064
        %v1357 = vunpack.c.l.b16 %v1065
        %v1358 = vunpack.c.l.b16 %v1066
        %v1359 = vunpack.c.l.b16 %v1067
        %v1360 = vunpack.c.l.b16 %v1068
        %v1361 = vunpack.c.l.b16 %v1069
        %v1362 = vunpack.c.l.b16 %v1070
        %v1363 = vunpack.c.l.b16 %v1071
        %v1364 = vpack.c.b16 %v1221, %v1220
        %v1365 = vpack.c.b16 %v1223, %v1222
        %v1366 = vpack.c.b16 %v1225, %v1224
        %v1367 = vpack.c.b16 %v1227, %v1226
        %v1368 = vpack.c.b16 %v1229, %v1228
        %v1369 = vpack.c.b16 %v1231, %v1230
        %v1370 = vpack.c.b16 %v1233, %v1232
        %v1371 = vpack.c.b16 %v1235, %v1234
        %v1372 = vpack.c.b16 %v1237, %v1236
        %v1373 = vpack.c.b16 %v1239, %v1238
        %v1374 = vpack.c.b16 %v1241, %v1240
        %v1375 = vpack.c.b16 %v1243, %v1242
        %v1376 = vpack.c.b16 %v1245, %v1244
        %v1377 = vpack.c.b16 %v1247, %v1246
        %v1378 = vpack.c.b16 %v1249, %v1248
        %v1379 = vpack.c.b16 %v1251, %v1250
        %v1380 = vpack.c.b16 %v1253, %v1252
        %v1381 = vpack.c.b16 %v1255, %v1254
        %v1382 = vpack.c.b16 %v1257, %v1256
        %v1383 = vpack.c.b16 %v1259, %v1258
        %v1384 = vpack.c.b16 %v1261, %v1260
        %v1385 = vpack.c.b16 %v1263, %v1262
        %v1386 = vpack.c.b16 %v1265, %v1264
        %v1387 = vpack.c.b16 %v1267, %v1266
        %v1388 = vpack.c.b16 %v1269, %v1268
        %v1389 = vpack.c.b16 %v1271, %v1270
        %v1390 = vpack.c.b16 %v1273, %v1272
        %v1391 = vpack.c.b16 %v1275, %v1274
        %v1392 = vpack.c.b16 %v1277, %v1276
        %v1393 = vpack.c.b16 %v1279, %v1278
        %v1394 = vpack.c.b16 %v1281, %v1280
        %v1395 = vpack.c.b16 %v1283, %v1282
        %v1396 = vpack.c.b16 %v1285, %v1284
        %v1397 = vpack.c.b16 %v1287, %v1286
        %v1398 = vpack.c.b16 %v1289, %v1288
        %v1399 = vpack.c.b16 %v1291, %v1290
        %v1400 = vpack.c.b16 %v1293, %v1292
        %v1401 = vpack.c.b16 %v1295, %v1294
        %v1402 = vpack.c.b16 %v1297, %v1296
        %v1403 = vpack.c.b16 %v1299, %v1298
        %v1404 = vpack.c.b16 %v1301, %v1300
        %v1405 = vpack.c.b16 %v1303, %v1302
        %v1406 = vpack.c.b16 %v1305, %v1304
        %v1407 = vpack.c.b16 %v1307, %v1306
        %v1408 = vpack.c.b16 %v1309, %v1308
        %v1409 = vpack.c.b16 %v1311, %v1310
        %v1410 = vpack.c.b16 %v1313, %v1312
        %v1411 = vpack.c.b16 %v1315, %v1314
        %v1412 = vpack.c.b16 %v1317, %v1316
        %v1413 = vpack.c.b16 %v1319, %v1318
        %v1414 = vpack.c.b16 %v1321, %v1320
        %v1415 = vpack.c.b16 %v1323, %v1322
        %v1416 = vpack.c.b16 %v1325, %v1324
        %v1417 = vpack.c.b16 %v1327, %v1326
        %v1418 = vpack.c.b16 %v1329, %v1328
        %v1419 = vpack.c.b16 %v1331, %v1330
        %v1420 = vpack.c.b16 %v1333, %v1332
        %v1421 = vpack.c.b16 %v1335, %v1334
        %v1422 = vpack.c.b16 %v1337, %v1336
        %v1423 = vpack.c.b16 %v1339, %v1338
        %v1424 = vpack.c.b16 %v1341, %v1340
        %v1425 = vpack.c.b16 %v1343, %v1342
        %v1426 = vpack.c.b16 %v1345, %v1344
        %v1427 = vpack.c.b16 %v1347, %v1346
        %v1428 = vpack.c.b16 %v1349, %v1348
        %v1429 = vpack.c.b16 %v1351, %v1350
        %v1430 = vpack.c.b16 %v1353, %v1352
        %v1431 = vpack.c.b16 %v1355, %v1354
        %v1432 = vpack.c.b16 %v1357, %v1356
        %v1433 = vpack.c.b16 %v1359, %v1358
        %v1434 = vpack.c.b16 %v1361, %v1360
        %v1435 = vpack.c.b16 %v1363, %v1362
        %1508 = vmatpush.bf16.msra.mxu0 %v1371
        %1509 = vmatpush.bf16.msra.mxu0 %v1370
        %1510 = vmatpush.bf16.msra.mxu0 %v1369
        %1511 = vmatpush.bf16.msra.mxu0 %v1368
        %1512 = vmatpush.bf16.msra.mxu0 %v1367
        %1513 = vmatpush.bf16.msra.mxu0 %v1366
        %1514 = vmatpush.bf16.msra.mxu0 %v1365
        %1515 = vmatpush.bf16.msra.mxu0 %v1364
        %1516 = vmatmul.bf16.gmra.mxu0 %v668
        %v1517 = vpop.f32.mrf.mxu0
        %v1518 = vadd.f32 %v1074, %v1517
        %v1519 = vpop.f32.mrf.mxu0
        %v1520 = vadd.f32 %v1074, %v1519
        %1521 = vmatmul.bf16.gmra.mxu0 %v669
        %v1522 = vpop.f32.mrf.mxu0
        %v1523 = vadd.f32 %v1074, %v1522
        %v1524 = vpop.f32.mrf.mxu0
        %v1525 = vadd.f32 %v1074, %v1524
        %1526 = vmatmul.bf16.gmra.mxu0 %v670
        %v1527 = vpop.f32.mrf.mxu0
        %v1528 = vadd.f32 %v1074, %v1527
        %v1529 = vpop.f32.mrf.mxu0
        %v1530 = vadd.f32 %v1074, %v1529
        %1531 = vmatmul.bf16.gmra.mxu0 %v671
        %v1532 = vpop.f32.mrf.mxu0
        %v1533 = vadd.f32 %v1074, %v1532
        %v1534 = vpop.f32.mrf.mxu0
        %v1535 = vadd.f32 %v1074, %v1534
        %1536 = vmatmul.bf16.gmra.mxu0 %v672
        %v1537 = vpop.f32.mrf.mxu0
        %v1538 = vadd.f32 %v1074, %v1537
        %v1539 = vpop.f32.mrf.mxu0
        %v1540 = vadd.f32 %v1074, %v1539
        %1541 = vmatmul.bf16.gmra.mxu0 %v673
        %v1542 = vpop.f32.mrf.mxu0
        %v1543 = vadd.f32 %v1074, %v1542
        %v1544 = vpop.f32.mrf.mxu0
        %v1545 = vadd.f32 %v1074, %v1544
        %1546 = vmatmul.bf16.gmra.mxu0 %v674
        %v1547 = vpop.f32.mrf.mxu0
        %v1548 = vadd.f32 %v1074, %v1547
        %v1549 = vpop.f32.mrf.mxu0
        %v1550 = vadd.f32 %v1074, %v1549
        %1551 = vmatmul.bf16.gmra.mxu0 %v675
        %v1552 = vpop.f32.mrf.mxu0
        %v1553 = vadd.f32 %v1074, %v1552
        %v1554 = vpop.f32.mrf.mxu0
        %v1555 = vadd.f32 %v1074, %v1554
        %1556 = vmatmul.bf16.gmra.mxu0 %v676
        %v1557 = vpop.f32.mrf.mxu0
        %v1558 = vadd.f32 %v1074, %v1557
        %v1559 = vpop.f32.mrf.mxu0
        %v1560 = vadd.f32 %v1074, %v1559
        %1561 = vmatmul.bf16.gmra.mxu0 %v677
        %v1562 = vpop.f32.mrf.mxu0
        %v1563 = vadd.f32 %v1074, %v1562
        %v1564 = vpop.f32.mrf.mxu0
        %v1565 = vadd.f32 %v1074, %v1564
        %1566 = vmatmul.bf16.gmra.mxu0 %v678
        %v1567 = vpop.f32.mrf.mxu0
        %v1568 = vadd.f32 %v1074, %v1567
        %v1569 = vpop.f32.mrf.mxu0
        %v1570 = vadd.f32 %v1074, %v1569
        %1571 = vmatmul.bf16.gmra.mxu0 %v679
        %v1572 = vpop.f32.mrf.mxu0
        %v1573 = vadd.f32 %v1074, %v1572
        %v1574 = vpop.f32.mrf.mxu0
        %v1575 = vadd.f32 %v1074, %v1574
        %1576 = vmatmul.bf16.gmra.mxu0 %v680
        %v1577 = vpop.f32.mrf.mxu0
        %v1578 = vadd.f32 %v1074, %v1577
        %v1579 = vpop.f32.mrf.mxu0
        %v1580 = vadd.f32 %v1074, %v1579
        %1581 = vmatmul.bf16.gmra.mxu0 %v681
        %v1582 = vpop.f32.mrf.mxu0
        %v1583 = vadd.f32 %v1074, %v1582
        %v1584 = vpop.f32.mrf.mxu0
        %v1585 = vadd.f32 %v1074, %v1584
        %1586 = vmatmul.bf16.gmra.mxu0 %v682
        %v1587 = vpop.f32.mrf.mxu0
        %v1588 = vadd.f32 %v1074, %v1587
        %v1589 = vpop.f32.mrf.mxu0
        %v1590 = vadd.f32 %v1074, %v1589
        %1591 = vmatmul.bf16.gmra.mxu0 %v683
        %v1592 = vpop.f32.mrf.mxu0
        %v1593 = vadd.f32 %v1074, %v1592
        %v1594 = vpop.f32.mrf.mxu0
        %v1595 = vadd.f32 %v1074, %v1594
        %1596 = vdwg.mxu0
        %1597 = vmatpush.bf16.msra.mxu0 %v1379
        %1598 = vmatpush.bf16.msra.mxu0 %v1378
        %1599 = vmatpush.bf16.msra.mxu0 %v1377
        %1600 = vmatpush.bf16.msra.mxu0 %v1376
        %1601 = vmatpush.bf16.msra.mxu0 %v1375
        %1602 = vmatpush.bf16.msra.mxu0 %v1374
        %1603 = vmatpush.bf16.msra.mxu0 %v1373
        %1604 = vmatpush.bf16.msra.mxu0 %v1372
        %1605 = vmatmul.bf16.gmra.mxu0 %v764
        %v1606 = vpop.f32.mrf.mxu0
        %v1607 = vadd.f32 %v1518, %v1606
        %v1608 = vpop.f32.mrf.mxu0
        %v1609 = vadd.f32 %v1520, %v1608
        %1610 = vmatmul.bf16.gmra.mxu0 %v765
        %v1611 = vpop.f32.mrf.mxu0
        %v1612 = vadd.f32 %v1523, %v1611
        %v1613 = vpop.f32.mrf.mxu0
        %v1614 = vadd.f32 %v1525, %v1613
        %1615 = vmatmul.bf16.gmra.mxu0 %v766
        %v1616 = vpop.f32.mrf.mxu0
        %v1617 = vadd.f32 %v1528, %v1616
        %v1618 = vpop.f32.mrf.mxu0
        %v1619 = vadd.f32 %v1530, %v1618
        %1620 = vmatmul.bf16.gmra.mxu0 %v767
        %v1621 = vpop.f32.mrf.mxu0
        %v1622 = vadd.f32 %v1533, %v1621
        %v1623 = vpop.f32.mrf.mxu0
        %v1624 = vadd.f32 %v1535, %v1623
        %1625 = vmatmul.bf16.gmra.mxu0 %v768
        %v1626 = vpop.f32.mrf.mxu0
        %v1627 = vadd.f32 %v1538, %v1626
        %v1628 = vpop.f32.mrf.mxu0
        %v1629 = vadd.f32 %v1540, %v1628
        %1630 = vmatmul.bf16.gmra.mxu0 %v769
        %v1631 = vpop.f32.mrf.mxu0
        %v1632 = vadd.f32 %v1543, %v1631
        %v1633 = vpop.f32.mrf.mxu0
        %v1634 = vadd.f32 %v1545, %v1633
        %1635 = vmatmul.bf16.gmra.mxu0 %v770
        %v1636 = vpop.f32.mrf.mxu0
        %v1637 = vadd.f32 %v1548, %v1636
        %v1638 = vpop.f32.mrf.mxu0
        %v1639 = vadd.f32 %v1550, %v1638
        %1640 = vmatmul.bf16.gmra.mxu0 %v771
        %v1641 = vpop.f32.mrf.mxu0
        %v1642 = vadd.f32 %v1553, %v1641
        %v1643 = vpop.f32.mrf.mxu0
        %v1644 = vadd.f32 %v1555, %v1643
        %1645 = vmatmul.bf16.gmra.mxu0 %v772
        %v1646 = vpop.f32.mrf.mxu0
        %v1647 = vadd.f32 %v1558, %v1646
        %v1648 = vpop.f32.mrf.mxu0
        %v1649 = vadd.f32 %v1560, %v1648
        %1650 = vmatmul.bf16.gmra.mxu0 %v773
        %v1651 = vpop.f32.mrf.mxu0
        %v1652 = vadd.f32 %v1563, %v1651
        %v1653 = vpop.f32.mrf.mxu0
        %v1654 = vadd.f32 %v1565, %v1653
        %1655 = vmatmul.bf16.gmra.mxu0 %v774
        %v1656 = vpop.f32.mrf.mxu0
        %v1657 = vadd.f32 %v1568, %v1656
        %v1658 = vpop.f32.mrf.mxu0
        %v1659 = vadd.f32 %v1570, %v1658
        %1660 = vmatmul.bf16.gmra.mxu0 %v775
        %v1661 = vpop.f32.mrf.mxu0
        %v1662 = vadd.f32 %v1573, %v1661
        %v1663 = vpop.f32.mrf.mxu0
        %v1664 = vadd.f32 %v1575, %v1663
        %1665 = vmatmul.bf16.gmra.mxu0 %v776
        %v1666 = vpop.f32.mrf.mxu0
        %v1667 = vadd.f32 %v1578, %v1666
        %v1668 = vpop.f32.mrf.mxu0
        %v1669 = vadd.f32 %v1580, %v1668
        %1670 = vmatmul.bf16.gmra.mxu0 %v777
        %v1671 = vpop.f32.mrf.mxu0
        %v1672 = vadd.f32 %v1583, %v1671
        %v1673 = vpop.f32.mrf.mxu0
        %v1674 = vadd.f32 %v1585, %v1673
        %1675 = vmatmul.bf16.gmra.mxu0 %v778
        %v1676 = vpop.f32.mrf.mxu0
        %v1677 = vadd.f32 %v1588, %v1676
        %v1678 = vpop.f32.mrf.mxu0
        %v1679 = vadd.f32 %v1590, %v1678
        %1680 = vmatmul.bf16.gmra.mxu0 %v779
        %v1681 = vpop.f32.mrf.mxu0
        %v1682 = vadd.f32 %v1593, %v1681
        %v1683 = vpop.f32.mrf.mxu0
        %v1684 = vadd.f32 %v1595, %v1683
        %1685 = vdwg.mxu0
        %1686 = vmatpush.bf16.msra.mxu0 %v1387
        %1687 = vmatpush.bf16.msra.mxu0 %v1386
        %1688 = vmatpush.bf16.msra.mxu0 %v1385
        %1689 = vmatpush.bf16.msra.mxu0 %v1384
        %1690 = vmatpush.bf16.msra.mxu0 %v1383
        %1691 = vmatpush.bf16.msra.mxu0 %v1382
        %1692 = vmatpush.bf16.msra.mxu0 %v1381
        %1693 = vmatpush.bf16.msra.mxu0 %v1380
        %1694 = vmatmul.bf16.gmra.mxu0 %v860
        %v1695 = vpop.f32.mrf.mxu0
        %v1696 = vadd.f32 %v1607, %v1695
        %v1697 = vpop.f32.mrf.mxu0
        %v1698 = vadd.f32 %v1609, %v1697
        %1699 = vmatmul.bf16.gmra.mxu0 %v861
        %v1700 = vpop.f32.mrf.mxu0
        %v1701 = vadd.f32 %v1612, %v1700
        %v1702 = vpop.f32.mrf.mxu0
        %v1703 = vadd.f32 %v1614, %v1702
        %1704 = vmatmul.bf16.gmra.mxu0 %v862
        %v1705 = vpop.f32.mrf.mxu0
        %v1706 = vadd.f32 %v1617, %v1705
        %v1707 = vpop.f32.mrf.mxu0
        %v1708 = vadd.f32 %v1619, %v1707
        %1709 = vmatmul.bf16.gmra.mxu0 %v863
        %v1710 = vpop.f32.mrf.mxu0
        %v1711 = vadd.f32 %v1622, %v1710
        %v1712 = vpop.f32.mrf.mxu0
        %v1713 = vadd.f32 %v1624, %v1712
        %1714 = vmatmul.bf16.gmra.mxu0 %v864
        %v1715 = vpop.f32.mrf.mxu0
        %v1716 = vadd.f32 %v1627, %v1715
        %v1717 = vpop.f32.mrf.mxu0
        %v1718 = vadd.f32 %v1629, %v1717
        %1719 = vmatmul.bf16.gmra.mxu0 %v865
        %v1720 = vpop.f32.mrf.mxu0
        %v1721 = vadd.f32 %v1632, %v1720
        %v1722 = vpop.f32.mrf.mxu0
        %v1723 = vadd.f32 %v1634, %v1722
        %1724 = vmatmul.bf16.gmra.mxu0 %v866
        %v1725 = vpop.f32.mrf.mxu0
        %v1726 = vadd.f32 %v1637, %v1725
        %v1727 = vpop.f32.mrf.mxu0
        %v1728 = vadd.f32 %v1639, %v1727
        %1729 = vmatmul.bf16.gmra.mxu0 %v867
        %v1730 = vpop.f32.mrf.mxu0
        %v1731 = vadd.f32 %v1642, %v1730
        %v1732 = vpop.f32.mrf.mxu0
        %v1733 = vadd.f32 %v1644, %v1732
        %1734 = vmatmul.bf16.gmra.mxu0 %v868
        %v1735 = vpop.f32.mrf.mxu0
        %v1736 = vadd.f32 %v1647, %v1735
        %v1737 = vpop.f32.mrf.mxu0
        %v1738 = vadd.f32 %v1649, %v1737
        %1739 = vmatmul.bf16.gmra.mxu0 %v869
        %v1740 = vpop.f32.mrf.mxu0
        %v1741 = vadd.f32 %v1652, %v1740
        %v1742 = vpop.f32.mrf.mxu0
        %v1743 = vadd.f32 %v1654, %v1742
        %1744 = vmatmul.bf16.gmra.mxu0 %v870
        %v1745 = vpop.f32.mrf.mxu0
        %v1746 = vadd.f32 %v1657, %v1745
        %v1747 = vpop.f32.mrf.mxu0
        %v1748 = vadd.f32 %v1659, %v1747
        %1749 = vmatmul.bf16.gmra.mxu0 %v871
        %v1750 = vpop.f32.mrf.mxu0
        %v1751 = vadd.f32 %v1662, %v1750
        %v1752 = vpop.f32.mrf.mxu0
        %v1753 = vadd.f32 %v1664, %v1752
        %1754 = vmatmul.bf16.gmra.mxu0 %v872
        %v1755 = vpop.f32.mrf.mxu0
        %v1756 = vadd.f32 %v1667, %v1755
        %v1757 = vpop.f32.mrf.mxu0
        %v1758 = vadd.f32 %v1669, %v1757
        %1759 = vmatmul.bf16.gmra.mxu0 %v873
        %v1760 = vpop.f32.mrf.mxu0
        %v1761 = vadd.f32 %v1672, %v1760
        %v1762 = vpop.f32.mrf.mxu0
        %v1763 = vadd.f32 %v1674, %v1762
        %1764 = vmatmul.bf16.gmra.mxu0 %v874
        %v1765 = vpop.f32.mrf.mxu0
        %v1766 = vadd.f32 %v1677, %v1765
        %v1767 = vpop.f32.mrf.mxu0
        %v1768 = vadd.f32 %v1679, %v1767
        %1769 = vmatmul.bf16.gmra.mxu0 %v875
        %v1770 = vpop.f32.mrf.mxu0
        %v1771 = vadd.f32 %v1682, %v1770
        %v1772 = vpop.f32.mrf.mxu0
        %v1773 = vadd.f32 %v1684, %v1772
        %1774 = vdwg.mxu0
        %1775 = vmatpush.bf16.msra.mxu0 %v1395
        %1776 = vmatpush.bf16.msra.mxu0 %v1394
        %1777 = vmatpush.bf16.msra.mxu0 %v1393
        %1778 = vmatpush.bf16.msra.mxu0 %v1392
        %1779 = vmatpush.bf16.msra.mxu0 %v1391
        %1780 = vmatpush.bf16.msra.mxu0 %v1390
        %1781 = vmatpush.bf16.msra.mxu0 %v1389
        %1782 = vmatpush.bf16.msra.mxu0 %v1388
        %1783 = vmatmul.bf16.gmra.mxu0 %v669
        %v1784 = vpop.f32.mrf.mxu0
        %v1785 = vadd.f32 %v1696, %v1784
        %v1786 = vpop.f32.mrf.mxu0
        %v1787 = vadd.f32 %v1698, %v1786
        %1788 = vmatmul.bf16.gmra.mxu0 %v670
        %v1789 = vpop.f32.mrf.mxu0
        %v1790 = vadd.f32 %v1701, %v1789
        %v1791 = vpop.f32.mrf.mxu0
        %v1792 = vadd.f32 %v1703, %v1791
        %1793 = vmatmul.bf16.gmra.mxu0 %v671
        %v1794 = vpop.f32.mrf.mxu0
        %v1795 = vadd.f32 %v1706, %v1794
        %v1796 = vpop.f32.mrf.mxu0
        %v1797 = vadd.f32 %v1708, %v1796
        %1798 = vmatmul.bf16.gmra.mxu0 %v672
        %v1799 = vpop.f32.mrf.mxu0
        %v1800 = vadd.f32 %v1711, %v1799
        %v1801 = vpop.f32.mrf.mxu0
        %v1802 = vadd.f32 %v1713, %v1801
        %1803 = vmatmul.bf16.gmra.mxu0 %v673
        %v1804 = vpop.f32.mrf.mxu0
        %v1805 = vadd.f32 %v1716, %v1804
        %v1806 = vpop.f32.mrf.mxu0
        %v1807 = vadd.f32 %v1718, %v1806
        %1808 = vmatmul.bf16.gmra.mxu0 %v674
        %v1809 = vpop.f32.mrf.mxu0
        %v1810 = vadd.f32 %v1721, %v1809
        %v1811 = vpop.f32.mrf.mxu0
        %v1812 = vadd.f32 %v1723, %v1811
        %1813 = vmatmul.bf16.gmra.mxu0 %v675
        %v1814 = vpop.f32.mrf.mxu0
        %v1815 = vadd.f32 %v1726, %v1814
        %v1816 = vpop.f32.mrf.mxu0
        %v1817 = vadd.f32 %v1728, %v1816
        %1818 = vmatmul.bf16.gmra.mxu0 %v676
        %v1819 = vpop.f32.mrf.mxu0
        %v1820 = vadd.f32 %v1731, %v1819
        %v1821 = vpop.f32.mrf.mxu0
        %v1822 = vadd.f32 %v1733, %v1821
        %1823 = vmatmul.bf16.gmra.mxu0 %v677
        %v1824 = vpop.f32.mrf.mxu0
        %v1825 = vadd.f32 %v1736, %v1824
        %v1826 = vpop.f32.mrf.mxu0
        %v1827 = vadd.f32 %v1738, %v1826
        %1828 = vmatmul.bf16.gmra.mxu0 %v678
        %v1829 = vpop.f32.mrf.mxu0
        %v1830 = vadd.f32 %v1741, %v1829
        %v1831 = vpop.f32.mrf.mxu0
        %v1832 = vadd.f32 %v1743, %v1831
        %1833 = vmatmul.bf16.gmra.mxu0 %v679
        %v1834 = vpop.f32.mrf.mxu0
        %v1835 = vadd.f32 %v1746, %v1834
        %v1836 = vpop.f32.mrf.mxu0
        %v1837 = vadd.f32 %v1748, %v1836
        %1838 = vmatmul.bf16.gmra.mxu0 %v680
        %v1839 = vpop.f32.mrf.mxu0
        %v1840 = vadd.f32 %v1751, %v1839
        %v1841 = vpop.f32.mrf.mxu0
        %v1842 = vadd.f32 %v1753, %v1841
        %1843 = vmatmul.bf16.gmra.mxu0 %v681
        %v1844 = vpop.f32.mrf.mxu0
        %v1845 = vadd.f32 %v1756, %v1844
        %v1846 = vpop.f32.mrf.mxu0
        %v1847 = vadd.f32 %v1758, %v1846
        %1848 = vmatmul.bf16.gmra.mxu0 %v682
        %v1849 = vpop.f32.mrf.mxu0
        %v1850 = vadd.f32 %v1761, %v1849
        %v1851 = vpop.f32.mrf.mxu0
        %v1852 = vadd.f32 %v1763, %v1851
        %1853 = vmatmul.bf16.gmra.mxu0 %v683
        %v1854 = vpop.f32.mrf.mxu0
        %v1855 = vadd.f32 %v1766, %v1854
        %v1856 = vpop.f32.mrf.mxu0
        %v1857 = vadd.f32 %v1768, %v1856
        %1858 = vmatmul.bf16.gmra.mxu0 %v896
        %v1859 = vpop.f32.mrf.mxu0
        %v1860 = vadd.f32 %v1771, %v1859
        %v1861 = vpop.f32.mrf.mxu0
        %v1862 = vadd.f32 %v1773, %v1861
        %1863 = vdwg.mxu0
        %1864 = vmatpush.bf16.msra.mxu0 %v1403
        %1865 = vmatpush.bf16.msra.mxu0 %v1402
        %1866 = vmatpush.bf16.msra.mxu0 %v1401
        %1867 = vmatpush.bf16.msra.mxu0 %v1400
        %1868 = vmatpush.bf16.msra.mxu0 %v1399
        %1869 = vmatpush.bf16.msra.mxu0 %v1398
        %1870 = vmatpush.bf16.msra.mxu0 %v1397
        %1871 = vmatpush.bf16.msra.mxu0 %v1396
        %1872 = vmatmul.bf16.gmra.mxu0 %v765
        %v1873 = vpop.f32.mrf.mxu0
        %v1874 = vadd.f32 %v1785, %v1873
        %v1875 = vpop.f32.mrf.mxu0
        %v1876 = vadd.f32 %v1787, %v1875
        %1877 = vmatmul.bf16.gmra.mxu0 %v766
        %v1878 = vpop.f32.mrf.mxu0
        %v1879 = vadd.f32 %v1790, %v1878
        %v1880 = vpop.f32.mrf.mxu0
        %v1881 = vadd.f32 %v1792, %v1880
        %1882 = vmatmul.bf16.gmra.mxu0 %v767
        %v1883 = vpop.f32.mrf.mxu0
        %v1884 = vadd.f32 %v1795, %v1883
        %v1885 = vpop.f32.mrf.mxu0
        %v1886 = vadd.f32 %v1797, %v1885
        %1887 = vmatmul.bf16.gmra.mxu0 %v768
        %v1888 = vpop.f32.mrf.mxu0
        %v1889 = vadd.f32 %v1800, %v1888
        %v1890 = vpop.f32.mrf.mxu0
        %v1891 = vadd.f32 %v1802, %v1890
        %1892 = vmatmul.bf16.gmra.mxu0 %v769
        %v1893 = vpop.f32.mrf.mxu0
        %v1894 = vadd.f32 %v1805, %v1893
        %v1895 = vpop.f32.mrf.mxu0
        %v1896 = vadd.f32 %v1807, %v1895
        %1897 = vmatmul.bf16.gmra.mxu0 %v770
        %v1898 = vpop.f32.mrf.mxu0
        %v1899 = vadd.f32 %v1810, %v1898
        %v1900 = vpop.f32.mrf.mxu0
        %v1901 = vadd.f32 %v1812, %v1900
        %1902 = vmatmul.bf16.gmra.mxu0 %v771
        %v1903 = vpop.f32.mrf.mxu0
        %v1904 = vadd.f32 %v1815, %v1903
        %v1905 = vpop.f32.mrf.mxu0
        %v1906 = vadd.f32 %v1817, %v1905
        %1907 = vmatmul.bf16.gmra.mxu0 %v772
        %v1908 = vpop.f32.mrf.mxu0
        %v1909 = vadd.f32 %v1820, %v1908
        %v1910 = vpop.f32.mrf.mxu0
        %v1911 = vadd.f32 %v1822, %v1910
        %1912 = vmatmul.bf16.gmra.mxu0 %v773
        %v1913 = vpop.f32.mrf.mxu0
        %v1914 = vadd.f32 %v1825, %v1913
        %v1915 = vpop.f32.mrf.mxu0
        %v1916 = vadd.f32 %v1827, %v1915
        %1917 = vmatmul.bf16.gmra.mxu0 %v774
        %v1918 = vpop.f32.mrf.mxu0
        %v1919 = vadd.f32 %v1830, %v1918
        %v1920 = vpop.f32.mrf.mxu0
        %v1921 = vadd.f32 %v1832, %v1920
        %1922 = vmatmul.bf16.gmra.mxu0 %v775
        %v1923 = vpop.f32.mrf.mxu0
        %v1924 = vadd.f32 %v1835, %v1923
        %v1925 = vpop.f32.mrf.mxu0
        %v1926 = vadd.f32 %v1837, %v1925
        %1927 = vmatmul.bf16.gmra.mxu0 %v776
        %v1928 = vpop.f32.mrf.mxu0
        %v1929 = vadd.f32 %v1840, %v1928
        %v1930 = vpop.f32.mrf.mxu0
        %v1931 = vadd.f32 %v1842, %v1930
        %1932 = vmatmul.bf16.gmra.mxu0 %v777
        %v1933 = vpop.f32.mrf.mxu0
        %v1934 = vadd.f32 %v1845, %v1933
        %v1935 = vpop.f32.mrf.mxu0
        %v1936 = vadd.f32 %v1847, %v1935
        %1937 = vmatmul.bf16.gmra.mxu0 %v778
        %v1938 = vpop.f32.mrf.mxu0
        %v1939 = vadd.f32 %v1850, %v1938
        %v1940 = vpop.f32.mrf.mxu0
        %v1941 = vadd.f32 %v1852, %v1940
        %1942 = vmatmul.bf16.gmra.mxu0 %v779
        %v1943 = vpop.f32.mrf.mxu0
        %v1944 = vadd.f32 %v1855, %v1943
        %v1945 = vpop.f32.mrf.mxu0
        %v1946 = vadd.f32 %v1857, %v1945
        %1947 = vmatmul.bf16.gmra.mxu0 %v902
        %v1948 = vpop.f32.mrf.mxu0
        %v1949 = vadd.f32 %v1860, %v1948
        %v1950 = vpop.f32.mrf.mxu0
        %v1951 = vadd.f32 %v1862, %v1950
        %1952 = vdwg.mxu0
        %1953 = vmatpush.bf16.msra.mxu0 %v1411
        %1954 = vmatpush.bf16.msra.mxu0 %v1410
        %1955 = vmatpush.bf16.msra.mxu0 %v1409
        %1956 = vmatpush.bf16.msra.mxu0 %v1408
        %1957 = vmatpush.bf16.msra.mxu0 %v1407
        %1958 = vmatpush.bf16.msra.mxu0 %v1406
        %1959 = vmatpush.bf16.msra.mxu0 %v1405
        %1960 = vmatpush.bf16.msra.mxu0 %v1404
        %1961 = vmatmul.bf16.gmra.mxu0 %v861
        %v1962 = vpop.f32.mrf.mxu0
        %v1963 = vadd.f32 %v1874, %v1962
        %v1964 = vpop.f32.mrf.mxu0
        %v1965 = vadd.f32 %v1876, %v1964
        %1966 = vmatmul.bf16.gmra.mxu0 %v862
        %v1967 = vpop.f32.mrf.mxu0
        %v1968 = vadd.f32 %v1879, %v1967
        %v1969 = vpop.f32.mrf.mxu0
        %v1970 = vadd.f32 %v1881, %v1969
        %1971 = vmatmul.bf16.gmra.mxu0 %v863
        %v1972 = vpop.f32.mrf.mxu0
        %v1973 = vadd.f32 %v1884, %v1972
        %v1974 = vpop.f32.mrf.mxu0
        %v1975 = vadd.f32 %v1886, %v1974
        %1976 = vmatmul.bf16.gmra.mxu0 %v864
        %v1977 = vpop.f32.mrf.mxu0
        %v1978 = vadd.f32 %v1889, %v1977
        %v1979 = vpop.f32.mrf.mxu0
        %v1980 = vadd.f32 %v1891, %v1979
        %1981 = vmatmul.bf16.gmra.mxu0 %v865
        %v1982 = vpop.f32.mrf.mxu0
        %v1983 = vadd.f32 %v1894, %v1982
        %v1984 = vpop.f32.mrf.mxu0
        %v1985 = vadd.f32 %v1896, %v1984
        %1986 = vmatmul.bf16.gmra.mxu0 %v866
        %v1987 = vpop.f32.mrf.mxu0
        %v1988 = vadd.f32 %v1899, %v1987
        %v1989 = vpop.f32.mrf.mxu0
        %v1990 = vadd.f32 %v1901, %v1989
        %1991 = vmatmul.bf16.gmra.mxu0 %v867
        %v1992 = vpop.f32.mrf.mxu0
        %v1993 = vadd.f32 %v1904, %v1992
        %v1994 = vpop.f32.mrf.mxu0
        %v1995 = vadd.f32 %v1906, %v1994
        %1996 = vmatmul.bf16.gmra.mxu0 %v868
        %v1997 = vpop.f32.mrf.mxu0
        %v1998 = vadd.f32 %v1909, %v1997
        %v1999 = vpop.f32.mrf.mxu0
        %v2000 = vadd.f32 %v1911, %v1999
        %2001 = vmatmul.bf16.gmra.mxu0 %v869
        %v2002 = vpop.f32.mrf.mxu0
        %v2003 = vadd.f32 %v1914, %v2002
        %v2004 = vpop.f32.mrf.mxu0
        %v2005 = vadd.f32 %v1916, %v2004
        %2006 = vmatmul.bf16.gmra.mxu0 %v870
        %v2007 = vpop.f32.mrf.mxu0
        %v2008 = vadd.f32 %v1919, %v2007
        %v2009 = vpop.f32.mrf.mxu0
        %v2010 = vadd.f32 %v1921, %v2009
        %2011 = vmatmul.bf16.gmra.mxu0 %v871
        %v2012 = vpop.f32.mrf.mxu0
        %v2013 = vadd.f32 %v1924, %v2012
        %v2014 = vpop.f32.mrf.mxu0
        %v2015 = vadd.f32 %v1926, %v2014
        %2016 = vmatmul.bf16.gmra.mxu0 %v872
        %v2017 = vpop.f32.mrf.mxu0
        %v2018 = vadd.f32 %v1929, %v2017
        %v2019 = vpop.f32.mrf.mxu0
        %v2020 = vadd.f32 %v1931, %v2019
        %2021 = vmatmul.bf16.gmra.mxu0 %v873
        %v2022 = vpop.f32.mrf.mxu0
        %v2023 = vadd.f32 %v1934, %v2022
        %v2024 = vpop.f32.mrf.mxu0
        %v2025 = vadd.f32 %v1936, %v2024
        %2026 = vmatmul.bf16.gmra.mxu0 %v874
        %v2027 = vpop.f32.mrf.mxu0
        %v2028 = vadd.f32 %v1939, %v2027
        %v2029 = vpop.f32.mrf.mxu0
        %v2030 = vadd.f32 %v1941, %v2029
        %2031 = vmatmul.bf16.gmra.mxu0 %v875
        %v2032 = vpop.f32.mrf.mxu0
        %v2033 = vadd.f32 %v1944, %v2032
        %v2034 = vpop.f32.mrf.mxu0
        %v2035 = vadd.f32 %v1946, %v2034
        %2036 = vmatmul.bf16.gmra.mxu0 %v908
        %v2037 = vpop.f32.mrf.mxu0
        %v2038 = vadd.f32 %v1949, %v2037
        %v2039 = vpop.f32.mrf.mxu0
        %v2040 = vadd.f32 %v1951, %v2039
        %2041 = vdwg.mxu0
        %2042 = vmatpush.bf16.msra.mxu0 %v1419
        %2043 = vmatpush.bf16.msra.mxu0 %v1418
        %2044 = vmatpush.bf16.msra.mxu0 %v1417
        %2045 = vmatpush.bf16.msra.mxu0 %v1416
        %2046 = vmatpush.bf16.msra.mxu0 %v1415
        %2047 = vmatpush.bf16.msra.mxu0 %v1414
        %2048 = vmatpush.bf16.msra.mxu0 %v1413
        %2049 = vmatpush.bf16.msra.mxu0 %v1412
        %2050 = vmatmul.bf16.gmra.mxu0 %v670
        %v2051 = vpop.f32.mrf.mxu0
        %v2052 = vadd.f32 %v1963, %v2051
        %v2053 = vpop.f32.mrf.mxu0
        %v2054 = vadd.f32 %v1965, %v2053
        %2055 = vmatmul.bf16.gmra.mxu0 %v671
        %v2056 = vpop.f32.mrf.mxu0
        %v2057 = vadd.f32 %v1968, %v2056
        %v2058 = vpop.f32.mrf.mxu0
        %v2059 = vadd.f32 %v1970, %v2058
        %2060 = vmatmul.bf16.gmra.mxu0 %v672
        %v2061 = vpop.f32.mrf.mxu0
        %v2062 = vadd.f32 %v1973, %v2061
        %v2063 = vpop.f32.mrf.mxu0
        %v2064 = vadd.f32 %v1975, %v2063
        %2065 = vmatmul.bf16.gmra.mxu0 %v673
        %v2066 = vpop.f32.mrf.mxu0
        %v2067 = vadd.f32 %v1978, %v2066
        %v2068 = vpop.f32.mrf.mxu0
        %v2069 = vadd.f32 %v1980, %v2068
        %2070 = vmatmul.bf16.gmra.mxu0 %v674
        %v2071 = vpop.f32.mrf.mxu0
        %v2072 = vadd.f32 %v1983, %v2071
        %v2073 = vpop.f32.mrf.mxu0
        %v2074 = vadd.f32 %v1985, %v2073
        %2075 = vmatmul.bf16.gmra.mxu0 %v675
        %v2076 = vpop.f32.mrf.mxu0
        %v2077 = vadd.f32 %v1988, %v2076
        %v2078 = vpop.f32.mrf.mxu0
        %v2079 = vadd.f32 %v1990, %v2078
        %2080 = vmatmul.bf16.gmra.mxu0 %v676
        %v2081 = vpop.f32.mrf.mxu0
        %v2082 = vadd.f32 %v1993, %v2081
        %v2083 = vpop.f32.mrf.mxu0
        %v2084 = vadd.f32 %v1995, %v2083
        %2085 = vmatmul.bf16.gmra.mxu0 %v677
        %v2086 = vpop.f32.mrf.mxu0
        %v2087 = vadd.f32 %v1998, %v2086
        %v2088 = vpop.f32.mrf.mxu0
        %v2089 = vadd.f32 %v2000, %v2088
        %2090 = vmatmul.bf16.gmra.mxu0 %v678
        %v2091 = vpop.f32.mrf.mxu0
        %v2092 = vadd.f32 %v2003, %v2091
        %v2093 = vpop.f32.mrf.mxu0
        %v2094 = vadd.f32 %v2005, %v2093
        %2095 = vmatmul.bf16.gmra.mxu0 %v679
        %v2096 = vpop.f32.mrf.mxu0
        %v2097 = vadd.f32 %v2008, %v2096
        %v2098 = vpop.f32.mrf.mxu0
        %v2099 = vadd.f32 %v2010, %v2098
        %2100 = vmatmul.bf16.gmra.mxu0 %v680
        %v2101 = vpop.f32.mrf.mxu0
        %v2102 = vadd.f32 %v2013, %v2101
        %v2103 = vpop.f32.mrf.mxu0
        %v2104 = vadd.f32 %v2015, %v2103
        %2105 = vmatmul.bf16.gmra.mxu0 %v681
        %v2106 = vpop.f32.mrf.mxu0
        %v2107 = vadd.f32 %v2018, %v2106
        %v2108 = vpop.f32.mrf.mxu0
        %v2109 = vadd.f32 %v2020, %v2108
        %2110 = vmatmul.bf16.gmra.mxu0 %v682
        %v2111 = vpop.f32.mrf.mxu0
        %v2112 = vadd.f32 %v2023, %v2111
        %v2113 = vpop.f32.mrf.mxu0
        %v2114 = vadd.f32 %v2025, %v2113
        %2115 = vmatmul.bf16.gmra.mxu0 %v683
        %v2116 = vpop.f32.mrf.mxu0
        %v2117 = vadd.f32 %v2028, %v2116
        %v2118 = vpop.f32.mrf.mxu0
        %v2119 = vadd.f32 %v2030, %v2118
        %2120 = vmatmul.bf16.gmra.mxu0 %v896
        %v2121 = vpop.f32.mrf.mxu0
        %v2122 = vadd.f32 %v2033, %v2121
        %v2123 = vpop.f32.mrf.mxu0
        %v2124 = vadd.f32 %v2035, %v2123
        %2125 = vmatmul.bf16.gmra.mxu0 %v914
        %v2126 = vpop.f32.mrf.mxu0
        %v2127 = vadd.f32 %v2038, %v2126
        %v2128 = vpop.f32.mrf.mxu0
        %v2129 = vadd.f32 %v2040, %v2128
        %2130 = vdwg.mxu0
        %2131 = vmatpush.bf16.msra.mxu0 %v1427
        %2132 = vmatpush.bf16.msra.mxu0 %v1426
        %2133 = vmatpush.bf16.msra.mxu0 %v1425
        %2134 = vmatpush.bf16.msra.mxu0 %v1424
        %2135 = vmatpush.bf16.msra.mxu0 %v1423
        %2136 = vmatpush.bf16.msra.mxu0 %v1422
        %2137 = vmatpush.bf16.msra.mxu0 %v1421
        %2138 = vmatpush.bf16.msra.mxu0 %v1420
        %2139 = vmatmul.bf16.gmra.mxu0 %v766
        %v2140 = vpop.f32.mrf.mxu0
        %v2141 = vadd.f32 %v2052, %v2140
        %v2142 = vpop.f32.mrf.mxu0
        %v2143 = vadd.f32 %v2054, %v2142
        %2144 = vmatmul.bf16.gmra.mxu0 %v767
        %v2145 = vpop.f32.mrf.mxu0
        %v2146 = vadd.f32 %v2057, %v2145
        %v2147 = vpop.f32.mrf.mxu0
        %v2148 = vadd.f32 %v2059, %v2147
        %2149 = vmatmul.bf16.gmra.mxu0 %v768
        %v2150 = vpop.f32.mrf.mxu0
        %v2151 = vadd.f32 %v2062, %v2150
        %v2152 = vpop.f32.mrf.mxu0
        %v2153 = vadd.f32 %v2064, %v2152
        %2154 = vmatmul.bf16.gmra.mxu0 %v769
        %v2155 = vpop.f32.mrf.mxu0
        %v2156 = vadd.f32 %v2067, %v2155
        %v2157 = vpop.f32.mrf.mxu0
        %v2158 = vadd.f32 %v2069, %v2157
        %2159 = vmatmul.bf16.gmra.mxu0 %v770
        %v2160 = vpop.f32.mrf.mxu0
        %v2161 = vadd.f32 %v2072, %v2160
        %v2162 = vpop.f32.mrf.mxu0
        %v2163 = vadd.f32 %v2074, %v2162
        %2164 = vmatmul.bf16.gmra.mxu0 %v771
        %v2165 = vpop.f32.mrf.mxu0
        %v2166 = vadd.f32 %v2077, %v2165
        %v2167 = vpop.f32.mrf.mxu0
        %v2168 = vadd.f32 %v2079, %v2167
        %2169 = vmatmul.bf16.gmra.mxu0 %v772
        %v2170 = vpop.f32.mrf.mxu0
        %v2171 = vadd.f32 %v2082, %v2170
        %v2172 = vpop.f32.mrf.mxu0
        %v2173 = vadd.f32 %v2084, %v2172
        %2174 = vmatmul.bf16.gmra.mxu0 %v773
        %v2175 = vpop.f32.mrf.mxu0
        %v2176 = vadd.f32 %v2087, %v2175
        %v2177 = vpop.f32.mrf.mxu0
        %v2178 = vadd.f32 %v2089, %v2177
        %2179 = vmatmul.bf16.gmra.mxu0 %v774
        %v2180 = vpop.f32.mrf.mxu0
        %v2181 = vadd.f32 %v2092, %v2180
        %v2182 = vpop.f32.mrf.mxu0
        %v2183 = vadd.f32 %v2094, %v2182
        %2184 = vmatmul.bf16.gmra.mxu0 %v775
        %v2185 = vpop.f32.mrf.mxu0
        %v2186 = vadd.f32 %v2097, %v2185
        %v2187 = vpop.f32.mrf.mxu0
        %v2188 = vadd.f32 %v2099, %v2187
        %2189 = vmatmul.bf16.gmra.mxu0 %v776
        %v2190 = vpop.f32.mrf.mxu0
        %v2191 = vadd.f32 %v2102, %v2190
        %v2192 = vpop.f32.mrf.mxu0
        %v2193 = vadd.f32 %v2104, %v2192
        %2194 = vmatmul.bf16.gmra.mxu0 %v777
        %v2195 = vpop.f32.mrf.mxu0
        %v2196 = vadd.f32 %v2107, %v2195
        %v2197 = vpop.f32.mrf.mxu0
        %v2198 = vadd.f32 %v2109, %v2197
        %2199 = vmatmul.bf16.gmra.mxu0 %v778
        %v2200 = vpop.f32.mrf.mxu0
        %v2201 = vadd.f32 %v2112, %v2200
        %v2202 = vpop.f32.mrf.mxu0
        %v2203 = vadd.f32 %v2114, %v2202
        %2204 = vmatmul.bf16.gmra.mxu0 %v779
        %v2205 = vpop.f32.mrf.mxu0
        %v2206 = vadd.f32 %v2117, %v2205
        %v2207 = vpop.f32.mrf.mxu0
        %v2208 = vadd.f32 %v2119, %v2207
        %2209 = vmatmul.bf16.gmra.mxu0 %v902
        %v2210 = vpop.f32.mrf.mxu0
        %v2211 = vadd.f32 %v2122, %v2210
        %v2212 = vpop.f32.mrf.mxu0
        %v2213 = vadd.f32 %v2124, %v2212
        %2214 = vmatmul.bf16.gmra.mxu0 %v920
        %v2215 = vpop.f32.mrf.mxu0
        %v2216 = vadd.f32 %v2127, %v2215
        %v2217 = vpop.f32.mrf.mxu0
        %v2218 = vadd.f32 %v2129, %v2217
        %2219 = vdwg.mxu0
        %2220 = vmatpush.bf16.msra.mxu0 %v1435
        %2221 = vmatpush.bf16.msra.mxu0 %v1434
        %2222 = vmatpush.bf16.msra.mxu0 %v1433
        %2223 = vmatpush.bf16.msra.mxu0 %v1432
        %2224 = vmatpush.bf16.msra.mxu0 %v1431
        %2225 = vmatpush.bf16.msra.mxu0 %v1430
        %2226 = vmatpush.bf16.msra.mxu0 %v1429
        %2227 = vmatpush.bf16.msra.mxu0 %v1428
        %2228 = vmatmul.bf16.gmra.mxu0 %v862
        %v2229 = vpop.f32.mrf.mxu0
        %v2230 = vadd.f32 %v2141, %v2229
        %v2231 = vpop.f32.mrf.mxu0
        %v2232 = vadd.f32 %v2143, %v2231
        %2233 = vmatmul.bf16.gmra.mxu0 %v863
        %v2234 = vpop.f32.mrf.mxu0
        %v2235 = vadd.f32 %v2146, %v2234
        %v2236 = vpop.f32.mrf.mxu0
        %v2237 = vadd.f32 %v2148, %v2236
        %2238 = vmatmul.bf16.gmra.mxu0 %v864
        %v2239 = vpop.f32.mrf.mxu0
        %v2240 = vadd.f32 %v2151, %v2239
        %v2241 = vpop.f32.mrf.mxu0
        %v2242 = vadd.f32 %v2153, %v2241
        %2243 = vmatmul.bf16.gmra.mxu0 %v865
        %v2244 = vpop.f32.mrf.mxu0
        %v2245 = vadd.f32 %v2156, %v2244
        %v2246 = vpop.f32.mrf.mxu0
        %v2247 = vadd.f32 %v2158, %v2246
        %2248 = vmatmul.bf16.gmra.mxu0 %v866
        %v2249 = vpop.f32.mrf.mxu0
        %v2250 = vadd.f32 %v2161, %v2249
        %v2251 = vpop.f32.mrf.mxu0
        %v2252 = vadd.f32 %v2163, %v2251
        %2253 = vmatmul.bf16.gmra.mxu0 %v867
        %v2254 = vpop.f32.mrf.mxu0
        %v2255 = vadd.f32 %v2166, %v2254
        %v2256 = vpop.f32.mrf.mxu0
        %v2257 = vadd.f32 %v2168, %v2256
        %2258 = vmatmul.bf16.gmra.mxu0 %v868
        %v2259 = vpop.f32.mrf.mxu0
        %v2260 = vadd.f32 %v2171, %v2259
        %v2261 = vpop.f32.mrf.mxu0
        %v2262 = vadd.f32 %v2173, %v2261
        %2263 = vmatmul.bf16.gmra.mxu0 %v869
        %v2264 = vpop.f32.mrf.mxu0
        %v2265 = vadd.f32 %v2176, %v2264
        %v2266 = vpop.f32.mrf.mxu0
        %v2267 = vadd.f32 %v2178, %v2266
        %2268 = vmatmul.bf16.gmra.mxu0 %v870
        %v2269 = vpop.f32.mrf.mxu0
        %v2270 = vadd.f32 %v2181, %v2269
        %v2271 = vpop.f32.mrf.mxu0
        %v2272 = vadd.f32 %v2183, %v2271
        %2273 = vmatmul.bf16.gmra.mxu0 %v871
        %v2274 = vpop.f32.mrf.mxu0
        %v2275 = vadd.f32 %v2186, %v2274
        %v2276 = vpop.f32.mrf.mxu0
        %v2277 = vadd.f32 %v2188, %v2276
        %2278 = vmatmul.bf16.gmra.mxu0 %v872
        %v2279 = vpop.f32.mrf.mxu0
        %v2280 = vadd.f32 %v2191, %v2279
        %v2281 = vpop.f32.mrf.mxu0
        %v2282 = vadd.f32 %v2193, %v2281
        %2283 = vmatmul.bf16.gmra.mxu0 %v873
        %v2284 = vpop.f32.mrf.mxu0
        %v2285 = vadd.f32 %v2196, %v2284
        %v2286 = vpop.f32.mrf.mxu0
        %v2287 = vadd.f32 %v2198, %v2286
        %2288 = vmatmul.bf16.gmra.mxu0 %v874
        %v2289 = vpop.f32.mrf.mxu0
        %v2290 = vadd.f32 %v2201, %v2289
        %v2291 = vpop.f32.mrf.mxu0
        %v2292 = vadd.f32 %v2203, %v2291
        %2293 = vmatmul.bf16.gmra.mxu0 %v875
        %v2294 = vpop.f32.mrf.mxu0
        %v2295 = vadd.f32 %v2206, %v2294
        %v2296 = vpop.f32.mrf.mxu0
        %v2297 = vadd.f32 %v2208, %v2296
        %2298 = vmatmul.bf16.gmra.mxu0 %v908
        %v2299 = vpop.f32.mrf.mxu0
        %v2300 = vadd.f32 %v2211, %v2299
        %v2301 = vpop.f32.mrf.mxu0
        %v2302 = vadd.f32 %v2213, %v2301
        %2303 = vmatmul.bf16.gmra.mxu0 %v926
        %v2304 = vpop.f32.mrf.mxu0
        %v2305 = vadd.f32 %v2216, %v2304
        %v2306 = vpop.f32.mrf.mxu0
        %v2307 = vadd.f32 %v2218, %v2306
        %2308 = vdwg.mxu0
        %v2309 = vmax.f32 %v2230, 0.0
        %v2310 = vmax.f32 %v2232, 0.0
        %v2311 = vmax.f32 %v2235, 0.0
        %v2312 = vmax.f32 %v2237, 0.0
        %v2313 = vmax.f32 %v2240, 0.0
        %v2314 = vmax.f32 %v2242, 0.0
        %v2315 = vmax.f32 %v2245, 0.0
        %v2316 = vmax.f32 %v2247, 0.0
        %v2317 = vmax.f32 %v2250, 0.0
        %v2318 = vmax.f32 %v2252, 0.0
        %v2319 = vmax.f32 %v2255, 0.0
        %v2320 = vmax.f32 %v2257, 0.0
        %v2321 = vmax.f32 %v2260, 0.0
        %v2322 = vmax.f32 %v2262, 0.0
        %v2323 = vmax.f32 %v2265, 0.0
        %v2324 = vmax.f32 %v2267, 0.0
        %v2325 = vmax.f32 %v2270, 0.0
        %v2326 = vmax.f32 %v2272, 0.0
        %v2327 = vmax.f32 %v2275, 0.0
        %v2328 = vmax.f32 %v2277, 0.0
        %v2329 = vmax.f32 %v2280, 0.0
        %v2330 = vmax.f32 %v2282, 0.0
        %v2331 = vmax.f32 %v2285, 0.0
        %v2332 = vmax.f32 %v2287, 0.0
        %v2333 = vmax.f32 %v2290, 0.0
        %v2334 = vmax.f32 %v2292, 0.0
        %v2335 = vmax.f32 %v2295, 0.0
        %v2336 = vmax.f32 %v2297, 0.0
        %v2337 = vmax.f32 %v2300, 0.0
        %v2338 = vmax.f32 %v2302, 0.0
        %v2339 = vmax.f32 %v2305, 0.0
        %v2340 = vmax.f32 %v2307, 0.0
        %2341 = vst [vmem:[%s355 + $0x8] sm:$0xff] %v2309
        %2342 = vst [vmem:[%s355 + $0x10] sm:$0xff] %v2310
        %2343 = vst [vmem:[%s355 + $0x28] sm:$0xff] %v2311
        %2344 = vst [vmem:[%s355 + $0x30] sm:$0xff] %v2312
        %2345 = vst [vmem:[%s355 + $0x48] sm:$0xff] %v2313
        %2346 = vst [vmem:[%s355 + $0x50] sm:$0xff] %v2314
        %2347 = vst [vmem:[%s355 + $0x68] sm:$0xff] %v2315
        %2348 = vst [vmem:[%s355 + $0x70] sm:$0xff] %v2316
        %2349 = vst [vmem:[%s355 + $0x88] sm:$0xff] %v2317
        %2350 = vst [vmem:[%s355 + $0x90] sm:$0xff] %v2318
        %2351 = vst [vmem:[%s355 + $0xa8] sm:$0xff] %v2319
        %2352 = vst [vmem:[%s355 + $0xb0] sm:$0xff] %v2320
        %2353 = vst [vmem:[%s355 + $0xc8] sm:$0xff] %v2321
        %2354 = vst [vmem:[%s355 + $0xd0] sm:$0xff] %v2322
        %2355 = vst [vmem:[%s355 + $0xe8] sm:$0xff] %v2323
        %2356 = vst [vmem:[%s355 + $0xf0] sm:$0xff] %v2324
        %2357 = vst [vmem:[%s355 + $0x108] sm:$0xff] %v2325
        %2358 = vst [vmem:[%s355 + $0x110] sm:$0xff] %v2326
        %2359 = vst [vmem:[%s355 + $0x128] sm:$0xff] %v2327
        %2360 = vst [vmem:[%s355 + $0x130] sm:$0xff] %v2328
        %2361 = vst [vmem:[%s355 + $0x148] sm:$0xff] %v2329
        %2362 = vst [vmem:[%s355 + $0x150] sm:$0xff] %v2330
        %2363 = vst [vmem:[%s355 + $0x168] sm:$0xff] %v2331
        %2364 = vst [vmem:[%s355 + $0x170] sm:$0xff] %v2332
        %2365 = vst [vmem:[%s355 + $0x188] sm:$0xff] %v2333
        %2366 = vst [vmem:[%s355 + $0x190] sm:$0xff] %v2334
        %2367 = vst [vmem:[%s355 + $0x1a8] sm:$0xff] %v2335
        %2368 = vst [vmem:[%s355 + $0x1b0] sm:$0xff] %v2336
        %2369 = vst [vmem:[%s355 + $0x1c8] sm:$0xff] %v2337
        %2370 = vst [vmem:[%s355 + $0x1d0] sm:$0xff] %v2338
        %2371 = vst [vmem:[%s355 + $0x1e8] sm:$0xff] %v2339
        %2372 = vst [vmem:[%s355 + $0x1f0] sm:$0xff] %v2340
        %v2373 = vld [vmem:[#allocation2 + $0x7] sm:$0xff]
        %v2374 = vld [vmem:[#allocation2 + $0xf] sm:$0xff]
        %v2375 = vld [vmem:[#allocation2 + $0x27] sm:$0xff]
        %v2376 = vld [vmem:[#allocation2 + $0x2f] sm:$0xff]
        %v2377 = vld [vmem:[#allocation2 + $0x47] sm:$0xff]
        %v2378 = vld [vmem:[#allocation2 + $0x4f] sm:$0xff]
        %v2379 = vld [vmem:[#allocation2 + $0x67] sm:$0xff]
        %v2380 = vld [vmem:[#allocation2 + $0x6f] sm:$0xff]
        %v2381 = vld [vmem:[#allocation2 + $0x87] sm:$0xff]
        %v2382 = vld [vmem:[#allocation2 + $0x8f] sm:$0xff]
        %v2383 = vld [vmem:[#allocation2 + $0xa7] sm:$0xff]
        %v2384 = vld [vmem:[#allocation2 + $0xaf] sm:$0xff]
        %v2385 = vld [vmem:[#allocation2 + $0xc7] sm:$0xff]
        %v2386 = vld [vmem:[#allocation2 + $0xcf] sm:$0xff]
        %v2387 = vld [vmem:[#allocation2 + $0xe7] sm:$0xff]
        %v2388 = vld [vmem:[#allocation2 + $0xef] sm:$0xff]
        %v2389 = vld [vmem:[#allocation2 + $0x107] sm:$0xff]
        %v2390 = vld [vmem:[#allocation2 + $0x10f] sm:$0xff]
        %v2391 = vld [vmem:[#allocation2 + $0x127] sm:$0xff]
        %v2392 = vld [vmem:[#allocation2 + $0x12f] sm:$0xff]
        %v2393 = vld [vmem:[#allocation2 + $0x147] sm:$0xff]
        %v2394 = vld [vmem:[#allocation2 + $0x14f] sm:$0xff]
        %v2395 = vld [vmem:[#allocation2 + $0x167] sm:$0xff]
        %v2396 = vld [vmem:[#allocation2 + $0x16f] sm:$0xff]
        %v2397 = vld [vmem:[#allocation2 + $0x187] sm:$0xff]
        %v2398 = vld [vmem:[#allocation2 + $0x18f] sm:$0xff]
        %v2399 = vld [vmem:[#allocation2 + $0x1a7] sm:$0xff]
        %v2400 = vld [vmem:[#allocation2 + $0x1af] sm:$0xff]
        %v2401 = vld [vmem:[#allocation2 + $0x1c7] sm:$0xff]
        %v2402 = vld [vmem:[#allocation2 + $0x1cf] sm:$0xff]
        %v2403 = vld [vmem:[#allocation2 + $0x1e7] sm:$0xff]
        %v2404 = vld [vmem:[#allocation2 + $0x1ef] sm:$0xff]
        %v2405 = vld [vmem:[#allocation2 + $0x207] sm:$0xff]
        %v2406 = vld [vmem:[#allocation2 + $0x20f] sm:$0xff]
        %v2407 = vld [vmem:[#allocation2 + $0x227] sm:$0xff]
        %v2408 = vld [vmem:[#allocation2 + $0x22f] sm:$0xff]
        %v2409 = vpack.c.bf16 %v2373, %v2373
        %v2410 = vpack.c.bf16 %v2374, %v2374
        %v2411 = vpack.c.bf16 %v2375, %v2375
        %v2412 = vpack.c.bf16 %v2376, %v2376
        %v2413 = vpack.c.bf16 %v2377, %v2377
        %v2414 = vpack.c.bf16 %v2378, %v2378
        %v2415 = vpack.c.bf16 %v2379, %v2379
        %v2416 = vpack.c.bf16 %v2380, %v2380
        %v2417 = vpack.c.bf16 %v2381, %v2381
        %v2418 = vpack.c.bf16 %v2382, %v2382
        %v2419 = vpack.c.bf16 %v2383, %v2383
        %v2420 = vpack.c.bf16 %v2384, %v2384
        %v2421 = vpack.c.bf16 %v2385, %v2385
        %v2422 = vpack.c.bf16 %v2386, %v2386
        %v2423 = vpack.c.bf16 %v2387, %v2387
        %v2424 = vpack.c.bf16 %v2388, %v2388
        %v2425 = vpack.c.bf16 %v2389, %v2389
        %v2426 = vpack.c.bf16 %v2390, %v2390
        %v2427 = vpack.c.bf16 %v2391, %v2391
        %v2428 = vpack.c.bf16 %v2392, %v2392
        %v2429 = vpack.c.bf16 %v2393, %v2393
        %v2430 = vpack.c.bf16 %v2394, %v2394
        %v2431 = vpack.c.bf16 %v2395, %v2395
        %v2432 = vpack.c.bf16 %v2396, %v2396
        %v2433 = vpack.c.bf16 %v2397, %v2397
        %v2434 = vpack.c.bf16 %v2398, %v2398
        %v2435 = vpack.c.bf16 %v2399, %v2399
        %v2436 = vpack.c.bf16 %v2400, %v2400
        %v2437 = vpack.c.bf16 %v2401, %v2401
        %v2438 = vpack.c.bf16 %v2402, %v2402
        %v2439 = vpack.c.bf16 %v2403, %v2403
        %v2440 = vpack.c.bf16 %v2404, %v2404
        %v2441 = vpack.c.bf16 %v2405, %v2405
        %v2442 = vpack.c.bf16 %v2406, %v2406
        %v2443 = vpack.c.bf16 %v2407, %v2407
        %v2444 = vpack.c.bf16 %v2408, %v2408
        %v2445 = vld [vmem:[#allocation2 + $0x8] sm:$0xff]
        %v2446 = vld [vmem:[#allocation2 + $0x10] sm:$0xff]
        %v2447 = vld [vmem:[#allocation2 + $0x28] sm:$0xff]
        %v2448 = vld [vmem:[#allocation2 + $0x30] sm:$0xff]
        %v2449 = vld [vmem:[#allocation2 + $0x48] sm:$0xff]
        %v2450 = vld [vmem:[#allocation2 + $0x50] sm:$0xff]
        %v2451 = vld [vmem:[#allocation2 + $0x68] sm:$0xff]
        %v2452 = vld [vmem:[#allocation2 + $0x70] sm:$0xff]
        %v2453 = vld [vmem:[#allocation2 + $0x88] sm:$0xff]
        %v2454 = vld [vmem:[#allocation2 + $0x90] sm:$0xff]
        %v2455 = vld [vmem:[#allocation2 + $0xa8] sm:$0xff]
        %v2456 = vld [vmem:[#allocation2 + $0xb0] sm:$0xff]
        %v2457 = vld [vmem:[#allocation2 + $0xc8] sm:$0xff]
        %v2458 = vld [vmem:[#allocation2 + $0xd0] sm:$0xff]
        %v2459 = vld [vmem:[#allocation2 + $0xe8] sm:$0xff]
        %v2460 = vld [vmem:[#allocation2 + $0xf0] sm:$0xff]
        %v2461 = vld [vmem:[#allocation2 + $0x108] sm:$0xff]
        %v2462 = vld [vmem:[#allocation2 + $0x110] sm:$0xff]
        %v2463 = vld [vmem:[#allocation2 + $0x128] sm:$0xff]
        %v2464 = vld [vmem:[#allocation2 + $0x130] sm:$0xff]
        %v2465 = vld [vmem:[#allocation2 + $0x148] sm:$0xff]
        %v2466 = vld [vmem:[#allocation2 + $0x150] sm:$0xff]
        %v2467 = vld [vmem:[#allocation2 + $0x168] sm:$0xff]
        %v2468 = vld [vmem:[#allocation2 + $0x170] sm:$0xff]
        %v2469 = vld [vmem:[#allocation2 + $0x188] sm:$0xff]
        %v2470 = vld [vmem:[#allocation2 + $0x190] sm:$0xff]
        %v2471 = vld [vmem:[#allocation2 + $0x1a8] sm:$0xff]
        %v2472 = vld [vmem:[#allocation2 + $0x1b0] sm:$0xff]
        %v2473 = vld [vmem:[#allocation2 + $0x1c8] sm:$0xff]
        %v2474 = vld [vmem:[#allocation2 + $0x1d0] sm:$0xff]
        %v2475 = vld [vmem:[#allocation2 + $0x1e8] sm:$0xff]
        %v2476 = vld [vmem:[#allocation2 + $0x1f0] sm:$0xff]
        %v2477 = vld [vmem:[#allocation2 + $0x208] sm:$0xff]
        %v2478 = vld [vmem:[#allocation2 + $0x210] sm:$0xff]
        %v2479 = vld [vmem:[#allocation2 + $0x228] sm:$0xff]
        %v2480 = vld [vmem:[#allocation2 + $0x230] sm:$0xff]
        %v2481 = vpack.c.bf16 %v2445, %v2445
        %v2482 = vpack.c.bf16 %v2446, %v2446
        %v2483 = vpack.c.bf16 %v2447, %v2447
        %v2484 = vpack.c.bf16 %v2448, %v2448
        %v2485 = vpack.c.bf16 %v2449, %v2449
        %v2486 = vpack.c.bf16 %v2450, %v2450
        %v2487 = vpack.c.bf16 %v2451, %v2451
        %v2488 = vpack.c.bf16 %v2452, %v2452
        %v2489 = vpack.c.bf16 %v2453, %v2453
        %v2490 = vpack.c.bf16 %v2454, %v2454
        %v2491 = vpack.c.bf16 %v2455, %v2455
        %v2492 = vpack.c.bf16 %v2456, %v2456
        %v2493 = vpack.c.bf16 %v2457, %v2457
        %v2494 = vpack.c.bf16 %v2458, %v2458
        %v2495 = vpack.c.bf16 %v2459, %v2459
        %v2496 = vpack.c.bf16 %v2460, %v2460
        %v2497 = vpack.c.bf16 %v2461, %v2461
        %v2498 = vpack.c.bf16 %v2462, %v2462
        %v2499 = vpack.c.bf16 %v2463, %v2463
        %v2500 = vpack.c.bf16 %v2464, %v2464
        %v2501 = vpack.c.bf16 %v2465, %v2465
        %v2502 = vpack.c.bf16 %v2466, %v2466
        %v2503 = vpack.c.bf16 %v2467, %v2467
        %v2504 = vpack.c.bf16 %v2468, %v2468
        %v2505 = vpack.c.bf16 %v2469, %v2469
        %v2506 = vpack.c.bf16 %v2470, %v2470
        %v2507 = vpack.c.bf16 %v2471, %v2471
        %v2508 = vpack.c.bf16 %v2472, %v2472
        %v2509 = vpack.c.bf16 %v2473, %v2473
        %v2510 = vpack.c.bf16 %v2474, %v2474
        %v2511 = vpack.c.bf16 %v2475, %v2475
        %v2512 = vpack.c.bf16 %v2476, %v2476
        %v2513 = vpack.c.bf16 %v2477, %v2477
        %v2514 = vpack.c.bf16 %v2478, %v2478
        %v2515 = vpack.c.bf16 %v2479, %v2479
        %v2516 = vpack.c.bf16 %v2480, %v2480
        %v2517 = vld [vmem:[#allocation2 + $0x9] sm:$0xff]
        %v2518 = vld [vmem:[#allocation2 + $0x11] sm:$0xff]
        %v2519 = vld [vmem:[#allocation2 + $0x29] sm:$0xff]
        %v2520 = vld [vmem:[#allocation2 + $0x31] sm:$0xff]
        %v2521 = vld [vmem:[#allocation2 + $0x49] sm:$0xff]
        %v2522 = vld [vmem:[#allocation2 + $0x51] sm:$0xff]
        %v2523 = vld [vmem:[#allocation2 + $0x69] sm:$0xff]
        %v2524 = vld [vmem:[#allocation2 + $0x71] sm:$0xff]
        %v2525 = vld [vmem:[#allocation2 + $0x89] sm:$0xff]
        %v2526 = vld [vmem:[#allocation2 + $0x91] sm:$0xff]
        %v2527 = vld [vmem:[#allocation2 + $0xa9] sm:$0xff]
        %v2528 = vld [vmem:[#allocation2 + $0xb1] sm:$0xff]
        %v2529 = vld [vmem:[#allocation2 + $0xc9] sm:$0xff]
        %v2530 = vld [vmem:[#allocation2 + $0xd1] sm:$0xff]
        %v2531 = vld [vmem:[#allocation2 + $0xe9] sm:$0xff]
        %v2532 = vld [vmem:[#allocation2 + $0xf1] sm:$0xff]
        %v2533 = vld [vmem:[#allocation2 + $0x109] sm:$0xff]
        %v2534 = vld [vmem:[#allocation2 + $0x111] sm:$0xff]
        %v2535 = vld [vmem:[#allocation2 + $0x129] sm:$0xff]
        %v2536 = vld [vmem:[#allocation2 + $0x131] sm:$0xff]
        %v2537 = vld [vmem:[#allocation2 + $0x149] sm:$0xff]
        %v2538 = vld [vmem:[#allocation2 + $0x151] sm:$0xff]
        %v2539 = vld [vmem:[#allocation2 + $0x169] sm:$0xff]
        %v2540 = vld [vmem:[#allocation2 + $0x171] sm:$0xff]
        %v2541 = vld [vmem:[#allocation2 + $0x189] sm:$0xff]
        %v2542 = vld [vmem:[#allocation2 + $0x191] sm:$0xff]
        %v2543 = vld [vmem:[#allocation2 + $0x1a9] sm:$0xff]
        %v2544 = vld [vmem:[#allocation2 + $0x1b1] sm:$0xff]
        %v2545 = vld [vmem:[#allocation2 + $0x1c9] sm:$0xff]
        %v2546 = vld [vmem:[#allocation2 + $0x1d1] sm:$0xff]
        %v2547 = vld [vmem:[#allocation2 + $0x1e9] sm:$0xff]
        %v2548 = vld [vmem:[#allocation2 + $0x1f1] sm:$0xff]
        %v2549 = vld [vmem:[#allocation2 + $0x209] sm:$0xff]
        %v2550 = vld [vmem:[#allocation2 + $0x211] sm:$0xff]
        %v2551 = vld [vmem:[#allocation2 + $0x229] sm:$0xff]
        %v2552 = vld [vmem:[#allocation2 + $0x231] sm:$0xff]
        %v2553 = vpack.c.bf16 %v2517, %v2517
        %v2554 = vpack.c.bf16 %v2518, %v2518
        %v2555 = vpack.c.bf16 %v2519, %v2519
        %v2556 = vpack.c.bf16 %v2520, %v2520
        %v2557 = vpack.c.bf16 %v2521, %v2521
        %v2558 = vpack.c.bf16 %v2522, %v2522
        %v2559 = vpack.c.bf16 %v2523, %v2523
        %v2560 = vpack.c.bf16 %v2524, %v2524
        %v2561 = vpack.c.bf16 %v2525, %v2525
        %v2562 = vpack.c.bf16 %v2526, %v2526
        %v2563 = vpack.c.bf16 %v2527, %v2527
        %v2564 = vpack.c.bf16 %v2528, %v2528
        %v2565 = vpack.c.bf16 %v2529, %v2529
        %v2566 = vpack.c.bf16 %v2530, %v2530
        %v2567 = vpack.c.bf16 %v2531, %v2531
        %v2568 = vpack.c.bf16 %v2532, %v2532
        %v2569 = vpack.c.bf16 %v2533, %v2533
        %v2570 = vpack.c.bf16 %v2534, %v2534
        %v2571 = vpack.c.bf16 %v2535, %v2535
        %v2572 = vpack.c.bf16 %v2536, %v2536
        %v2573 = vpack.c.bf16 %v2537, %v2537
        %v2574 = vpack.c.bf16 %v2538, %v2538
        %v2575 = vpack.c.bf16 %v2539, %v2539
        %v2576 = vpack.c.bf16 %v2540, %v2540
        %v2577 = vpack.c.bf16 %v2541, %v2541
        %v2578 = vpack.c.bf16 %v2542, %v2542
        %v2579 = vpack.c.bf16 %v2543, %v2543
        %v2580 = vpack.c.bf16 %v2544, %v2544
        %v2581 = vpack.c.bf16 %v2545, %v2545
        %v2582 = vpack.c.bf16 %v2546, %v2546
        %v2583 = vpack.c.bf16 %v2547, %v2547
        %v2584 = vpack.c.bf16 %v2548, %v2548
        %v2585 = vpack.c.bf16 %v2549, %v2549
        %v2586 = vpack.c.bf16 %v2550, %v2550
        %v2587 = vpack.c.bf16 %v2551, %v2551
        %v2588 = vpack.c.bf16 %v2552, %v2552
        %v2621 = vunpack.c.l.b16 %v2409
        %v2622 = vunpack.c.l.b16 %v2410
        %v2623 = vunpack.c.l.b16 %v2411
        %v2624 = vunpack.c.l.b16 %v2412
        %v2625 = vunpack.c.l.b16 %v2413
        %v2626 = vunpack.c.l.b16 %v2414
        %v2627 = vunpack.c.l.b16 %v2415
        %v2628 = vunpack.c.l.b16 %v2416
        %v2629 = vunpack.c.l.b16 %v2417
        %v2630 = vunpack.c.l.b16 %v2418
        %v2631 = vunpack.c.l.b16 %v2419
        %v2632 = vunpack.c.l.b16 %v2420
        %v2633 = vunpack.c.l.b16 %v2421
        %v2634 = vunpack.c.l.b16 %v2422
        %v2635 = vunpack.c.l.b16 %v2423
        %v2636 = vunpack.c.l.b16 %v2424
        %v2637 = vunpack.c.l.b16 %v2425
        %v2638 = vunpack.c.l.b16 %v2426
        %v2639 = vunpack.c.l.b16 %v2427
        %v2640 = vunpack.c.l.b16 %v2428
        %v2641 = vunpack.c.l.b16 %v2429
        %v2642 = vunpack.c.l.b16 %v2430
        %v2643 = vunpack.c.l.b16 %v2431
        %v2644 = vunpack.c.l.b16 %v2432
        %v2645 = vunpack.c.l.b16 %v2433
        %v2646 = vunpack.c.l.b16 %v2434
        %v2647 = vunpack.c.l.b16 %v2435
        %v2648 = vunpack.c.l.b16 %v2436
        %v2649 = vunpack.c.l.b16 %v2437
        %v2650 = vunpack.c.l.b16 %v2438
        %v2651 = vunpack.c.l.b16 %v2439
        %v2652 = vunpack.c.l.b16 %v2440
        %v2653 = vpack.c.b16 %v2622, %v2621
        %v2654 = vpack.c.b16 %v2624, %v2623
        %v2655 = vpack.c.b16 %v2626, %v2625
        %v2656 = vpack.c.b16 %v2628, %v2627
        %v2657 = vpack.c.b16 %v2630, %v2629
        %v2658 = vpack.c.b16 %v2632, %v2631
        %v2659 = vpack.c.b16 %v2634, %v2633
        %v2660 = vpack.c.b16 %v2636, %v2635
        %v2661 = vpack.c.b16 %v2638, %v2637
        %v2662 = vpack.c.b16 %v2640, %v2639
        %v2663 = vpack.c.b16 %v2642, %v2641
        %v2664 = vpack.c.b16 %v2644, %v2643
        %v2665 = vpack.c.b16 %v2646, %v2645
        %v2666 = vpack.c.b16 %v2648, %v2647
        %v2667 = vpack.c.b16 %v2650, %v2649
        %v2668 = vpack.c.b16 %v2652, %v2651
        %v2717 = vunpack.c.l.b16 %v2481
        %v2718 = vunpack.c.l.b16 %v2482
        %v2719 = vunpack.c.l.b16 %v2483
        %v2720 = vunpack.c.l.b16 %v2484
        %v2721 = vunpack.c.l.b16 %v2485
        %v2722 = vunpack.c.l.b16 %v2486
        %v2723 = vunpack.c.l.b16 %v2487
        %v2724 = vunpack.c.l.b16 %v2488
        %v2725 = vunpack.c.l.b16 %v2489
        %v2726 = vunpack.c.l.b16 %v2490
        %v2727 = vunpack.c.l.b16 %v2491
        %v2728 = vunpack.c.l.b16 %v2492
        %v2729 = vunpack.c.l.b16 %v2493
        %v2730 = vunpack.c.l.b16 %v2494
        %v2731 = vunpack.c.l.b16 %v2495
        %v2732 = vunpack.c.l.b16 %v2496
        %v2733 = vunpack.c.l.b16 %v2497
        %v2734 = vunpack.c.l.b16 %v2498
        %v2735 = vunpack.c.l.b16 %v2499
        %v2736 = vunpack.c.l.b16 %v2500
        %v2737 = vunpack.c.l.b16 %v2501
        %v2738 = vunpack.c.l.b16 %v2502
        %v2739 = vunpack.c.l.b16 %v2503
        %v2740 = vunpack.c.l.b16 %v2504
        %v2741 = vunpack.c.l.b16 %v2505
        %v2742 = vunpack.c.l.b16 %v2506
        %v2743 = vunpack.c.l.b16 %v2507
        %v2744 = vunpack.c.l.b16 %v2508
        %v2745 = vunpack.c.l.b16 %v2509
        %v2746 = vunpack.c.l.b16 %v2510
        %v2747 = vunpack.c.l.b16 %v2511
        %v2748 = vunpack.c.l.b16 %v2512
        %v2749 = vpack.c.b16 %v2718, %v2717
        %v2750 = vpack.c.b16 %v2720, %v2719
        %v2751 = vpack.c.b16 %v2722, %v2721
        %v2752 = vpack.c.b16 %v2724, %v2723
        %v2753 = vpack.c.b16 %v2726, %v2725
        %v2754 = vpack.c.b16 %v2728, %v2727
        %v2755 = vpack.c.b16 %v2730, %v2729
        %v2756 = vpack.c.b16 %v2732, %v2731
        %v2757 = vpack.c.b16 %v2734, %v2733
        %v2758 = vpack.c.b16 %v2736, %v2735
        %v2759 = vpack.c.b16 %v2738, %v2737
        %v2760 = vpack.c.b16 %v2740, %v2739
        %v2761 = vpack.c.b16 %v2742, %v2741
        %v2762 = vpack.c.b16 %v2744, %v2743
        %v2763 = vpack.c.b16 %v2746, %v2745
        %v2764 = vpack.c.b16 %v2748, %v2747
        %v2813 = vunpack.c.l.b16 %v2553
        %v2814 = vunpack.c.l.b16 %v2554
        %v2815 = vunpack.c.l.b16 %v2555
        %v2816 = vunpack.c.l.b16 %v2556
        %v2817 = vunpack.c.l.b16 %v2557
        %v2818 = vunpack.c.l.b16 %v2558
        %v2819 = vunpack.c.l.b16 %v2559
        %v2820 = vunpack.c.l.b16 %v2560
        %v2821 = vunpack.c.l.b16 %v2561
        %v2822 = vunpack.c.l.b16 %v2562
        %v2823 = vunpack.c.l.b16 %v2563
        %v2824 = vunpack.c.l.b16 %v2564
        %v2825 = vunpack.c.l.b16 %v2565
        %v2826 = vunpack.c.l.b16 %v2566
        %v2827 = vunpack.c.l.b16 %v2567
        %v2828 = vunpack.c.l.b16 %v2568
        %v2829 = vunpack.c.l.b16 %v2569
        %v2830 = vunpack.c.l.b16 %v2570
        %v2831 = vunpack.c.l.b16 %v2571
        %v2832 = vunpack.c.l.b16 %v2572
        %v2833 = vunpack.c.l.b16 %v2573
        %v2834 = vunpack.c.l.b16 %v2574
        %v2835 = vunpack.c.l.b16 %v2575
        %v2836 = vunpack.c.l.b16 %v2576
        %v2837 = vunpack.c.l.b16 %v2577
        %v2838 = vunpack.c.l.b16 %v2578
        %v2839 = vunpack.c.l.b16 %v2579
        %v2840 = vunpack.c.l.b16 %v2580
        %v2841 = vunpack.c.l.b16 %v2581
        %v2842 = vunpack.c.l.b16 %v2582
        %v2843 = vunpack.c.l.b16 %v2583
        %v2844 = vunpack.c.l.b16 %v2584
        %v2845 = vpack.c.b16 %v2814, %v2813
        %v2846 = vpack.c.b16 %v2816, %v2815
        %v2847 = vpack.c.b16 %v2818, %v2817
        %v2848 = vpack.c.b16 %v2820, %v2819
        %v2849 = vpack.c.b16 %v2822, %v2821
        %v2850 = vpack.c.b16 %v2824, %v2823
        %v2851 = vpack.c.b16 %v2826, %v2825
        %v2852 = vpack.c.b16 %v2828, %v2827
        %v2853 = vpack.c.b16 %v2830, %v2829
        %v2854 = vpack.c.b16 %v2832, %v2831
        %v2855 = vpack.c.b16 %v2834, %v2833
        %v2856 = vpack.c.b16 %v2836, %v2835
        %v2857 = vpack.c.b16 %v2838, %v2837
        %v2858 = vpack.c.b16 %v2840, %v2839
        %v2859 = vpack.c.b16 %v2842, %v2841
        %v2860 = vpack.c.b16 %v2844, %v2843
        %v2879 = vunpack.c.l.b16 %v2441
        %v2880 = vunpack.c.l.b16 %v2442
        %v2881 = vpack.c.b16 %v2880, %v2879
        %v2885 = vunpack.c.l.b16 %v2513
        %v2886 = vunpack.c.l.b16 %v2514
        %v2887 = vpack.c.b16 %v2886, %v2885
        %v2891 = vunpack.c.l.b16 %v2585
        %v2892 = vunpack.c.l.b16 %v2586
        %v2893 = vpack.c.b16 %v2892, %v2891
        %v2897 = vunpack.c.l.b16 %v2443
        %v2898 = vunpack.c.l.b16 %v2444
        %v2899 = vpack.c.b16 %v2898, %v2897
        %v2903 = vunpack.c.l.b16 %v2515
        %v2904 = vunpack.c.l.b16 %v2516
        %v2905 = vpack.c.b16 %v2904, %v2903
        %v2909 = vunpack.c.l.b16 %v2587
        %v2910 = vunpack.c.l.b16 %v2588
        %v2911 = vpack.c.b16 %v2910, %v2909
        %v2913 = vld [vmem:[#allocation8] sm:$0xf]
        %v2914 = vld [vmem:[#allocation8 + $0x4] sm:$0xf]
        %v2915 = vld [vmem:[#allocation8 + $0x8] sm:$0xf]
        %v2916 = vld [vmem:[#allocation8 + $0xc] sm:$0xf]
        %v2917 = vld [vmem:[#allocation8 + $0x10] sm:$0xf]
        %v2918 = vld [vmem:[#allocation8 + $0x14] sm:$0xf]
        %v2919 = vld [vmem:[#allocation8 + $0x18] sm:$0xf]
        %v2920 = vld [vmem:[#allocation8 + $0x1c] sm:$0xf]
        %v2921 = vld [vmem:[#allocation8 + $0x20] sm:$0xf]
        %v2922 = vld [vmem:[#allocation8 + $0x24] sm:$0xf]
        %v2923 = vld [vmem:[#allocation8 + $0x28] sm:$0xf]
        %v2924 = vld [vmem:[#allocation8 + $0x2c] sm:$0xf]
        %v2925 = vld [vmem:[#allocation8 + $0x30] sm:$0xf]
        %v2926 = vld [vmem:[#allocation8 + $0x34] sm:$0xf]
        %v2927 = vld [vmem:[#allocation8 + $0x38] sm:$0xf]
        %v2928 = vld [vmem:[#allocation8 + $0x3c] sm:$0xf]
        %v2929 = vld [vmem:[#allocation8 + $0x40] sm:$0xf]
        %v2930 = vld [vmem:[#allocation8 + $0x44] sm:$0xf]
        %v2931 = vld [vmem:[#allocation8 + $0x48] sm:$0xf]
        %v2932 = vld [vmem:[#allocation8 + $0x4c] sm:$0xf]
        %v2933 = vld [vmem:[#allocation8 + $0x50] sm:$0xf]
        %v2934 = vld [vmem:[#allocation8 + $0x54] sm:$0xf]
        %v2935 = vld [vmem:[#allocation8 + $0x58] sm:$0xf]
        %v2936 = vld [vmem:[#allocation8 + $0x5c] sm:$0xf]
        %v2937 = vld [vmem:[#allocation8 + $0x60] sm:$0xf]
        %v2938 = vld [vmem:[#allocation8 + $0x64] sm:$0xf]
        %v2939 = vld [vmem:[#allocation8 + $0x68] sm:$0xf]
        %v2940 = vld [vmem:[#allocation8 + $0x6c] sm:$0xf]
        %v2941 = vld [vmem:[#allocation8 + $0x70] sm:$0xf]
        %v2942 = vld [vmem:[#allocation8 + $0x74] sm:$0xf]
        %v2943 = vld [vmem:[#allocation8 + $0x78] sm:$0xf]
        %v2944 = vld [vmem:[#allocation8 + $0x7c] sm:$0xf]
        %v2945 = vld [vmem:[#allocation8 + $0x80] sm:$0xf]
        %v2946 = vld [vmem:[#allocation8 + $0x84] sm:$0xf]
        %v2947 = vld [vmem:[#allocation8 + $0x88] sm:$0xf]
        %v2948 = vld [vmem:[#allocation8 + $0x8c] sm:$0xf]
        %v2949 = vld [vmem:[#allocation8 + $0x90] sm:$0xf]
        %v2950 = vld [vmem:[#allocation8 + $0x94] sm:$0xf]
        %v2951 = vld [vmem:[#allocation8 + $0x98] sm:$0xf]
        %v2952 = vld [vmem:[#allocation8 + $0x9c] sm:$0xf]
        %v2953 = vld [vmem:[#allocation8 + $0xa0] sm:$0xf]
        %v2954 = vld [vmem:[#allocation8 + $0xa4] sm:$0xf]
        %v2955 = vld [vmem:[#allocation8 + $0xa8] sm:$0xf]
        %v2956 = vld [vmem:[#allocation8 + $0xac] sm:$0xf]
        %v2957 = vld [vmem:[#allocation8 + $0xb0] sm:$0xf]
        %v2958 = vld [vmem:[#allocation8 + $0xb4] sm:$0xf]
        %v2959 = vld [vmem:[#allocation8 + $0xb8] sm:$0xf]
        %v2960 = vld [vmem:[#allocation8 + $0xbc] sm:$0xf]
        %v2961 = vld [vmem:[#allocation8 + $0xc0] sm:$0xf]
        %v2962 = vld [vmem:[#allocation8 + $0xc4] sm:$0xf]
        %v2963 = vld [vmem:[#allocation8 + $0xc8] sm:$0xf]
        %v2964 = vld [vmem:[#allocation8 + $0xcc] sm:$0xf]
        %v2965 = vld [vmem:[#allocation8 + $0xd0] sm:$0xf]
        %v2966 = vld [vmem:[#allocation8 + $0xd4] sm:$0xf]
        %v2967 = vld [vmem:[#allocation8 + $0xd8] sm:$0xf]
        %v2968 = vld [vmem:[#allocation8 + $0xdc] sm:$0xf]
        %v2969 = vld [vmem:[#allocation8 + $0xe0] sm:$0xf]
        %v2970 = vld [vmem:[#allocation8 + $0xe4] sm:$0xf]
        %v2971 = vld [vmem:[#allocation8 + $0xe8] sm:$0xf]
        %v2972 = vld [vmem:[#allocation8 + $0xec] sm:$0xf]
        %v2973 = vld [vmem:[#allocation8 + $0xf0] sm:$0xf]
        %v2974 = vld [vmem:[#allocation8 + $0xf4] sm:$0xf]
        %v2975 = vld [vmem:[#allocation8 + $0xf8] sm:$0xf]
        %v2976 = vld [vmem:[#allocation8 + $0xfc] sm:$0xf]
        %v2977 = vld [vmem:[#allocation8 + $0x100] sm:$0xf]
        %v2978 = vld [vmem:[#allocation8 + $0x104] sm:$0xf]
        %v2979 = vld [vmem:[#allocation8 + $0x108] sm:$0xf]
        %v2980 = vld [vmem:[#allocation8 + $0x10c] sm:$0xf]
        %v2981 = vld [vmem:[#allocation8 + $0x110] sm:$0xf]
        %v2982 = vld [vmem:[#allocation8 + $0x114] sm:$0xf]
        %v2983 = vld [vmem:[#allocation8 + $0x118] sm:$0xf]
        %v2984 = vld [vmem:[#allocation8 + $0x11c] sm:$0xf]
        %v2985 = vld [vmem:[#allocation8 + $0x120] sm:$0xf]
        %v2986 = vld [vmem:[#allocation8 + $0x124] sm:$0xf]
        %v2987 = vld [vmem:[#allocation8 + $0x128] sm:$0xf]
        %v2988 = vld [vmem:[#allocation8 + $0x12c] sm:$0xf]
        %v2989 = vld [vmem:[#allocation8 + $0x130] sm:$0xf]
        %v2990 = vld [vmem:[#allocation8 + $0x134] sm:$0xf]
        %v2991 = vld [vmem:[#allocation8 + $0x138] sm:$0xf]
        %v2992 = vld [vmem:[#allocation8 + $0x13c] sm:$0xf]
        %v2993 = vld [vmem:[#allocation8 + $0x140] sm:$0xf]
        %v2994 = vld [vmem:[#allocation8 + $0x144] sm:$0xf]
        %v2995 = vld [vmem:[#allocation8 + $0x148] sm:$0xf]
        %v2996 = vld [vmem:[#allocation8 + $0x14c] sm:$0xf]
        %v2997 = vld [vmem:[#allocation8 + $0x150] sm:$0xf]
        %v2998 = vld [vmem:[#allocation8 + $0x154] sm:$0xf]
        %v2999 = vld [vmem:[#allocation8 + $0x158] sm:$0xf]
        %v3000 = vld [vmem:[#allocation8 + $0x15c] sm:$0xf]
        %v3001 = vld [vmem:[#allocation8 + $0x160] sm:$0xf]
        %v3002 = vld [vmem:[#allocation8 + $0x164] sm:$0xf]
        %v3003 = vld [vmem:[#allocation8 + $0x168] sm:$0xf]
        %v3004 = vld [vmem:[#allocation8 + $0x16c] sm:$0xf]
        %v3005 = vld [vmem:[#allocation8 + $0x170] sm:$0xf]
        %v3006 = vld [vmem:[#allocation8 + $0x174] sm:$0xf]
        %v3007 = vld [vmem:[#allocation8 + $0x178] sm:$0xf]
        %v3008 = vld [vmem:[#allocation8 + $0x17c] sm:$0xf]
        %v3009 = vld [vmem:[#allocation8 + $0x180] sm:$0xf]
        %v3010 = vld [vmem:[#allocation8 + $0x184] sm:$0xf]
        %v3011 = vld [vmem:[#allocation8 + $0x188] sm:$0xf]
        %v3012 = vld [vmem:[#allocation8 + $0x18c] sm:$0xf]
        %v3013 = vld [vmem:[#allocation8 + $0x190] sm:$0xf]
        %v3014 = vld [vmem:[#allocation8 + $0x194] sm:$0xf]
        %v3015 = vld [vmem:[#allocation8 + $0x198] sm:$0xf]
        %v3016 = vld [vmem:[#allocation8 + $0x19c] sm:$0xf]
        %v3017 = vld [vmem:[#allocation8 + $0x1a0] sm:$0xf]
        %v3018 = vld [vmem:[#allocation8 + $0x1a4] sm:$0xf]
        %v3019 = vld [vmem:[#allocation8 + $0x1a8] sm:$0xf]
        %v3020 = vld [vmem:[#allocation8 + $0x1ac] sm:$0xf]
        %v3021 = vld [vmem:[#allocation8 + $0x1b0] sm:$0xf]
        %v3022 = vld [vmem:[#allocation8 + $0x1b4] sm:$0xf]
        %v3023 = vld [vmem:[#allocation8 + $0x1b8] sm:$0xf]
        %v3024 = vld [vmem:[#allocation8 + $0x1bc] sm:$0xf]
        %v3025 = vld [vmem:[#allocation8 + $0x1c0] sm:$0xf]
        %v3026 = vld [vmem:[#allocation8 + $0x1c4] sm:$0xf]
        %v3027 = vld [vmem:[#allocation8 + $0x1c8] sm:$0xf]
        %v3028 = vld [vmem:[#allocation8 + $0x1cc] sm:$0xf]
        %v3029 = vld [vmem:[#allocation8 + $0x1d0] sm:$0xf]
        %v3030 = vld [vmem:[#allocation8 + $0x1d4] sm:$0xf]
        %v3031 = vld [vmem:[#allocation8 + $0x1d8] sm:$0xf]
        %v3032 = vld [vmem:[#allocation8 + $0x1dc] sm:$0xf]
        %v3033 = vld [vmem:[#allocation8 + $0x1e0] sm:$0xf]
        %v3034 = vld [vmem:[#allocation8 + $0x1e4] sm:$0xf]
        %v3035 = vld [vmem:[#allocation8 + $0x1e8] sm:$0xf]
        %v3036 = vld [vmem:[#allocation8 + $0x1ec] sm:$0xf]
        %v3037 = vld [vmem:[#allocation8 + $0x1f0] sm:$0xf]
        %v3038 = vld [vmem:[#allocation8 + $0x1f4] sm:$0xf]
        %v3039 = vld [vmem:[#allocation8 + $0x1f8] sm:$0xf]
        %v3040 = vld [vmem:[#allocation8 + $0x1fc] sm:$0xf]
        %v3041 = vld [vmem:[#allocation8 + $0x200] sm:$0xf]
        %v3042 = vld [vmem:[#allocation8 + $0x204] sm:$0xf]
        %v3043 = vld [vmem:[#allocation8 + $0x208] sm:$0xf]
        %v3044 = vld [vmem:[#allocation8 + $0x20c] sm:$0xf]
        %v3045 = vld [vmem:[#allocation8 + $0x210] sm:$0xf]
        %v3046 = vld [vmem:[#allocation8 + $0x214] sm:$0xf]
        %v3047 = vld [vmem:[#allocation8 + $0x218] sm:$0xf]
        %v3048 = vld [vmem:[#allocation8 + $0x21c] sm:$0xf]
        %v3049 = vld [vmem:[#allocation8 + $0x220] sm:$0xf]
        %v3050 = vld [vmem:[#allocation8 + $0x224] sm:$0xf]
        %v3051 = vld [vmem:[#allocation8 + $0x228] sm:$0xf]
        %v3052 = vld [vmem:[#allocation8 + $0x22c] sm:$0xf]
        %v3053 = vld [vmem:[#allocation8 + $0x230] sm:$0xf]
        %v3054 = vld [vmem:[#allocation8 + $0x234] sm:$0xf]
        %v3055 = vld [vmem:[#allocation8 + $0x238] sm:$0xf]
        %v3056 = vld [vmem:[#allocation8 + $0x23c] sm:$0xf]
        %v3057 = vld [vmem:[%s4] sm:$0x1]
        %v3059 = vperm.slane %v3057, 0
        %v3205 = vunpack.c.l.b16 %v2913
        %v3206 = vunpack.c.l.b16 %v2914
        %v3207 = vunpack.c.l.b16 %v2915
        %v3208 = vunpack.c.l.b16 %v2916
        %v3209 = vunpack.c.l.b16 %v2917
        %v3210 = vunpack.c.l.b16 %v2918
        %v3211 = vunpack.c.l.b16 %v2919
        %v3212 = vunpack.c.l.b16 %v2920
        %v3213 = vunpack.c.l.b16 %v2921
        %v3214 = vunpack.c.l.b16 %v2922
        %v3215 = vunpack.c.l.b16 %v2923
        %v3216 = vunpack.c.l.b16 %v2924
        %v3217 = vunpack.c.l.b16 %v2925
        %v3218 = vunpack.c.l.b16 %v2926
        %v3219 = vunpack.c.l.b16 %v2927
        %v3220 = vunpack.c.l.b16 %v2928
        %v3221 = vunpack.c.l.b16 %v2929
        %v3222 = vunpack.c.l.b16 %v2930
        %v3223 = vunpack.c.l.b16 %v2931
        %v3224 = vunpack.c.l.b16 %v2932
        %v3225 = vunpack.c.l.b16 %v2933
        %v3226 = vunpack.c.l.b16 %v2934
        %v3227 = vunpack.c.l.b16 %v2935
        %v3228 = vunpack.c.l.b16 %v2936
        %v3229 = vunpack.c.l.b16 %v2937
        %v3230 = vunpack.c.l.b16 %v2938
        %v3231 = vunpack.c.l.b16 %v2939
        %v3232 = vunpack.c.l.b16 %v2940
        %v3233 = vunpack.c.l.b16 %v2941
        %v3234 = vunpack.c.l.b16 %v2942
        %v3235 = vunpack.c.l.b16 %v2943
        %v3236 = vunpack.c.l.b16 %v2944
        %v3237 = vunpack.c.l.b16 %v2945
        %v3238 = vunpack.c.l.b16 %v2946
        %v3239 = vunpack.c.l.b16 %v2947
        %v3240 = vunpack.c.l.b16 %v2948
        %v3241 = vunpack.c.l.b16 %v2949
        %v3242 = vunpack.c.l.b16 %v2950
        %v3243 = vunpack.c.l.b16 %v2951
        %v3244 = vunpack.c.l.b16 %v2952
        %v3245 = vunpack.c.l.b16 %v2953
        %v3246 = vunpack.c.l.b16 %v2954
        %v3247 = vunpack.c.l.b16 %v2955
        %v3248 = vunpack.c.l.b16 %v2956
        %v3249 = vunpack.c.l.b16 %v2957
        %v3250 = vunpack.c.l.b16 %v2958
        %v3251 = vunpack.c.l.b16 %v2959
        %v3252 = vunpack.c.l.b16 %v2960
        %v3253 = vunpack.c.l.b16 %v2961
        %v3254 = vunpack.c.l.b16 %v2962
        %v3255 = vunpack.c.l.b16 %v2963
        %v3256 = vunpack.c.l.b16 %v2964
        %v3257 = vunpack.c.l.b16 %v2965
        %v3258 = vunpack.c.l.b16 %v2966
        %v3259 = vunpack.c.l.b16 %v2967
        %v3260 = vunpack.c.l.b16 %v2968
        %v3261 = vunpack.c.l.b16 %v2969
        %v3262 = vunpack.c.l.b16 %v2970
        %v3263 = vunpack.c.l.b16 %v2971
        %v3264 = vunpack.c.l.b16 %v2972
        %v3265 = vunpack.c.l.b16 %v2973
        %v3266 = vunpack.c.l.b16 %v2974
        %v3267 = vunpack.c.l.b16 %v2975
        %v3268 = vunpack.c.l.b16 %v2976
        %v3269 = vunpack.c.l.b16 %v2977
        %v3270 = vunpack.c.l.b16 %v2978
        %v3271 = vunpack.c.l.b16 %v2979
        %v3272 = vunpack.c.l.b16 %v2980
        %v3273 = vunpack.c.l.b16 %v2981
        %v3274 = vunpack.c.l.b16 %v2982
        %v3275 = vunpack.c.l.b16 %v2983
        %v3276 = vunpack.c.l.b16 %v2984
        %v3277 = vunpack.c.l.b16 %v2985
        %v3278 = vunpack.c.l.b16 %v2986
        %v3279 = vunpack.c.l.b16 %v2987
        %v3280 = vunpack.c.l.b16 %v2988
        %v3281 = vunpack.c.l.b16 %v2989
        %v3282 = vunpack.c.l.b16 %v2990
        %v3283 = vunpack.c.l.b16 %v2991
        %v3284 = vunpack.c.l.b16 %v2992
        %v3285 = vunpack.c.l.b16 %v2993
        %v3286 = vunpack.c.l.b16 %v2994
        %v3287 = vunpack.c.l.b16 %v2995
        %v3288 = vunpack.c.l.b16 %v2996
        %v3289 = vunpack.c.l.b16 %v2997
        %v3290 = vunpack.c.l.b16 %v2998
        %v3291 = vunpack.c.l.b16 %v2999
        %v3292 = vunpack.c.l.b16 %v3000
        %v3293 = vunpack.c.l.b16 %v3001
        %v3294 = vunpack.c.l.b16 %v3002
        %v3295 = vunpack.c.l.b16 %v3003
        %v3296 = vunpack.c.l.b16 %v3004
        %v3297 = vunpack.c.l.b16 %v3005
        %v3298 = vunpack.c.l.b16 %v3006
        %v3299 = vunpack.c.l.b16 %v3007
        %v3300 = vunpack.c.l.b16 %v3008
        %v3301 = vunpack.c.l.b16 %v3009
        %v3302 = vunpack.c.l.b16 %v3010
        %v3303 = vunpack.c.l.b16 %v3011
        %v3304 = vunpack.c.l.b16 %v3012
        %v3305 = vunpack.c.l.b16 %v3013
        %v3306 = vunpack.c.l.b16 %v3014
        %v3307 = vunpack.c.l.b16 %v3015
        %v3308 = vunpack.c.l.b16 %v3016
        %v3309 = vunpack.c.l.b16 %v3017
        %v3310 = vunpack.c.l.b16 %v3018
        %v3311 = vunpack.c.l.b16 %v3019
        %v3312 = vunpack.c.l.b16 %v3020
        %v3313 = vunpack.c.l.b16 %v3021
        %v3314 = vunpack.c.l.b16 %v3022
        %v3315 = vunpack.c.l.b16 %v3023
        %v3316 = vunpack.c.l.b16 %v3024
        %v3317 = vunpack.c.l.b16 %v3025
        %v3318 = vunpack.c.l.b16 %v3026
        %v3319 = vunpack.c.l.b16 %v3027
        %v3320 = vunpack.c.l.b16 %v3028
        %v3321 = vunpack.c.l.b16 %v3029
        %v3322 = vunpack.c.l.b16 %v3030
        %v3323 = vunpack.c.l.b16 %v3031
        %v3324 = vunpack.c.l.b16 %v3032
        %v3325 = vunpack.c.l.b16 %v3033
        %v3326 = vunpack.c.l.b16 %v3034
        %v3327 = vunpack.c.l.b16 %v3035
        %v3328 = vunpack.c.l.b16 %v3036
        %v3329 = vunpack.c.l.b16 %v3037
        %v3330 = vunpack.c.l.b16 %v3038
        %v3331 = vunpack.c.l.b16 %v3039
        %v3332 = vunpack.c.l.b16 %v3040
        %v3333 = vunpack.c.l.b16 %v3041
        %v3334 = vunpack.c.l.b16 %v3042
        %v3335 = vunpack.c.l.b16 %v3043
        %v3336 = vunpack.c.l.b16 %v3044
        %v3337 = vunpack.c.l.b16 %v3045
        %v3338 = vunpack.c.l.b16 %v3046
        %v3339 = vunpack.c.l.b16 %v3047
        %v3340 = vunpack.c.l.b16 %v3048
        %v3341 = vunpack.c.l.b16 %v3049
        %v3342 = vunpack.c.l.b16 %v3050
        %v3343 = vunpack.c.l.b16 %v3051
        %v3344 = vunpack.c.l.b16 %v3052
        %v3345 = vunpack.c.l.b16 %v3053
        %v3346 = vunpack.c.l.b16 %v3054
        %v3347 = vunpack.c.l.b16 %v3055
        %v3348 = vunpack.c.l.b16 %v3056
        %v3349 = vpack.c.b16 %v3206, %v3205
        %v3350 = vpack.c.b16 %v3208, %v3207
        %v3351 = vpack.c.b16 %v3210, %v3209
        %v3352 = vpack.c.b16 %v3212, %v3211
        %v3353 = vpack.c.b16 %v3214, %v3213
        %v3354 = vpack.c.b16 %v3216, %v3215
        %v3355 = vpack.c.b16 %v3218, %v3217
        %v3356 = vpack.c.b16 %v3220, %v3219
        %v3357 = vpack.c.b16 %v3222, %v3221
        %v3358 = vpack.c.b16 %v3224, %v3223
        %v3359 = vpack.c.b16 %v3226, %v3225
        %v3360 = vpack.c.b16 %v3228, %v3227
        %v3361 = vpack.c.b16 %v3230, %v3229
        %v3362 = vpack.c.b16 %v3232, %v3231
        %v3363 = vpack.c.b16 %v3234, %v3233
        %v3364 = vpack.c.b16 %v3236, %v3235
        %v3365 = vpack.c.b16 %v3238, %v3237
        %v3366 = vpack.c.b16 %v3240, %v3239
        %v3367 = vpack.c.b16 %v3242, %v3241
        %v3368 = vpack.c.b16 %v3244, %v3243
        %v3369 = vpack.c.b16 %v3246, %v3245
        %v3370 = vpack.c.b16 %v3248, %v3247
        %v3371 = vpack.c.b16 %v3250, %v3249
        %v3372 = vpack.c.b16 %v3252, %v3251
        %v3373 = vpack.c.b16 %v3254, %v3253
        %v3374 = vpack.c.b16 %v3256, %v3255
        %v3375 = vpack.c.b16 %v3258, %v3257
        %v3376 = vpack.c.b16 %v3260, %v3259
        %v3377 = vpack.c.b16 %v3262, %v3261
        %v3378 = vpack.c.b16 %v3264, %v3263
        %v3379 = vpack.c.b16 %v3266, %v3265
        %v3380 = vpack.c.b16 %v3268, %v3267
        %v3381 = vpack.c.b16 %v3270, %v3269
        %v3382 = vpack.c.b16 %v3272, %v3271
        %v3383 = vpack.c.b16 %v3274, %v3273
        %v3384 = vpack.c.b16 %v3276, %v3275
        %v3385 = vpack.c.b16 %v3278, %v3277
        %v3386 = vpack.c.b16 %v3280, %v3279
        %v3387 = vpack.c.b16 %v3282, %v3281
        %v3388 = vpack.c.b16 %v3284, %v3283
        %v3389 = vpack.c.b16 %v3286, %v3285
        %v3390 = vpack.c.b16 %v3288, %v3287
        %v3391 = vpack.c.b16 %v3290, %v3289
        %v3392 = vpack.c.b16 %v3292, %v3291
        %v3393 = vpack.c.b16 %v3294, %v3293
        %v3394 = vpack.c.b16 %v3296, %v3295
        %v3395 = vpack.c.b16 %v3298, %v3297
        %v3396 = vpack.c.b16 %v3300, %v3299
        %v3397 = vpack.c.b16 %v3302, %v3301
        %v3398 = vpack.c.b16 %v3304, %v3303
        %v3399 = vpack.c.b16 %v3306, %v3305
        %v3400 = vpack.c.b16 %v3308, %v3307
        %v3401 = vpack.c.b16 %v3310, %v3309
        %v3402 = vpack.c.b16 %v3312, %v3311
        %v3403 = vpack.c.b16 %v3314, %v3313
        %v3404 = vpack.c.b16 %v3316, %v3315
        %v3405 = vpack.c.b16 %v3318, %v3317
        %v3406 = vpack.c.b16 %v3320, %v3319
        %v3407 = vpack.c.b16 %v3322, %v3321
        %v3408 = vpack.c.b16 %v3324, %v3323
        %v3409 = vpack.c.b16 %v3326, %v3325
        %v3410 = vpack.c.b16 %v3328, %v3327
        %v3411 = vpack.c.b16 %v3330, %v3329
        %v3412 = vpack.c.b16 %v3332, %v3331
        %v3413 = vpack.c.b16 %v3334, %v3333
        %v3414 = vpack.c.b16 %v3336, %v3335
        %v3415 = vpack.c.b16 %v3338, %v3337
        %v3416 = vpack.c.b16 %v3340, %v3339
        %v3417 = vpack.c.b16 %v3342, %v3341
        %v3418 = vpack.c.b16 %v3344, %v3343
        %v3419 = vpack.c.b16 %v3346, %v3345
        %v3420 = vpack.c.b16 %v3348, %v3347
        %3493 = vmatpush.bf16.msra.mxu0 %v3356
        %3494 = vmatpush.bf16.msra.mxu0 %v3355
        %3495 = vmatpush.bf16.msra.mxu0 %v3354
        %3496 = vmatpush.bf16.msra.mxu0 %v3353
        %3497 = vmatpush.bf16.msra.mxu0 %v3352
        %3498 = vmatpush.bf16.msra.mxu0 %v3351
        %3499 = vmatpush.bf16.msra.mxu0 %v3350
        %3500 = vmatpush.bf16.msra.mxu0 %v3349
        %3501 = vmatmul.bf16.gmra.mxu0 %v2653
        %v3502 = vpop.f32.mrf.mxu0
        %v3503 = vadd.f32 %v3059, %v3502
        %v3504 = vpop.f32.mrf.mxu0
        %v3505 = vadd.f32 %v3059, %v3504
        %3506 = vmatmul.bf16.gmra.mxu0 %v2654
        %v3507 = vpop.f32.mrf.mxu0
        %v3508 = vadd.f32 %v3059, %v3507
        %v3509 = vpop.f32.mrf.mxu0
        %v3510 = vadd.f32 %v3059, %v3509
        %3511 = vmatmul.bf16.gmra.mxu0 %v2655
        %v3512 = vpop.f32.mrf.mxu0
        %v3513 = vadd.f32 %v3059, %v3512
        %v3514 = vpop.f32.mrf.mxu0
        %v3515 = vadd.f32 %v3059, %v3514
        %3516 = vmatmul.bf16.gmra.mxu0 %v2656
        %v3517 = vpop.f32.mrf.mxu0
        %v3518 = vadd.f32 %v3059, %v3517
        %v3519 = vpop.f32.mrf.mxu0
        %v3520 = vadd.f32 %v3059, %v3519
        %3521 = vmatmul.bf16.gmra.mxu0 %v2657
        %v3522 = vpop.f32.mrf.mxu0
        %v3523 = vadd.f32 %v3059, %v3522
        %v3524 = vpop.f32.mrf.mxu0
        %v3525 = vadd.f32 %v3059, %v3524
        %3526 = vmatmul.bf16.gmra.mxu0 %v2658
        %v3527 = vpop.f32.mrf.mxu0
        %v3528 = vadd.f32 %v3059, %v3527
        %v3529 = vpop.f32.mrf.mxu0
        %v3530 = vadd.f32 %v3059, %v3529
        %3531 = vmatmul.bf16.gmra.mxu0 %v2659
        %v3532 = vpop.f32.mrf.mxu0
        %v3533 = vadd.f32 %v3059, %v3532
        %v3534 = vpop.f32.mrf.mxu0
        %v3535 = vadd.f32 %v3059, %v3534
        %3536 = vmatmul.bf16.gmra.mxu0 %v2660
        %v3537 = vpop.f32.mrf.mxu0
        %v3538 = vadd.f32 %v3059, %v3537
        %v3539 = vpop.f32.mrf.mxu0
        %v3540 = vadd.f32 %v3059, %v3539
        %3541 = vmatmul.bf16.gmra.mxu0 %v2661
        %v3542 = vpop.f32.mrf.mxu0
        %v3543 = vadd.f32 %v3059, %v3542
        %v3544 = vpop.f32.mrf.mxu0
        %v3545 = vadd.f32 %v3059, %v3544
        %3546 = vmatmul.bf16.gmra.mxu0 %v2662
        %v3547 = vpop.f32.mrf.mxu0
        %v3548 = vadd.f32 %v3059, %v3547
        %v3549 = vpop.f32.mrf.mxu0
        %v3550 = vadd.f32 %v3059, %v3549
        %3551 = vmatmul.bf16.gmra.mxu0 %v2663
        %v3552 = vpop.f32.mrf.mxu0
        %v3553 = vadd.f32 %v3059, %v3552
        %v3554 = vpop.f32.mrf.mxu0
        %v3555 = vadd.f32 %v3059, %v3554
        %3556 = vmatmul.bf16.gmra.mxu0 %v2664
        %v3557 = vpop.f32.mrf.mxu0
        %v3558 = vadd.f32 %v3059, %v3557
        %v3559 = vpop.f32.mrf.mxu0
        %v3560 = vadd.f32 %v3059, %v3559
        %3561 = vmatmul.bf16.gmra.mxu0 %v2665
        %v3562 = vpop.f32.mrf.mxu0
        %v3563 = vadd.f32 %v3059, %v3562
        %v3564 = vpop.f32.mrf.mxu0
        %v3565 = vadd.f32 %v3059, %v3564
        %3566 = vmatmul.bf16.gmra.mxu0 %v2666
        %v3567 = vpop.f32.mrf.mxu0
        %v3568 = vadd.f32 %v3059, %v3567
        %v3569 = vpop.f32.mrf.mxu0
        %v3570 = vadd.f32 %v3059, %v3569
        %3571 = vmatmul.bf16.gmra.mxu0 %v2667
        %v3572 = vpop.f32.mrf.mxu0
        %v3573 = vadd.f32 %v3059, %v3572
        %v3574 = vpop.f32.mrf.mxu0
        %v3575 = vadd.f32 %v3059, %v3574
        %3576 = vmatmul.bf16.gmra.mxu0 %v2668
        %v3577 = vpop.f32.mrf.mxu0
        %v3578 = vadd.f32 %v3059, %v3577
        %v3579 = vpop.f32.mrf.mxu0
        %v3580 = vadd.f32 %v3059, %v3579
        %3581 = vdwg.mxu0
        %3582 = vmatpush.bf16.msra.mxu0 %v3364
        %3583 = vmatpush.bf16.msra.mxu0 %v3363
        %3584 = vmatpush.bf16.msra.mxu0 %v3362
        %3585 = vmatpush.bf16.msra.mxu0 %v3361
        %3586 = vmatpush.bf16.msra.mxu0 %v3360
        %3587 = vmatpush.bf16.msra.mxu0 %v3359
        %3588 = vmatpush.bf16.msra.mxu0 %v3358
        %3589 = vmatpush.bf16.msra.mxu0 %v3357
        %3590 = vmatmul.bf16.gmra.mxu0 %v2749
        %v3591 = vpop.f32.mrf.mxu0
        %v3592 = vadd.f32 %v3503, %v3591
        %v3593 = vpop.f32.mrf.mxu0
        %v3594 = vadd.f32 %v3505, %v3593
        %3595 = vmatmul.bf16.gmra.mxu0 %v2750
        %v3596 = vpop.f32.mrf.mxu0
        %v3597 = vadd.f32 %v3508, %v3596
        %v3598 = vpop.f32.mrf.mxu0
        %v3599 = vadd.f32 %v3510, %v3598
        %3600 = vmatmul.bf16.gmra.mxu0 %v2751
        %v3601 = vpop.f32.mrf.mxu0
        %v3602 = vadd.f32 %v3513, %v3601
        %v3603 = vpop.f32.mrf.mxu0
        %v3604 = vadd.f32 %v3515, %v3603
        %3605 = vmatmul.bf16.gmra.mxu0 %v2752
        %v3606 = vpop.f32.mrf.mxu0
        %v3607 = vadd.f32 %v3518, %v3606
        %v3608 = vpop.f32.mrf.mxu0
        %v3609 = vadd.f32 %v3520, %v3608
        %3610 = vmatmul.bf16.gmra.mxu0 %v2753
        %v3611 = vpop.f32.mrf.mxu0
        %v3612 = vadd.f32 %v3523, %v3611
        %v3613 = vpop.f32.mrf.mxu0
        %v3614 = vadd.f32 %v3525, %v3613
        %3615 = vmatmul.bf16.gmra.mxu0 %v2754
        %v3616 = vpop.f32.mrf.mxu0
        %v3617 = vadd.f32 %v3528, %v3616
        %v3618 = vpop.f32.mrf.mxu0
        %v3619 = vadd.f32 %v3530, %v3618
        %3620 = vmatmul.bf16.gmra.mxu0 %v2755
        %v3621 = vpop.f32.mrf.mxu0
        %v3622 = vadd.f32 %v3533, %v3621
        %v3623 = vpop.f32.mrf.mxu0
        %v3624 = vadd.f32 %v3535, %v3623
        %3625 = vmatmul.bf16.gmra.mxu0 %v2756
        %v3626 = vpop.f32.mrf.mxu0
        %v3627 = vadd.f32 %v3538, %v3626
        %v3628 = vpop.f32.mrf.mxu0
        %v3629 = vadd.f32 %v3540, %v3628
        %3630 = vmatmul.bf16.gmra.mxu0 %v2757
        %v3631 = vpop.f32.mrf.mxu0
        %v3632 = vadd.f32 %v3543, %v3631
        %v3633 = vpop.f32.mrf.mxu0
        %v3634 = vadd.f32 %v3545, %v3633
        %3635 = vmatmul.bf16.gmra.mxu0 %v2758
        %v3636 = vpop.f32.mrf.mxu0
        %v3637 = vadd.f32 %v3548, %v3636
        %v3638 = vpop.f32.mrf.mxu0
        %v3639 = vadd.f32 %v3550, %v3638
        %3640 = vmatmul.bf16.gmra.mxu0 %v2759
        %v3641 = vpop.f32.mrf.mxu0
        %v3642 = vadd.f32 %v3553, %v3641
        %v3643 = vpop.f32.mrf.mxu0
        %v3644 = vadd.f32 %v3555, %v3643
        %3645 = vmatmul.bf16.gmra.mxu0 %v2760
        %v3646 = vpop.f32.mrf.mxu0
        %v3647 = vadd.f32 %v3558, %v3646
        %v3648 = vpop.f32.mrf.mxu0
        %v3649 = vadd.f32 %v3560, %v3648
        %3650 = vmatmul.bf16.gmra.mxu0 %v2761
        %v3651 = vpop.f32.mrf.mxu0
        %v3652 = vadd.f32 %v3563, %v3651
        %v3653 = vpop.f32.mrf.mxu0
        %v3654 = vadd.f32 %v3565, %v3653
        %3655 = vmatmul.bf16.gmra.mxu0 %v2762
        %v3656 = vpop.f32.mrf.mxu0
        %v3657 = vadd.f32 %v3568, %v3656
        %v3658 = vpop.f32.mrf.mxu0
        %v3659 = vadd.f32 %v3570, %v3658
        %3660 = vmatmul.bf16.gmra.mxu0 %v2763
        %v3661 = vpop.f32.mrf.mxu0
        %v3662 = vadd.f32 %v3573, %v3661
        %v3663 = vpop.f32.mrf.mxu0
        %v3664 = vadd.f32 %v3575, %v3663
        %3665 = vmatmul.bf16.gmra.mxu0 %v2764
        %v3666 = vpop.f32.mrf.mxu0
        %v3667 = vadd.f32 %v3578, %v3666
        %v3668 = vpop.f32.mrf.mxu0
        %v3669 = vadd.f32 %v3580, %v3668
        %3670 = vdwg.mxu0
        %3671 = vmatpush.bf16.msra.mxu0 %v3372
        %3672 = vmatpush.bf16.msra.mxu0 %v3371
        %3673 = vmatpush.bf16.msra.mxu0 %v3370
        %3674 = vmatpush.bf16.msra.mxu0 %v3369
        %3675 = vmatpush.bf16.msra.mxu0 %v3368
        %3676 = vmatpush.bf16.msra.mxu0 %v3367
        %3677 = vmatpush.bf16.msra.mxu0 %v3366
        %3678 = vmatpush.bf16.msra.mxu0 %v3365
        %3679 = vmatmul.bf16.gmra.mxu0 %v2845
        %v3680 = vpop.f32.mrf.mxu0
        %v3681 = vadd.f32 %v3592, %v3680
        %v3682 = vpop.f32.mrf.mxu0
        %v3683 = vadd.f32 %v3594, %v3682
        %3684 = vmatmul.bf16.gmra.mxu0 %v2846
        %v3685 = vpop.f32.mrf.mxu0
        %v3686 = vadd.f32 %v3597, %v3685
        %v3687 = vpop.f32.mrf.mxu0
        %v3688 = vadd.f32 %v3599, %v3687
        %3689 = vmatmul.bf16.gmra.mxu0 %v2847
        %v3690 = vpop.f32.mrf.mxu0
        %v3691 = vadd.f32 %v3602, %v3690
        %v3692 = vpop.f32.mrf.mxu0
        %v3693 = vadd.f32 %v3604, %v3692
        %3694 = vmatmul.bf16.gmra.mxu0 %v2848
        %v3695 = vpop.f32.mrf.mxu0
        %v3696 = vadd.f32 %v3607, %v3695
        %v3697 = vpop.f32.mrf.mxu0
        %v3698 = vadd.f32 %v3609, %v3697
        %3699 = vmatmul.bf16.gmra.mxu0 %v2849
        %v3700 = vpop.f32.mrf.mxu0
        %v3701 = vadd.f32 %v3612, %v3700
        %v3702 = vpop.f32.mrf.mxu0
        %v3703 = vadd.f32 %v3614, %v3702
        %3704 = vmatmul.bf16.gmra.mxu0 %v2850
        %v3705 = vpop.f32.mrf.mxu0
        %v3706 = vadd.f32 %v3617, %v3705
        %v3707 = vpop.f32.mrf.mxu0
        %v3708 = vadd.f32 %v3619, %v3707
        %3709 = vmatmul.bf16.gmra.mxu0 %v2851
        %v3710 = vpop.f32.mrf.mxu0
        %v3711 = vadd.f32 %v3622, %v3710
        %v3712 = vpop.f32.mrf.mxu0
        %v3713 = vadd.f32 %v3624, %v3712
        %3714 = vmatmul.bf16.gmra.mxu0 %v2852
        %v3715 = vpop.f32.mrf.mxu0
        %v3716 = vadd.f32 %v3627, %v3715
        %v3717 = vpop.f32.mrf.mxu0
        %v3718 = vadd.f32 %v3629, %v3717
        %3719 = vmatmul.bf16.gmra.mxu0 %v2853
        %v3720 = vpop.f32.mrf.mxu0
        %v3721 = vadd.f32 %v3632, %v3720
        %v3722 = vpop.f32.mrf.mxu0
        %v3723 = vadd.f32 %v3634, %v3722
        %3724 = vmatmul.bf16.gmra.mxu0 %v2854
        %v3725 = vpop.f32.mrf.mxu0
        %v3726 = vadd.f32 %v3637, %v3725
        %v3727 = vpop.f32.mrf.mxu0
        %v3728 = vadd.f32 %v3639, %v3727
        %3729 = vmatmul.bf16.gmra.mxu0 %v2855
        %v3730 = vpop.f32.mrf.mxu0
        %v3731 = vadd.f32 %v3642, %v3730
        %v3732 = vpop.f32.mrf.mxu0
        %v3733 = vadd.f32 %v3644, %v3732
        %3734 = vmatmul.bf16.gmra.mxu0 %v2856
        %v3735 = vpop.f32.mrf.mxu0
        %v3736 = vadd.f32 %v3647, %v3735
        %v3737 = vpop.f32.mrf.mxu0
        %v3738 = vadd.f32 %v3649, %v3737
        %3739 = vmatmul.bf16.gmra.mxu0 %v2857
        %v3740 = vpop.f32.mrf.mxu0
        %v3741 = vadd.f32 %v3652, %v3740
        %v3742 = vpop.f32.mrf.mxu0
        %v3743 = vadd.f32 %v3654, %v3742
        %3744 = vmatmul.bf16.gmra.mxu0 %v2858
        %v3745 = vpop.f32.mrf.mxu0
        %v3746 = vadd.f32 %v3657, %v3745
        %v3747 = vpop.f32.mrf.mxu0
        %v3748 = vadd.f32 %v3659, %v3747
        %3749 = vmatmul.bf16.gmra.mxu0 %v2859
        %v3750 = vpop.f32.mrf.mxu0
        %v3751 = vadd.f32 %v3662, %v3750
        %v3752 = vpop.f32.mrf.mxu0
        %v3753 = vadd.f32 %v3664, %v3752
        %3754 = vmatmul.bf16.gmra.mxu0 %v2860
        %v3755 = vpop.f32.mrf.mxu0
        %v3756 = vadd.f32 %v3667, %v3755
        %v3757 = vpop.f32.mrf.mxu0
        %v3758 = vadd.f32 %v3669, %v3757
        %3759 = vdwg.mxu0
        %3760 = vmatpush.bf16.msra.mxu0 %v3380
        %3761 = vmatpush.bf16.msra.mxu0 %v3379
        %3762 = vmatpush.bf16.msra.mxu0 %v3378
        %3763 = vmatpush.bf16.msra.mxu0 %v3377
        %3764 = vmatpush.bf16.msra.mxu0 %v3376
        %3765 = vmatpush.bf16.msra.mxu0 %v3375
        %3766 = vmatpush.bf16.msra.mxu0 %v3374
        %3767 = vmatpush.bf16.msra.mxu0 %v3373
        %3768 = vmatmul.bf16.gmra.mxu0 %v2654
        %v3769 = vpop.f32.mrf.mxu0
        %v3770 = vadd.f32 %v3681, %v3769
        %v3771 = vpop.f32.mrf.mxu0
        %v3772 = vadd.f32 %v3683, %v3771
        %3773 = vmatmul.bf16.gmra.mxu0 %v2655
        %v3774 = vpop.f32.mrf.mxu0
        %v3775 = vadd.f32 %v3686, %v3774
        %v3776 = vpop.f32.mrf.mxu0
        %v3777 = vadd.f32 %v3688, %v3776
        %3778 = vmatmul.bf16.gmra.mxu0 %v2656
        %v3779 = vpop.f32.mrf.mxu0
        %v3780 = vadd.f32 %v3691, %v3779
        %v3781 = vpop.f32.mrf.mxu0
        %v3782 = vadd.f32 %v3693, %v3781
        %3783 = vmatmul.bf16.gmra.mxu0 %v2657
        %v3784 = vpop.f32.mrf.mxu0
        %v3785 = vadd.f32 %v3696, %v3784
        %v3786 = vpop.f32.mrf.mxu0
        %v3787 = vadd.f32 %v3698, %v3786
        %3788 = vmatmul.bf16.gmra.mxu0 %v2658
        %v3789 = vpop.f32.mrf.mxu0
        %v3790 = vadd.f32 %v3701, %v3789
        %v3791 = vpop.f32.mrf.mxu0
        %v3792 = vadd.f32 %v3703, %v3791
        %3793 = vmatmul.bf16.gmra.mxu0 %v2659
        %v3794 = vpop.f32.mrf.mxu0
        %v3795 = vadd.f32 %v3706, %v3794
        %v3796 = vpop.f32.mrf.mxu0
        %v3797 = vadd.f32 %v3708, %v3796
        %3798 = vmatmul.bf16.gmra.mxu0 %v2660
        %v3799 = vpop.f32.mrf.mxu0
        %v3800 = vadd.f32 %v3711, %v3799
        %v3801 = vpop.f32.mrf.mxu0
        %v3802 = vadd.f32 %v3713, %v3801
        %3803 = vmatmul.bf16.gmra.mxu0 %v2661
        %v3804 = vpop.f32.mrf.mxu0
        %v3805 = vadd.f32 %v3716, %v3804
        %v3806 = vpop.f32.mrf.mxu0
        %v3807 = vadd.f32 %v3718, %v3806
        %3808 = vmatmul.bf16.gmra.mxu0 %v2662
        %v3809 = vpop.f32.mrf.mxu0
        %v3810 = vadd.f32 %v3721, %v3809
        %v3811 = vpop.f32.mrf.mxu0
        %v3812 = vadd.f32 %v3723, %v3811
        %3813 = vmatmul.bf16.gmra.mxu0 %v2663
        %v3814 = vpop.f32.mrf.mxu0
        %v3815 = vadd.f32 %v3726, %v3814
        %v3816 = vpop.f32.mrf.mxu0
        %v3817 = vadd.f32 %v3728, %v3816
        %3818 = vmatmul.bf16.gmra.mxu0 %v2664
        %v3819 = vpop.f32.mrf.mxu0
        %v3820 = vadd.f32 %v3731, %v3819
        %v3821 = vpop.f32.mrf.mxu0
        %v3822 = vadd.f32 %v3733, %v3821
        %3823 = vmatmul.bf16.gmra.mxu0 %v2665
        %v3824 = vpop.f32.mrf.mxu0
        %v3825 = vadd.f32 %v3736, %v3824
        %v3826 = vpop.f32.mrf.mxu0
        %v3827 = vadd.f32 %v3738, %v3826
        %3828 = vmatmul.bf16.gmra.mxu0 %v2666
        %v3829 = vpop.f32.mrf.mxu0
        %v3830 = vadd.f32 %v3741, %v3829
        %v3831 = vpop.f32.mrf.mxu0
        %v3832 = vadd.f32 %v3743, %v3831
        %3833 = vmatmul.bf16.gmra.mxu0 %v2667
        %v3834 = vpop.f32.mrf.mxu0
        %v3835 = vadd.f32 %v3746, %v3834
        %v3836 = vpop.f32.mrf.mxu0
        %v3837 = vadd.f32 %v3748, %v3836
        %3838 = vmatmul.bf16.gmra.mxu0 %v2668
        %v3839 = vpop.f32.mrf.mxu0
        %v3840 = vadd.f32 %v3751, %v3839
        %v3841 = vpop.f32.mrf.mxu0
        %v3842 = vadd.f32 %v3753, %v3841
        %3843 = vmatmul.bf16.gmra.mxu0 %v2881
        %v3844 = vpop.f32.mrf.mxu0
        %v3845 = vadd.f32 %v3756, %v3844
        %v3846 = vpop.f32.mrf.mxu0
        %v3847 = vadd.f32 %v3758, %v3846
        %3848 = vdwg.mxu0
        %3849 = vmatpush.bf16.msra.mxu0 %v3388
        %3850 = vmatpush.bf16.msra.mxu0 %v3387
        %3851 = vmatpush.bf16.msra.mxu0 %v3386
        %3852 = vmatpush.bf16.msra.mxu0 %v3385
        %3853 = vmatpush.bf16.msra.mxu0 %v3384
        %3854 = vmatpush.bf16.msra.mxu0 %v3383
        %3855 = vmatpush.bf16.msra.mxu0 %v3382
        %3856 = vmatpush.bf16.msra.mxu0 %v3381
        %3857 = vmatmul.bf16.gmra.mxu0 %v2750
        %v3858 = vpop.f32.mrf.mxu0
        %v3859 = vadd.f32 %v3770, %v3858
        %v3860 = vpop.f32.mrf.mxu0
        %v3861 = vadd.f32 %v3772, %v3860
        %3862 = vmatmul.bf16.gmra.mxu0 %v2751
        %v3863 = vpop.f32.mrf.mxu0
        %v3864 = vadd.f32 %v3775, %v3863
        %v3865 = vpop.f32.mrf.mxu0
        %v3866 = vadd.f32 %v3777, %v3865
        %3867 = vmatmul.bf16.gmra.mxu0 %v2752
        %v3868 = vpop.f32.mrf.mxu0
        %v3869 = vadd.f32 %v3780, %v3868
        %v3870 = vpop.f32.mrf.mxu0
        %v3871 = vadd.f32 %v3782, %v3870
        %3872 = vmatmul.bf16.gmra.mxu0 %v2753
        %v3873 = vpop.f32.mrf.mxu0
        %v3874 = vadd.f32 %v3785, %v3873
        %v3875 = vpop.f32.mrf.mxu0
        %v3876 = vadd.f32 %v3787, %v3875
        %3877 = vmatmul.bf16.gmra.mxu0 %v2754
        %v3878 = vpop.f32.mrf.mxu0
        %v3879 = vadd.f32 %v3790, %v3878
        %v3880 = vpop.f32.mrf.mxu0
        %v3881 = vadd.f32 %v3792, %v3880
        %3882 = vmatmul.bf16.gmra.mxu0 %v2755
        %v3883 = vpop.f32.mrf.mxu0
        %v3884 = vadd.f32 %v3795, %v3883
        %v3885 = vpop.f32.mrf.mxu0
        %v3886 = vadd.f32 %v3797, %v3885
        %3887 = vmatmul.bf16.gmra.mxu0 %v2756
        %v3888 = vpop.f32.mrf.mxu0
        %v3889 = vadd.f32 %v3800, %v3888
        %v3890 = vpop.f32.mrf.mxu0
        %v3891 = vadd.f32 %v3802, %v3890
        %3892 = vmatmul.bf16.gmra.mxu0 %v2757
        %v3893 = vpop.f32.mrf.mxu0
        %v3894 = vadd.f32 %v3805, %v3893
        %v3895 = vpop.f32.mrf.mxu0
        %v3896 = vadd.f32 %v3807, %v3895
        %3897 = vmatmul.bf16.gmra.mxu0 %v2758
        %v3898 = vpop.f32.mrf.mxu0
        %v3899 = vadd.f32 %v3810, %v3898
        %v3900 = vpop.f32.mrf.mxu0
        %v3901 = vadd.f32 %v3812, %v3900
        %3902 = vmatmul.bf16.gmra.mxu0 %v2759
        %v3903 = vpop.f32.mrf.mxu0
        %v3904 = vadd.f32 %v3815, %v3903
        %v3905 = vpop.f32.mrf.mxu0
        %v3906 = vadd.f32 %v3817, %v3905
        %3907 = vmatmul.bf16.gmra.mxu0 %v2760
        %v3908 = vpop.f32.mrf.mxu0
        %v3909 = vadd.f32 %v3820, %v3908
        %v3910 = vpop.f32.mrf.mxu0
        %v3911 = vadd.f32 %v3822, %v3910
        %3912 = vmatmul.bf16.gmra.mxu0 %v2761
        %v3913 = vpop.f32.mrf.mxu0
        %v3914 = vadd.f32 %v3825, %v3913
        %v3915 = vpop.f32.mrf.mxu0
        %v3916 = vadd.f32 %v3827, %v3915
        %3917 = vmatmul.bf16.gmra.mxu0 %v2762
        %v3918 = vpop.f32.mrf.mxu0
        %v3919 = vadd.f32 %v3830, %v3918
        %v3920 = vpop.f32.mrf.mxu0
        %v3921 = vadd.f32 %v3832, %v3920
        %3922 = vmatmul.bf16.gmra.mxu0 %v2763
        %v3923 = vpop.f32.mrf.mxu0
        %v3924 = vadd.f32 %v3835, %v3923
        %v3925 = vpop.f32.mrf.mxu0
        %v3926 = vadd.f32 %v3837, %v3925
        %3927 = vmatmul.bf16.gmra.mxu0 %v2764
        %v3928 = vpop.f32.mrf.mxu0
        %v3929 = vadd.f32 %v3840, %v3928
        %v3930 = vpop.f32.mrf.mxu0
        %v3931 = vadd.f32 %v3842, %v3930
        %3932 = vmatmul.bf16.gmra.mxu0 %v2887
        %v3933 = vpop.f32.mrf.mxu0
        %v3934 = vadd.f32 %v3845, %v3933
        %v3935 = vpop.f32.mrf.mxu0
        %v3936 = vadd.f32 %v3847, %v3935
        %3937 = vdwg.mxu0
        %3938 = vmatpush.bf16.msra.mxu0 %v3396
        %3939 = vmatpush.bf16.msra.mxu0 %v3395
        %3940 = vmatpush.bf16.msra.mxu0 %v3394
        %3941 = vmatpush.bf16.msra.mxu0 %v3393
        %3942 = vmatpush.bf16.msra.mxu0 %v3392
        %3943 = vmatpush.bf16.msra.mxu0 %v3391
        %3944 = vmatpush.bf16.msra.mxu0 %v3390
        %3945 = vmatpush.bf16.msra.mxu0 %v3389
        %3946 = vmatmul.bf16.gmra.mxu0 %v2846
        %v3947 = vpop.f32.mrf.mxu0
        %v3948 = vadd.f32 %v3859, %v3947
        %v3949 = vpop.f32.mrf.mxu0
        %v3950 = vadd.f32 %v3861, %v3949
        %3951 = vmatmul.bf16.gmra.mxu0 %v2847
        %v3952 = vpop.f32.mrf.mxu0
        %v3953 = vadd.f32 %v3864, %v3952
        %v3954 = vpop.f32.mrf.mxu0
        %v3955 = vadd.f32 %v3866, %v3954
        %3956 = vmatmul.bf16.gmra.mxu0 %v2848
        %v3957 = vpop.f32.mrf.mxu0
        %v3958 = vadd.f32 %v3869, %v3957
        %v3959 = vpop.f32.mrf.mxu0
        %v3960 = vadd.f32 %v3871, %v3959
        %3961 = vmatmul.bf16.gmra.mxu0 %v2849
        %v3962 = vpop.f32.mrf.mxu0
        %v3963 = vadd.f32 %v3874, %v3962
        %v3964 = vpop.f32.mrf.mxu0
        %v3965 = vadd.f32 %v3876, %v3964
        %3966 = vmatmul.bf16.gmra.mxu0 %v2850
        %v3967 = vpop.f32.mrf.mxu0
        %v3968 = vadd.f32 %v3879, %v3967
        %v3969 = vpop.f32.mrf.mxu0
        %v3970 = vadd.f32 %v3881, %v3969
        %3971 = vmatmul.bf16.gmra.mxu0 %v2851
        %v3972 = vpop.f32.mrf.mxu0
        %v3973 = vadd.f32 %v3884, %v3972
        %v3974 = vpop.f32.mrf.mxu0
        %v3975 = vadd.f32 %v3886, %v3974
        %3976 = vmatmul.bf16.gmra.mxu0 %v2852
        %v3977 = vpop.f32.mrf.mxu0
        %v3978 = vadd.f32 %v3889, %v3977
        %v3979 = vpop.f32.mrf.mxu0
        %v3980 = vadd.f32 %v3891, %v3979
        %3981 = vmatmul.bf16.gmra.mxu0 %v2853
        %v3982 = vpop.f32.mrf.mxu0
        %v3983 = vadd.f32 %v3894, %v3982
        %v3984 = vpop.f32.mrf.mxu0
        %v3985 = vadd.f32 %v3896, %v3984
        %3986 = vmatmul.bf16.gmra.mxu0 %v2854
        %v3987 = vpop.f32.mrf.mxu0
        %v3988 = vadd.f32 %v3899, %v3987
        %v3989 = vpop.f32.mrf.mxu0
        %v3990 = vadd.f32 %v3901, %v3989
        %3991 = vmatmul.bf16.gmra.mxu0 %v2855
        %v3992 = vpop.f32.mrf.mxu0
        %v3993 = vadd.f32 %v3904, %v3992
        %v3994 = vpop.f32.mrf.mxu0
        %v3995 = vadd.f32 %v3906, %v3994
        %3996 = vmatmul.bf16.gmra.mxu0 %v2856
        %v3997 = vpop.f32.mrf.mxu0
        %v3998 = vadd.f32 %v3909, %v3997
        %v3999 = vpop.f32.mrf.mxu0
        %v4000 = vadd.f32 %v3911, %v3999
        %4001 = vmatmul.bf16.gmra.mxu0 %v2857
        %v4002 = vpop.f32.mrf.mxu0
        %v4003 = vadd.f32 %v3914, %v4002
        %v4004 = vpop.f32.mrf.mxu0
        %v4005 = vadd.f32 %v3916, %v4004
        %4006 = vmatmul.bf16.gmra.mxu0 %v2858
        %v4007 = vpop.f32.mrf.mxu0
        %v4008 = vadd.f32 %v3919, %v4007
        %v4009 = vpop.f32.mrf.mxu0
        %v4010 = vadd.f32 %v3921, %v4009
        %4011 = vmatmul.bf16.gmra.mxu0 %v2859
        %v4012 = vpop.f32.mrf.mxu0
        %v4013 = vadd.f32 %v3924, %v4012
        %v4014 = vpop.f32.mrf.mxu0
        %v4015 = vadd.f32 %v3926, %v4014
        %4016 = vmatmul.bf16.gmra.mxu0 %v2860
        %v4017 = vpop.f32.mrf.mxu0
        %v4018 = vadd.f32 %v3929, %v4017
        %v4019 = vpop.f32.mrf.mxu0
        %v4020 = vadd.f32 %v3931, %v4019
        %4021 = vmatmul.bf16.gmra.mxu0 %v2893
        %v4022 = vpop.f32.mrf.mxu0
        %v4023 = vadd.f32 %v3934, %v4022
        %v4024 = vpop.f32.mrf.mxu0
        %v4025 = vadd.f32 %v3936, %v4024
        %4026 = vdwg.mxu0
        %4027 = vmatpush.bf16.msra.mxu0 %v3404
        %4028 = vmatpush.bf16.msra.mxu0 %v3403
        %4029 = vmatpush.bf16.msra.mxu0 %v3402
        %4030 = vmatpush.bf16.msra.mxu0 %v3401
        %4031 = vmatpush.bf16.msra.mxu0 %v3400
        %4032 = vmatpush.bf16.msra.mxu0 %v3399
        %4033 = vmatpush.bf16.msra.mxu0 %v3398
        %4034 = vmatpush.bf16.msra.mxu0 %v3397
        %4035 = vmatmul.bf16.gmra.mxu0 %v2655
        %v4036 = vpop.f32.mrf.mxu0
        %v4037 = vadd.f32 %v3948, %v4036
        %v4038 = vpop.f32.mrf.mxu0
        %v4039 = vadd.f32 %v3950, %v4038
        %4040 = vmatmul.bf16.gmra.mxu0 %v2656
        %v4041 = vpop.f32.mrf.mxu0
        %v4042 = vadd.f32 %v3953, %v4041
        %v4043 = vpop.f32.mrf.mxu0
        %v4044 = vadd.f32 %v3955, %v4043
        %4045 = vmatmul.bf16.gmra.mxu0 %v2657
        %v4046 = vpop.f32.mrf.mxu0
        %v4047 = vadd.f32 %v3958, %v4046
        %v4048 = vpop.f32.mrf.mxu0
        %v4049 = vadd.f32 %v3960, %v4048
        %4050 = vmatmul.bf16.gmra.mxu0 %v2658
        %v4051 = vpop.f32.mrf.mxu0
        %v4052 = vadd.f32 %v3963, %v4051
        %v4053 = vpop.f32.mrf.mxu0
        %v4054 = vadd.f32 %v3965, %v4053
        %4055 = vmatmul.bf16.gmra.mxu0 %v2659
        %v4056 = vpop.f32.mrf.mxu0
        %v4057 = vadd.f32 %v3968, %v4056
        %v4058 = vpop.f32.mrf.mxu0
        %v4059 = vadd.f32 %v3970, %v4058
        %4060 = vmatmul.bf16.gmra.mxu0 %v2660
        %v4061 = vpop.f32.mrf.mxu0
        %v4062 = vadd.f32 %v3973, %v4061
        %v4063 = vpop.f32.mrf.mxu0
        %v4064 = vadd.f32 %v3975, %v4063
        %4065 = vmatmul.bf16.gmra.mxu0 %v2661
        %v4066 = vpop.f32.mrf.mxu0
        %v4067 = vadd.f32 %v3978, %v4066
        %v4068 = vpop.f32.mrf.mxu0
        %v4069 = vadd.f32 %v3980, %v4068
        %4070 = vmatmul.bf16.gmra.mxu0 %v2662
        %v4071 = vpop.f32.mrf.mxu0
        %v4072 = vadd.f32 %v3983, %v4071
        %v4073 = vpop.f32.mrf.mxu0
        %v4074 = vadd.f32 %v3985, %v4073
        %4075 = vmatmul.bf16.gmra.mxu0 %v2663
        %v4076 = vpop.f32.mrf.mxu0
        %v4077 = vadd.f32 %v3988, %v4076
        %v4078 = vpop.f32.mrf.mxu0
        %v4079 = vadd.f32 %v3990, %v4078
        %4080 = vmatmul.bf16.gmra.mxu0 %v2664
        %v4081 = vpop.f32.mrf.mxu0
        %v4082 = vadd.f32 %v3993, %v4081
        %v4083 = vpop.f32.mrf.mxu0
        %v4084 = vadd.f32 %v3995, %v4083
        %4085 = vmatmul.bf16.gmra.mxu0 %v2665
        %v4086 = vpop.f32.mrf.mxu0
        %v4087 = vadd.f32 %v3998, %v4086
        %v4088 = vpop.f32.mrf.mxu0
        %v4089 = vadd.f32 %v4000, %v4088
        %4090 = vmatmul.bf16.gmra.mxu0 %v2666
        %v4091 = vpop.f32.mrf.mxu0
        %v4092 = vadd.f32 %v4003, %v4091
        %v4093 = vpop.f32.mrf.mxu0
        %v4094 = vadd.f32 %v4005, %v4093
        %4095 = vmatmul.bf16.gmra.mxu0 %v2667
        %v4096 = vpop.f32.mrf.mxu0
        %v4097 = vadd.f32 %v4008, %v4096
        %v4098 = vpop.f32.mrf.mxu0
        %v4099 = vadd.f32 %v4010, %v4098
        %4100 = vmatmul.bf16.gmra.mxu0 %v2668
        %v4101 = vpop.f32.mrf.mxu0
        %v4102 = vadd.f32 %v4013, %v4101
        %v4103 = vpop.f32.mrf.mxu0
        %v4104 = vadd.f32 %v4015, %v4103
        %4105 = vmatmul.bf16.gmra.mxu0 %v2881
        %v4106 = vpop.f32.mrf.mxu0
        %v4107 = vadd.f32 %v4018, %v4106
        %v4108 = vpop.f32.mrf.mxu0
        %v4109 = vadd.f32 %v4020, %v4108
        %4110 = vmatmul.bf16.gmra.mxu0 %v2899
        %v4111 = vpop.f32.mrf.mxu0
        %v4112 = vadd.f32 %v4023, %v4111
        %v4113 = vpop.f32.mrf.mxu0
        %v4114 = vadd.f32 %v4025, %v4113
        %4115 = vdwg.mxu0
        %4116 = vmatpush.bf16.msra.mxu0 %v3412
        %4117 = vmatpush.bf16.msra.mxu0 %v3411
        %4118 = vmatpush.bf16.msra.mxu0 %v3410
        %4119 = vmatpush.bf16.msra.mxu0 %v3409
        %4120 = vmatpush.bf16.msra.mxu0 %v3408
        %4121 = vmatpush.bf16.msra.mxu0 %v3407
        %4122 = vmatpush.bf16.msra.mxu0 %v3406
        %4123 = vmatpush.bf16.msra.mxu0 %v3405
        %4124 = vmatmul.bf16.gmra.mxu0 %v2751
        %v4125 = vpop.f32.mrf.mxu0
        %v4126 = vadd.f32 %v4037, %v4125
        %v4127 = vpop.f32.mrf.mxu0
        %v4128 = vadd.f32 %v4039, %v4127
        %4129 = vmatmul.bf16.gmra.mxu0 %v2752
        %v4130 = vpop.f32.mrf.mxu0
        %v4131 = vadd.f32 %v4042, %v4130
        %v4132 = vpop.f32.mrf.mxu0
        %v4133 = vadd.f32 %v4044, %v4132
        %4134 = vmatmul.bf16.gmra.mxu0 %v2753
        %v4135 = vpop.f32.mrf.mxu0
        %v4136 = vadd.f32 %v4047, %v4135
        %v4137 = vpop.f32.mrf.mxu0
        %v4138 = vadd.f32 %v4049, %v4137
        %4139 = vmatmul.bf16.gmra.mxu0 %v2754
        %v4140 = vpop.f32.mrf.mxu0
        %v4141 = vadd.f32 %v4052, %v4140
        %v4142 = vpop.f32.mrf.mxu0
        %v4143 = vadd.f32 %v4054, %v4142
        %4144 = vmatmul.bf16.gmra.mxu0 %v2755
        %v4145 = vpop.f32.mrf.mxu0
        %v4146 = vadd.f32 %v4057, %v4145
        %v4147 = vpop.f32.mrf.mxu0
        %v4148 = vadd.f32 %v4059, %v4147
        %4149 = vmatmul.bf16.gmra.mxu0 %v2756
        %v4150 = vpop.f32.mrf.mxu0
        %v4151 = vadd.f32 %v4062, %v4150
        %v4152 = vpop.f32.mrf.mxu0
        %v4153 = vadd.f32 %v4064, %v4152
        %4154 = vmatmul.bf16.gmra.mxu0 %v2757
        %v4155 = vpop.f32.mrf.mxu0
        %v4156 = vadd.f32 %v4067, %v4155
        %v4157 = vpop.f32.mrf.mxu0
        %v4158 = vadd.f32 %v4069, %v4157
        %4159 = vmatmul.bf16.gmra.mxu0 %v2758
        %v4160 = vpop.f32.mrf.mxu0
        %v4161 = vadd.f32 %v4072, %v4160
        %v4162 = vpop.f32.mrf.mxu0
        %v4163 = vadd.f32 %v4074, %v4162
        %4164 = vmatmul.bf16.gmra.mxu0 %v2759
        %v4165 = vpop.f32.mrf.mxu0
        %v4166 = vadd.f32 %v4077, %v4165
        %v4167 = vpop.f32.mrf.mxu0
        %v4168 = vadd.f32 %v4079, %v4167
        %4169 = vmatmul.bf16.gmra.mxu0 %v2760
        %v4170 = vpop.f32.mrf.mxu0
        %v4171 = vadd.f32 %v4082, %v4170
        %v4172 = vpop.f32.mrf.mxu0
        %v4173 = vadd.f32 %v4084, %v4172
        %4174 = vmatmul.bf16.gmra.mxu0 %v2761
        %v4175 = vpop.f32.mrf.mxu0
        %v4176 = vadd.f32 %v4087, %v4175
        %v4177 = vpop.f32.mrf.mxu0
        %v4178 = vadd.f32 %v4089, %v4177
        %4179 = vmatmul.bf16.gmra.mxu0 %v2762
        %v4180 = vpop.f32.mrf.mxu0
        %v4181 = vadd.f32 %v4092, %v4180
        %v4182 = vpop.f32.mrf.mxu0
        %v4183 = vadd.f32 %v4094, %v4182
        %4184 = vmatmul.bf16.gmra.mxu0 %v2763
        %v4185 = vpop.f32.mrf.mxu0
        %v4186 = vadd.f32 %v4097, %v4185
        %v4187 = vpop.f32.mrf.mxu0
        %v4188 = vadd.f32 %v4099, %v4187
        %4189 = vmatmul.bf16.gmra.mxu0 %v2764
        %v4190 = vpop.f32.mrf.mxu0
        %v4191 = vadd.f32 %v4102, %v4190
        %v4192 = vpop.f32.mrf.mxu0
        %v4193 = vadd.f32 %v4104, %v4192
        %4194 = vmatmul.bf16.gmra.mxu0 %v2887
        %v4195 = vpop.f32.mrf.mxu0
        %v4196 = vadd.f32 %v4107, %v4195
        %v4197 = vpop.f32.mrf.mxu0
        %v4198 = vadd.f32 %v4109, %v4197
        %4199 = vmatmul.bf16.gmra.mxu0 %v2905
        %v4200 = vpop.f32.mrf.mxu0
        %v4201 = vadd.f32 %v4112, %v4200
        %v4202 = vpop.f32.mrf.mxu0
        %v4203 = vadd.f32 %v4114, %v4202
        %4204 = vdwg.mxu0
        %4205 = vmatpush.bf16.msra.mxu0 %v3420
        %4206 = vmatpush.bf16.msra.mxu0 %v3419
        %4207 = vmatpush.bf16.msra.mxu0 %v3418
        %4208 = vmatpush.bf16.msra.mxu0 %v3417
        %4209 = vmatpush.bf16.msra.mxu0 %v3416
        %4210 = vmatpush.bf16.msra.mxu0 %v3415
        %4211 = vmatpush.bf16.msra.mxu0 %v3414
        %4212 = vmatpush.bf16.msra.mxu0 %v3413
        %4213 = vmatmul.bf16.gmra.mxu0 %v2847
        %v4214 = vpop.f32.mrf.mxu0
        %v4215 = vadd.f32 %v4126, %v4214
        %v4216 = vpop.f32.mrf.mxu0
        %v4217 = vadd.f32 %v4128, %v4216
        %4218 = vmatmul.bf16.gmra.mxu0 %v2848
        %v4219 = vpop.f32.mrf.mxu0
        %v4220 = vadd.f32 %v4131, %v4219
        %v4221 = vpop.f32.mrf.mxu0
        %v4222 = vadd.f32 %v4133, %v4221
        %4223 = vmatmul.bf16.gmra.mxu0 %v2849
        %v4224 = vpop.f32.mrf.mxu0
        %v4225 = vadd.f32 %v4136, %v4224
        %v4226 = vpop.f32.mrf.mxu0
        %v4227 = vadd.f32 %v4138, %v4226
        %4228 = vmatmul.bf16.gmra.mxu0 %v2850
        %v4229 = vpop.f32.mrf.mxu0
        %v4230 = vadd.f32 %v4141, %v4229
        %v4231 = vpop.f32.mrf.mxu0
        %v4232 = vadd.f32 %v4143, %v4231
        %4233 = vmatmul.bf16.gmra.mxu0 %v2851
        %v4234 = vpop.f32.mrf.mxu0
        %v4235 = vadd.f32 %v4146, %v4234
        %v4236 = vpop.f32.mrf.mxu0
        %v4237 = vadd.f32 %v4148, %v4236
        %4238 = vmatmul.bf16.gmra.mxu0 %v2852
        %v4239 = vpop.f32.mrf.mxu0
        %v4240 = vadd.f32 %v4151, %v4239
        %v4241 = vpop.f32.mrf.mxu0
        %v4242 = vadd.f32 %v4153, %v4241
        %4243 = vmatmul.bf16.gmra.mxu0 %v2853
        %v4244 = vpop.f32.mrf.mxu0
        %v4245 = vadd.f32 %v4156, %v4244
        %v4246 = vpop.f32.mrf.mxu0
        %v4247 = vadd.f32 %v4158, %v4246
        %4248 = vmatmul.bf16.gmra.mxu0 %v2854
        %v4249 = vpop.f32.mrf.mxu0
        %v4250 = vadd.f32 %v4161, %v4249
        %v4251 = vpop.f32.mrf.mxu0
        %v4252 = vadd.f32 %v4163, %v4251
        %4253 = vmatmul.bf16.gmra.mxu0 %v2855
        %v4254 = vpop.f32.mrf.mxu0
        %v4255 = vadd.f32 %v4166, %v4254
        %v4256 = vpop.f32.mrf.mxu0
        %v4257 = vadd.f32 %v4168, %v4256
        %4258 = vmatmul.bf16.gmra.mxu0 %v2856
        %v4259 = vpop.f32.mrf.mxu0
        %v4260 = vadd.f32 %v4171, %v4259
        %v4261 = vpop.f32.mrf.mxu0
        %v4262 = vadd.f32 %v4173, %v4261
        %4263 = vmatmul.bf16.gmra.mxu0 %v2857
        %v4264 = vpop.f32.mrf.mxu0
        %v4265 = vadd.f32 %v4176, %v4264
        %v4266 = vpop.f32.mrf.mxu0
        %v4267 = vadd.f32 %v4178, %v4266
        %4268 = vmatmul.bf16.gmra.mxu0 %v2858
        %v4269 = vpop.f32.mrf.mxu0
        %v4270 = vadd.f32 %v4181, %v4269
        %v4271 = vpop.f32.mrf.mxu0
        %v4272 = vadd.f32 %v4183, %v4271
        %4273 = vmatmul.bf16.gmra.mxu0 %v2859
        %v4274 = vpop.f32.mrf.mxu0
        %v4275 = vadd.f32 %v4186, %v4274
        %v4276 = vpop.f32.mrf.mxu0
        %v4277 = vadd.f32 %v4188, %v4276
        %4278 = vmatmul.bf16.gmra.mxu0 %v2860
        %v4279 = vpop.f32.mrf.mxu0
        %v4280 = vadd.f32 %v4191, %v4279
        %v4281 = vpop.f32.mrf.mxu0
        %v4282 = vadd.f32 %v4193, %v4281
        %4283 = vmatmul.bf16.gmra.mxu0 %v2893
        %v4284 = vpop.f32.mrf.mxu0
        %v4285 = vadd.f32 %v4196, %v4284
        %v4286 = vpop.f32.mrf.mxu0
        %v4287 = vadd.f32 %v4198, %v4286
        %4288 = vmatmul.bf16.gmra.mxu0 %v2911
        %v4289 = vpop.f32.mrf.mxu0
        %v4290 = vadd.f32 %v4201, %v4289
        %v4291 = vpop.f32.mrf.mxu0
        %v4292 = vadd.f32 %v4203, %v4291
        %4293 = vdwg.mxu0
        %v4294 = vmax.f32 %v4215, 0.0
        %v4295 = vmax.f32 %v4217, 0.0
        %v4296 = vmax.f32 %v4220, 0.0
        %v4297 = vmax.f32 %v4222, 0.0
        %v4298 = vmax.f32 %v4225, 0.0
        %v4299 = vmax.f32 %v4227, 0.0
        %v4300 = vmax.f32 %v4230, 0.0
        %v4301 = vmax.f32 %v4232, 0.0
        %v4302 = vmax.f32 %v4235, 0.0
        %v4303 = vmax.f32 %v4237, 0.0
        %v4304 = vmax.f32 %v4240, 0.0
        %v4305 = vmax.f32 %v4242, 0.0
        %v4306 = vmax.f32 %v4245, 0.0
        %v4307 = vmax.f32 %v4247, 0.0
        %v4308 = vmax.f32 %v4250, 0.0
        %v4309 = vmax.f32 %v4252, 0.0
        %v4310 = vmax.f32 %v4255, 0.0
        %v4311 = vmax.f32 %v4257, 0.0
        %v4312 = vmax.f32 %v4260, 0.0
        %v4313 = vmax.f32 %v4262, 0.0
        %v4314 = vmax.f32 %v4265, 0.0
        %v4315 = vmax.f32 %v4267, 0.0
        %v4316 = vmax.f32 %v4270, 0.0
        %v4317 = vmax.f32 %v4272, 0.0
        %v4318 = vmax.f32 %v4275, 0.0
        %v4319 = vmax.f32 %v4277, 0.0
        %v4320 = vmax.f32 %v4280, 0.0
        %v4321 = vmax.f32 %v4282, 0.0
        %v4322 = vmax.f32 %v4285, 0.0
        %v4323 = vmax.f32 %v4287, 0.0
        %v4324 = vmax.f32 %v4290, 0.0
        %v4325 = vmax.f32 %v4292, 0.0
        %v4326 = vld [vmem:[%s240] sm:$0xff]
        %v4327 = vld [vmem:[%s240 + $0x8] sm:$0xff]
        %v4328 = vld [vmem:[%s240 + $0x10] sm:$0xff]
        %v4329 = vld [vmem:[%s240 + $0x18] sm:$0xff]
        %v4330 = vld [vmem:[%s240 + $0x20] sm:$0xff]
        %v4331 = vld [vmem:[%s240 + $0x28] sm:$0xff]
        %v4332 = vld [vmem:[%s240 + $0x30] sm:$0xff]
        %v4333 = vld [vmem:[%s240 + $0x38] sm:$0xff]
        %v4334 = vld [vmem:[%s240 + $0x40] sm:$0xff]
        %v4335 = vld [vmem:[%s240 + $0x48] sm:$0xff]
        %v4336 = vld [vmem:[%s240 + $0x50] sm:$0xff]
        %v4337 = vld [vmem:[%s240 + $0x58] sm:$0xff]
        %v4338 = vld [vmem:[%s240 + $0x60] sm:$0xff]
        %v4339 = vld [vmem:[%s240 + $0x68] sm:$0xff]
        %v4340 = vld [vmem:[%s240 + $0x70] sm:$0xff]
        %v4341 = vld [vmem:[%s240 + $0x78] sm:$0xff]
        %v4342 = vld [vmem:[%s240 + $0x80] sm:$0xff]
        %v4343 = vld [vmem:[%s240 + $0x88] sm:$0xff]
        %v4344 = vld [vmem:[%s240 + $0x90] sm:$0xff]
        %v4345 = vld [vmem:[%s240 + $0x98] sm:$0xff]
        %v4346 = vld [vmem:[%s240 + $0xa0] sm:$0xff]
        %v4347 = vld [vmem:[%s240 + $0xa8] sm:$0xff]
        %v4348 = vld [vmem:[%s240 + $0xb0] sm:$0xff]
        %v4349 = vld [vmem:[%s240 + $0xb8] sm:$0xff]
        %v4350 = vld [vmem:[%s240 + $0xc0] sm:$0xff]
        %v4351 = vld [vmem:[%s240 + $0xc8] sm:$0xff]
        %v4352 = vld [vmem:[%s240 + $0xd0] sm:$0xff]
        %v4353 = vld [vmem:[%s240 + $0xd8] sm:$0xff]
        %v4354 = vld [vmem:[%s240 + $0xe0] sm:$0xff]
        %v4355 = vld [vmem:[%s240 + $0xe8] sm:$0xff]
        %v4356 = vld [vmem:[%s240 + $0xf0] sm:$0xff]
        %v4357 = vld [vmem:[%s240 + $0xf8] sm:$0xff]
        %v4358 = vadd.f32 %v4294, %v4326
        %v4359 = vadd.f32 %v4295, %v4327
        %v4360 = vadd.f32 %v4296, %v4328
        %v4361 = vadd.f32 %v4297, %v4329
        %v4362 = vadd.f32 %v4298, %v4330
        %v4363 = vadd.f32 %v4299, %v4331
        %v4364 = vadd.f32 %v4300, %v4332
        %v4365 = vadd.f32 %v4301, %v4333
        %v4366 = vadd.f32 %v4302, %v4334
        %v4367 = vadd.f32 %v4303, %v4335
        %v4368 = vadd.f32 %v4304, %v4336
        %v4369 = vadd.f32 %v4305, %v4337
        %v4370 = vadd.f32 %v4306, %v4338
        %v4371 = vadd.f32 %v4307, %v4339
        %v4372 = vadd.f32 %v4308, %v4340
        %v4373 = vadd.f32 %v4309, %v4341
        %v4374 = vadd.f32 %v4310, %v4342
        %v4375 = vadd.f32 %v4311, %v4343
        %v4376 = vadd.f32 %v4312, %v4344
        %v4377 = vadd.f32 %v4313, %v4345
        %v4378 = vadd.f32 %v4314, %v4346
        %v4379 = vadd.f32 %v4315, %v4347
        %v4380 = vadd.f32 %v4316, %v4348
        %v4381 = vadd.f32 %v4317, %v4349
        %v4382 = vadd.f32 %v4318, %v4350
        %v4383 = vadd.f32 %v4319, %v4351
        %v4384 = vadd.f32 %v4320, %v4352
        %v4385 = vadd.f32 %v4321, %v4353
        %v4386 = vadd.f32 %v4322, %v4354
        %v4387 = vadd.f32 %v4323, %v4355
        %v4388 = vadd.f32 %v4324, %v4356
        %v4389 = vadd.f32 %v4325, %v4357
        %4390 = vst [vmem:[%s277] sm:$0xff] %v4358
        %4391 = vst [vmem:[%s277 + $0x8] sm:$0xff] %v4359
        %4392 = vst [vmem:[%s277 + $0x10] sm:$0xff] %v4360
        %4393 = vst [vmem:[%s277 + $0x18] sm:$0xff] %v4361
        %4394 = vst [vmem:[%s277 + $0x20] sm:$0xff] %v4362
        %4395 = vst [vmem:[%s277 + $0x28] sm:$0xff] %v4363
        %4396 = vst [vmem:[%s277 + $0x30] sm:$0xff] %v4364
        %4397 = vst [vmem:[%s277 + $0x38] sm:$0xff] %v4365
        %4398 = vst [vmem:[%s277 + $0x40] sm:$0xff] %v4366
        %4399 = vst [vmem:[%s277 + $0x48] sm:$0xff] %v4367
        %4400 = vst [vmem:[%s277 + $0x50] sm:$0xff] %v4368
        %4401 = vst [vmem:[%s277 + $0x58] sm:$0xff] %v4369
        %4402 = vst [vmem:[%s277 + $0x60] sm:$0xff] %v4370
        %4403 = vst [vmem:[%s277 + $0x68] sm:$0xff] %v4371
        %4404 = vst [vmem:[%s277 + $0x70] sm:$0xff] %v4372
        %4405 = vst [vmem:[%s277 + $0x78] sm:$0xff] %v4373
        %4406 = vst [vmem:[%s277 + $0x80] sm:$0xff] %v4374
        %4407 = vst [vmem:[%s277 + $0x88] sm:$0xff] %v4375
        %4408 = vst [vmem:[%s277 + $0x90] sm:$0xff] %v4376
        %4409 = vst [vmem:[%s277 + $0x98] sm:$0xff] %v4377
        %4410 = vst [vmem:[%s277 + $0xa0] sm:$0xff] %v4378
        %4411 = vst [vmem:[%s277 + $0xa8] sm:$0xff] %v4379
        %4412 = vst [vmem:[%s277 + $0xb0] sm:$0xff] %v4380
        %4413 = vst [vmem:[%s277 + $0xb8] sm:$0xff] %v4381
        %4414 = vst [vmem:[%s277 + $0xc0] sm:$0xff] %v4382
        %4415 = vst [vmem:[%s277 + $0xc8] sm:$0xff] %v4383
        %4416 = vst [vmem:[%s277 + $0xd0] sm:$0xff] %v4384
        %4417 = vst [vmem:[%s277 + $0xd8] sm:$0xff] %v4385
        %4418 = vst [vmem:[%s277 + $0xe0] sm:$0xff] %v4386
        %4419 = vst [vmem:[%s277 + $0xe8] sm:$0xff] %v4387
        %4420 = vst [vmem:[%s277 + $0xf0] sm:$0xff] %v4388
        %4421 = vst [vmem:[%s277 + $0xf8] sm:$0xff] %v4389
        %s4422 = sand.u32 %s141, 1
        %s4423 = scalar_lea.sflag [#allocation5], %s4422
        %s4424 = sand.u32 %s141, 1
        %s4425 = smul.addr %s4424, 256
        %s4426 = scalar_lea.vmem [#allocation9], %s4425
        // Predicated region
        $region53: #{tpu_custom_call.1} parent=39 // pred_check
          %p4427 = pneg %p151
        $region54: #{tpu_custom_call.1} parent=39 // pred_check_branch
          %4429 = sbr.rel (%p4427) target = $region56
        $region55: #{tpu_custom_call.1} parent=39 // pred_region
          %4431 = vsyncadd %s4423, 0
          %s4432 = smul.addr %s23, 32
          %s4433 = smul.addr %s4432, 8
          %s4434 = scalar_lea.hbm %s5, %s4433
          %s4435 = sshll.u32 %s4426, 4
          %s4436 = int_to_ptr.vmem [resolvable:$true] %s4435
          %s4437 = sshll.u32 %s4434, 4
          %s4438 = int_to_ptr.hbm [resolvable:$true] %s4437
          %4443 = dma.vmem_to_hbm [thread:$0]  %s4436, 4096, %s4438, %s4423, 128, 128, 8
        $region56: #{tpu_custom_call.1} parent=39 // pred_fallthru
          _
      $region40: #{tpu_custom_call.1} parent=5 // pred_fallthru
        _
      %p4444 = scmp.le.s32.totalorder 2, %s18
      // Predicated region
      $region57: #{tpu_custom_call.1} parent=5 // pred_check
        %p4445 = pneg %p4444
      $region58: #{tpu_custom_call.1} parent=5 // pred_check_branch
        %4447 = sbr.rel (%p4445) target = $region60
      $region59: #{tpu_custom_call.1} parent=5 // pred_region
        %s4448 = ssub.s32 %s18, 2
        // Predicated region
        $region61: #{tpu_custom_call.1} parent=59 // pred_check
          %p4449 = pneg %p157
        $region62: #{tpu_custom_call.1} parent=59 // pred_check_branch
          %4451 = sbr.rel (%p4449) target = $region64
        $region63: #{tpu_custom_call.1} parent=59 // pred_region
          %s4452 = sand.u32 %s142, 1
          %s4453 = scalar_lea.sflag [#allocation5], %s4452
          %s4454 = sand.u32 %s142, 1
          %s4455 = smul.addr %s4454, 256
          %s4456 = scalar_lea.vmem [#allocation9], %s4455
          %4458 = dma.done %s4453, 4096
        $region64: #{tpu_custom_call.1} parent=59 // pred_fallthru
          _
      $region60: #{tpu_custom_call.1} parent=5 // pred_fallthru
        _
    $region6: #{tpu_custom_call.1} parent=1 // loop_footer
      %s22 = sadd.s32 1, %s18
    $region7: #{tpu_custom_call.1} parent=1 // loop_footer_branch
      %17 = sbr.rel target = $region3
    $region8: #{tpu_custom_call.1} parent=1 // loop_exit
      _
    %4459 = vsyncpa [#allocation4], 1
    %s4460 = scalar_lea.sflag [#allocation4], 1
    %4461 = vsyncpa %s4460, 1
    %4462 = vsyncpa [#allocation7], 1
    %4463 = vsyncpa [#allocation5], 1
    %s4464 = scalar_lea.sflag [#allocation5], 1
    %4465 = vsyncpa %s4464, 1

</llo_original>
